<compile_context>
chip_gen: v7x
topology: tpu7x:2x2x1
jax: 0.10.0
libtpu: 0.0.40
codegen_flags: <defaults>
</compile_context>

<pallas_src>
from functools import partial

import jax
import jax.numpy as jnp
from jax import lax
from jax.experimental import pallas as pl
from jax.experimental.pallas import tpu as pltpu

LN_EPS = 1e-5


# ----------------------------------------------------------------------------
# generation-aware VMEM / tiling budgets
# ----------------------------------------------------------------------------
def _vmem_capacity_bytes():
    try:
        cap = int(pltpu.get_tpu_info().vmem_capacity_bytes)
        if cap > 0:
            return cap
    except Exception:
        pass
    return 64 * 1024 * 1024          # conservative (v7x-sized) fallback


_VMEM_CAP = _vmem_capacity_bytes()
_BIG_VMEM = _VMEM_CAP >= 100 * 1024 * 1024            # v5e / v6e: 128 MiB per TC
_VMEM_LIMIT_BYTES = int(_VMEM_CAP * 0.70)              # leave compiler headroom
_LOGITS_TILE_BYTES = (4 if _BIG_VMEM else 2) * 1024 * 1024
_QKV_MAX_ROWS = 1024 if _BIG_VMEM else 512
_FFN_MAX_ROWS = 1024 if _BIG_VMEM else 384             # bounds fp32 h1 = rows*F*4
_LN_MAX_ROWS = 2048


# ----------------------------------------------------------------------------
# single-buffer mode for grid-invariant weight blocks (probe once, fall back
# gracefully if this runtime's pipeliner rejects Buffered(1))
# ----------------------------------------------------------------------------
_WEIGHT_MODE_CACHE = []


def _weight_buffer_mode():
    if _WEIGHT_MODE_CACHE:
        return _WEIGHT_MODE_CACHE[0]
    mode = None
    try:
        def _probe(x_ref, o_ref):
            o_ref[...] = x_ref[...] + 1.0

        out = pl.pallas_call(
            _probe,
            out_shape=jax.ShapeDtypeStruct((16, 128), jnp.float32),
            grid=(2,),
            in_specs=[pl.BlockSpec((8, 128), lambda i: (0, 0),
                                   pipeline_mode=pl.Buffered(1))],
            out_specs=pl.BlockSpec((8, 128), lambda i: (i, 0)),
        )(jnp.zeros((8, 128), jnp.float32))
        jax.block_until_ready(out)
        if bool(jnp.all(out == 1.0)):
            mode = pl.Buffered(1)
    except Exception:
        mode = None
    _WEIGHT_MODE_CACHE.append(mode)
    return mode


def _const_spec(shape, mode):
    """BlockSpec for a grid-invariant (weight / bias / LN-param) operand."""
    index_map = lambda *_: (0,) * len(shape)
    if mode is None:
        return pl.BlockSpec(shape, index_map)
    return pl.BlockSpec(shape, index_map, pipeline_mode=mode)


# ----------------------------------------------------------------------------
# static tiling helpers
# ----------------------------------------------------------------------------
def _row_tile(n_rows, max_rows, prefer_split=True):
    """Largest divisor of n_rows that is a multiple of 8 and <= max_rows;
    prefer >= 2 grid steps so both v7x TensorCores get work."""
    cands = [t for t in range(1, min(n_rows, max_rows) + 1)
             if n_rows % t == 0 and t % 8 == 0]
    if not cands:
        return n_rows                          # full array (always a legal block)
    if prefer_split:
        multi = [t for t in cands if n_rows // t >= 2]
        if multi:
            return max(multi)
    return max(cands)


def _head_tile(num_heads, head_dim, max_width=512):
    """Heads per attention grid step: keep the context slab lane-dense
    (ht*Dh % 128 == 0) and bounded; fall back to all heads (block == E)."""
    best = None
    for ht in range(1, num_heads + 1):
        if num_heads % ht:
            continue
        w = ht * head_dim
        if w % 128 == 0 and w <= max_width:
            best = ht
    return best if best is not None else num_heads


def _query_tile(seq, ht, budget_bytes=_LOGITS_TILE_BYTES):
    """Query rows per attention grid step so the fp32 (ht, tq, S) logits/bias
    blocks stay within the per-generation budget."""
    cands = [t for t in range(1, seq + 1)
             if seq % t == 0 and (t % 8 == 0 or t == seq)]
    fits = [t for t in cands if ht * t * seq * 4 <= budget_bytes]
    if fits:
        return max(fits)
    return min(cands) if cands else seq


# ----------------------------------------------------------------------------
# in-kernel math (fp32)
# ----------------------------------------------------------------------------
def _layer_norm(x, g, b):
    mean = jnp.mean(x, axis=-1, keepdims=True)
    var = jnp.mean(jnp.square(x - mean), axis=-1, keepdims=True)
    return (x - mean) * lax.rsqrt(var + LN_EPS) * g + b


def _erf(x):
    # Abramowitz & Stegun 7.1.26 (|err| < 1.5e-7): exact-GELU semantics without
    # depending on a lax.erf lowering inside Mosaic.
    a1, a2, a3, a4, a5 = (0.254829592, -0.284496736, 1.421413741,
                          -1.453152027, 1.061405429)
    p = 0.3275911
    ax = jnp.abs(x)
    t = 1.0 / (1.0 + p * ax)
    poly = ((((a5 * t + a4) * t + a3) * t + a2) * t + a1) * t
    y = 1.0 - poly * jnp.exp(-ax * ax)
    return jnp.where(x >= 0, y, -y)


def _gelu_exact(x):
    # F.gelu default (erf-based).  TODO(synk): tanh-approx GELU would ride the
    # EUP slot (faster on v6e/v7x) but changes numerics vs the reference.
    return 0.5 * x * (1.0 + _erf(x * (2.0 ** -0.5)))


# ----------------------------------------------------------------------------
# kernel 0: emb LayerNorm (+ optional padding-mask zeroing), row-tiled
# ----------------------------------------------------------------------------
def _emb_ln_kernel(x_ref, g_ref, b_ref, *rest, has_mask):
    if has_mask:
        pm_ref, o_ref = rest
    else:
        (o_ref,) = rest
    out = _layer_norm(x_ref[...], g_ref[...], b_ref[...])
    if has_mask:
        out = out * (1.0 - pm_ref[...])          # x *= (1 - padding_mask), fused
    o_ref[...] = out


def emb_layernorm(x, gamma, beta, padding_mask=None):
    B, S, E = x.shape
    R = B * S
    rt = _row_tile(R, _LN_MAX_ROWS)
    wmode = _weight_buffer_mode()
    has_mask = padding_mask is not None

    in_specs = [pl.BlockSpec((rt, E), lambda i: (i, 0)),
                _const_spec((1, E), wmode),
                _const_spec((1, E), wmode)]
    operands = [x.reshape(R, E), gamma.reshape(1, E), beta.reshape(1, E)]
    if has_mask:
        in_specs.append(pl.BlockSpec((rt, 1), lambda i: (i, 0)))
        operands.append(padding_mask.astype(x.dtype).reshape(R, 1))

    out = pl.pallas_call(
        partial(_emb_ln_kernel, has_mask=has_mask),
        out_shape=jax.ShapeDtypeStruct((R, E), jnp.float32),
        grid=(R // rt,),
        in_specs=in_specs,
        out_specs=pl.BlockSpec((rt, E), lambda i: (i, 0)),
        compiler_params=pltpu.CompilerParams(
            dimension_semantics=("parallel",),
            vmem_limit_bytes=_VMEM_LIMIT_BYTES),
    )(*operands)
    return out.reshape(B, S, E)


# ----------------------------------------------------------------------------
# kernel 1: pre-LN + fused QKV projection (q-scaling pre-folded into params)
# ----------------------------------------------------------------------------
def _qkv_kernel(x_ref, g_ref, b_ref, w_ref, bias_ref, q_ref, k_ref, v_ref):
    E = x_ref.shape[-1]
    xn = _layer_norm(x_ref[...], g_ref[...], b_ref[...])
    qkv = jnp.dot(xn.astype(jnp.bfloat16), w_ref[...],
                  preferred_element_type=jnp.float32) + bias_ref[...]
    q_ref[...] = qkv[:, :E].astype(jnp.bfloat16)
    k_ref[...] = qkv[:, E:2 * E].astype(jnp.bfloat16)
    v_ref[...] = qkv[:, 2 * E:].astype(jnp.bfloat16)


def qkv_projection(x, p):
    B, S, E = x.shape
    R = B * S
    rt = _row_tile(R, _QKV_MAX_ROWS)
    wmode = _weight_buffer_mode()
    row_blk = pl.BlockSpec((rt, E), lambda i: (i, 0))
    q, k, v = pl.pallas_call(
        _qkv_kernel,
        out_shape=tuple(jax.ShapeDtypeStruct((R, E), jnp.bfloat16)
                        for _ in range(3)),
        grid=(R // rt,),
        in_specs=[
            row_blk,
            _const_spec((1, E), wmode),
            _const_spec((1, E), wmode),
            _const_spec((E, 3 * E), wmode),
            _const_spec((1, 3 * E), wmode),
        ],
        out_specs=(row_blk,) * 3,
        compiler_params=pltpu.CompilerParams(
            dimension_semantics=("parallel",),
            vmem_limit_bytes=_VMEM_LIMIT_BYTES),
    )(x.reshape(R, E), p["ln1_g"], p["ln1_b"], p["w_in"], p["b_in"])
    return q.reshape(B, S, E), k.reshape(B, S, E), v.reshape(B, S, E)


# ----------------------------------------------------------------------------
# kernel 2: attention over (batch, head-tile, query-tile) grid.
# logits (fp32, next layer's bias / final pair) alias the incoming bias buffer;
# context is written head-merged, lane-dense into a (B, S, E) bf16 output.
# ----------------------------------------------------------------------------
def _attention_kernel(q_ref, k_ref, v_ref, bias_ref, logits_ref, ctx_ref, *,
                      heads_per_block, head_dim):
    q = q_ref[0]                   # (tq, ht*Dh) bf16, q-scaling already folded
    k = k_ref[0]                   # (S,  ht*Dh) bf16
    v = v_ref[0]                   # (S,  ht*Dh) bf16
    ctx_parts = []
    for h in range(heads_per_block):                       # static unroll
        cols = slice(h * head_dim, (h + 1) * head_dim)
        # scores = q_h @ k_h^T  (fp32 accumulation on the MXU)
        s = lax.dot_general(q[:, cols], k[:, cols],
                            (((1,), (1,)), ((), ())),
                            preferred_element_type=jnp.float32)
        s = s + bias_ref[0, h]                    # bias may hold -inf (padded keys)
        logits_ref[0, h] = s
        # fp32 softmax; fully-masked rows -> zeros (torch would produce NaN)
        m = jnp.max(s, axis=-1, keepdims=True)
        m = jnp.where(m == -jnp.inf, 0.0, m)
        pexp = jnp.exp(s - m)
        l = jnp.sum(pexp, axis=-1, keepdims=True)
        l = jnp.where(l > 0.0, l, 1.0)
        attn = pexp * pl.reciprocal(l, approx=True)        # EUP slot
        ctx_parts.append(jnp.dot(attn.astype(jnp.bfloat16), v[:, cols],
                                 preferred_element_type=jnp.float32))
    ctx = ctx_parts[0] if len(ctx_parts) == 1 else jnp.concatenate(ctx_parts, axis=-1)
    ctx_ref[0] = ctx.astype(jnp.bfloat16)


def attention(q, k, v, bias4, num_heads):
    B, S, E = q.shape
    H = num_heads
    Dh = E // H
    ht = _head_tile(H, Dh)
    tq = _query_tile(S, ht)
    hw = ht * Dh

    kernel = partial(_attention_kernel, heads_per_block=ht, head_dim=Dh)
    # TODO(synk): the fp32 logits stream is the HBM roofline on v5e; carrying
    # the inter-layer bias in bf16 would halve it but changes pair fidelity.
    logits, ctx = pl.pallas_call(
        kernel,
        out_shape=(jax.ShapeDtypeStruct((B, H, S, S), jnp.float32),
                   jax.ShapeDtypeStruct((B, S, E), jnp.bfloat16)),
        grid=(B, H // ht, S // tq),
        in_specs=[
            pl.BlockSpec((1, tq, hw), lambda b, h, qi: (b, qi, h)),        # q
            pl.BlockSpec((1, S, hw), lambda b, h, qi: (b, 0, h)),          # k (full keys)
            pl.BlockSpec((1, S, hw), lambda b, h, qi: (b, 0, h)),          # v
            pl.BlockSpec((1, ht, tq, S), lambda b, h, qi: (b, h, qi, 0)),  # bias
        ],
        out_specs=(
            pl.BlockSpec((1, ht, tq, S), lambda b, h, qi: (b, h, qi, 0)),  # logits
            pl.BlockSpec((1, tq, hw), lambda b, h, qi: (b, qi, h)),        # ctx
        ),
        # previous layer's bias is dead after this call: reuse its HBM buffer
        # for the logits output (halves the peak (B,H,S,S) fp32 footprint)
        input_output_aliases={3: 0},
        compiler_params=pltpu.CompilerParams(
            dimension_semantics=("parallel", "parallel", "parallel"),
            vmem_limit_bytes=_VMEM_LIMIT_BYTES),
    )(q, k, v, bias4)
    return logits, ctx


# ----------------------------------------------------------------------------
# kernel 3: out_proj + residual + LN2 + FFN + residual (+ optional final LN)
# ----------------------------------------------------------------------------
def _outproj_ffn_kernel(ctx_ref, x_ref, wo_ref, bo_ref, ln_g_ref, ln_b_ref,
                        w1_ref, b1_ref, w2_ref, b2_ref, *rest, apply_final_ln):
    if apply_final_ln:
        fg_ref, fb_ref, o_ref = rest
    else:
        (o_ref,) = rest

    attn_o = jnp.dot(ctx_ref[...], wo_ref[...],
                     preferred_element_type=jnp.float32) + bo_ref[...]
    x1 = x_ref[...] + attn_o                                  # dropout == identity
    xn = _layer_norm(x1, ln_g_ref[...], ln_b_ref[...])
    h1 = jnp.dot(xn.astype(jnp.bfloat16), w1_ref[...],
                 preferred_element_type=jnp.float32) + b1_ref[...]
    h1 = _gelu_exact(h1)
    h2 = jnp.dot(h1.astype(jnp.bfloat16), w2_ref[...],
                 preferred_element_type=jnp.float32) + b2_ref[...]
    out = x1 + h2
    if apply_final_ln:
        out = _layer_norm(out, fg_ref[...], fb_ref[...])      # fused final LN
    o_ref[...] = out


def outproj_ffn(ctx, x, p, final_ln=None):
    B, S, E = x.shape
    R = B * S
    F = p["w1"].shape[1]
    rt = _row_tile(R, _FFN_MAX_ROWS)
    wmode = _weight_buffer_mode()
    row_blk = pl.BlockSpec((rt, E), lambda i: (i, 0))

    in_specs = [
        row_blk,                                   # ctx (bf16)
        row_blk,                                   # residual x (fp32)
        _const_spec((E, E), wmode),
        _const_spec((1, E), wmode),
        _const_spec((1, E), wmode),
        _const_spec((1, E), wmode),
        _const_spec((E, F), wmode),
        _const_spec((1, F), wmode),
        _const_spec((F, E), wmode),
        _const_spec((1, E), wmode),
    ]
    operands = [ctx.reshape(R, E), x.reshape(R, E),
                p["w_out"], p["b_out"], p["ln2_g"], p["ln2_b"],
                p["w1"], p["b1"], p["w2"], p["b2"]]
    if final_ln is not None:
        in_specs += [_const_spec((1, E), wmode), _const_spec((1, E), wmode)]
        operands += [final_ln[0], final_ln[1]]

    out = pl.pallas_call(
        partial(_outproj_ffn_kernel, apply_final_ln=final_ln is not None),
        out_shape=jax.ShapeDtypeStruct((R, E), jnp.float32),
        grid=(R // rt,),
        in_specs=in_specs,
        out_specs=row_blk,
        compiler_params=pltpu.CompilerParams(
            dimension_semantics=("parallel",),
            vmem_limit_bytes=_VMEM_LIMIT_BYTES),
    )(*operands)
    return out.reshape(B, S, E)


# ----------------------------------------------------------------------------
# one TransformerEncoderLayer (pre-LN, return_attn=True semantics)
# ----------------------------------------------------------------------------
def encoder_layer(x, bias4, p, num_heads, final_ln=None):
    q, k, v = qkv_projection(x, p)                   # (B, S, E) bf16 each
    logits, ctx = attention(q, k, v, bias4, num_heads)
    x_new = outproj_ffn(ctx, x, p, final_ln=final_ln)
    return x_new, logits


# ----------------------------------------------------------------------------
# full TransformerEncoderWithPair forward (post_ln=False path, eval mode)
# ----------------------------------------------------------------------------
def transformer_encoder_with_pair(emb, attn_mask, padding_mask, params, num_heads):
    B, S, E = emb.shape
    H = num_heads
    assert attn_mask is not None

    # emb LayerNorm + emb_dropout (identity) + padding-mask zeroing, one kernel
    x = emb_layernorm(emb, params["emb_ln_g"], params["emb_ln_b"], padding_mask)

    # fill_attn_mask: fold padding into the attention bias (plain-JAX glue)
    bias4 = attn_mask.reshape(B, H, S, S)
    if padding_mask is not None:
        bias4 = jnp.where(padding_mask[:, None, None, :].astype(bool),
                          -jnp.inf, bias4)

    n_layers = len(params["layers"])
    final_ln = (params["final_ln_g"], params["final_ln_b"])
    for li, layer_p in enumerate(params["layers"]):
        fl = final_ln if li == n_layers - 1 else None   # final LN fused into last layer
        x, bias4 = encoder_layer(x, bias4, layer_p, num_heads, final_ln=fl)

    # pair output: (B, H, S, S) -> (B, S, S, H); -inf padded-key columns are
    # propagated exactly as in the reference module.
    pair = bias4.transpose(0, 2, 3, 1)
    return x, pair


# ----------------------------------------------------------------------------
# synthetic parameters (module-shaped) + one-time q-scaling fold
# ----------------------------------------------------------------------------
def init_params(key, num_layers, E, F):
    def one_layer(k):
        ks = jax.random.split(k, 4)
        return {
            "ln1_g": jnp.ones((1, E), jnp.float32),
            "ln1_b": jnp.zeros((1, E), jnp.float32),
            "w_in": (0.02 * jax.random.normal(ks[0], (E, 3 * E), jnp.float32)
                     ).astype(jnp.bfloat16),
            "b_in": jnp.zeros((1, 3 * E), jnp.float32),
            "w_out": (0.02 * jax.random.normal(ks[1], (E, E), jnp.float32)
                      ).astype(jnp.bfloat16),
            "b_out": jnp.zeros((1, E), jnp.float32),
            "ln2_g": jnp.ones((1, E), jnp.float32),
            "ln2_b": jnp.zeros((1, E), jnp.float32),
            "w1": (0.02 * jax.random.normal(ks[2], (E, F), jnp.float32)
                   ).astype(jnp.bfloat16),
            "b1": jnp.zeros((1, F), jnp.float32),
            "w2": (0.02 * jax.random.normal(ks[3], (F, E), jnp.float32)
                   ).astype(jnp.bfloat16),
            "b2": jnp.zeros((1, E), jnp.float32),
        }

    keys = jax.random.split(key, num_layers)
    return {
        "emb_ln_g": jnp.ones((1, E), jnp.float32),
        "emb_ln_b": jnp.zeros((1, E), jnp.float32),
        "final_ln_g": jnp.ones((1, E), jnp.float32),
        "final_ln_b": jnp.zeros((1, E), jnp.float32),
        "layers": [one_layer(keys[i]) for i in range(num_layers)],
    }


def fold_q_scaling(params, num_heads):
    """scaling*(x@Wq + bq) == x@(scaling*Wq) + scaling*bq — fold the per-head
    query scaling into in_proj once, outside the kernels (review item)."""
    new_layers = []
    for lp in params["layers"]:
        E = lp["w_out"].shape[0]
        scaling = (E // num_heads) ** -0.5
        w = lp["w_in"].astype(jnp.float32)
        b = lp["b_in"]
        w = jnp.concatenate([w[:, :E] * scaling, w[:, E:]], axis=1
                            ).astype(lp["w_in"].dtype)
        b = jnp.concatenate([b[:, :E] * scaling, b[:, E:]], axis=1)
        new_layers.append({**lp, "w_in": w, "b_in": b})
    return {**params, "layers": new_layers}


if __name__ == "__main__":
    # small config consistent with the module (embed_dim divisible by heads)
    B, S, E, H, F, L = 2, 8, 32, 4, 64, 2

    key = jax.random.PRNGKey(0)
    k_emb, k_bias, k_par = jax.random.split(key, 3)

    emb = jax.random.normal(k_emb, (B, S, E), jnp.float32)
    attn_mask = 0.1 * jax.random.normal(k_bias, (B * H, S, S), jnp.float32)
    # pad the last two tokens of every sequence (1 = padded)
    padding_mask = jnp.zeros((B, S), jnp.float32).at[:, S - 2:].set(1.0)

    params = fold_q_scaling(init_params(k_par, L, E, F), H)

    _ = _weight_buffer_mode()   # run the Buffered(1) probe eagerly, outside jit

    # TODO(synk): all dropout paths (emb/attn/activation/residual) are identity
    # because the reference module is evaluated with training=False.
    fwd = jax.jit(partial(transformer_encoder_with_pair, num_heads=H))
    x_out, pair_out = fwd(emb, attn_mask, padding_mask, params)

    jax.block_until_ready((x_out, pair_out))
    assert x_out.shape == (B, S, E)
    assert pair_out.shape == (B, S, S, H)
    assert bool(jnp.all(jnp.isfinite(x_out)))
    print("KERNEL_OK")
</pallas_src>

<mosaic_0001>
module attributes {stable_mosaic.version = 11 : i64} {
  func.func @_probe(%arg0: i32, %arg1: memref<8x128xf32, #tpu.memory_space<vmem>>, %arg2: memref<8x128xf32, #tpu.memory_space<vmem>>) attributes {dimension_semantics = [#tpu.dimension_semantics<arbitrary>], iteration_bounds = array<i64: 2>, scalar_prefetch = 0 : i64, scratch_operands = 0 : i64, tpu.core_type = #tpu.core_type<tc>, window_params = [{pipeline_mode = #tpu.pipeline_mode<synchronous>, transform_indices = @transform_0, window_bounds = array<i64: 8, 128>}, {transform_indices = @transform_1, window_bounds = array<i64: 8, 128>}]} {
    %c0 = arith.constant 0 : index
    %c0_0 = arith.constant 0 : index
    %0 = vector.load %arg1[%c0, %c0_0] : memref<8x128xf32, #tpu.memory_space<vmem>>, vector<8x128xf32>
    %cst = arith.constant 1.000000e+00 : f32
    %1 = vector.broadcast %cst : f32 to vector<8x128xf32>
    %2 = arith.addf %0, %1 : vector<8x128xf32>
    %c0_1 = arith.constant 0 : index
    %c0_2 = arith.constant 0 : index
    %3 = vector.load %arg2[%c0_1, %c0_2] : memref<8x128xf32, #tpu.memory_space<vmem>>, vector<8x128xf32>
    tpu.vector_store %arg2[%c0_1, %c0_2], %2 {strides = array<i32>} : memref<8x128xf32, #tpu.memory_space<vmem>>, vector<8x128xf32>,
    return
  }
  func.func @transform_0(%arg0: i32) -> (i32, i32) {
    %c0_i32 = arith.constant 0 : i32
    %c0_i32_0 = arith.constant 0 : i32
    %c0_i32_1 = arith.constant 0 : i32
    return %c0_i32, %c0_i32_0 : i32, i32
  }
  func.func @transform_1(%arg0: i32) -> (i32, i32) {
    %c0_i32 = arith.constant 0 : i32
    %c0_i32_0 = arith.constant 0 : i32
    return %arg0, %c0_i32 : i32, i32
  }
}

module attributes {stable_mosaic.version = 11 : i64} {
  func.func @_emb_ln_kernel(%arg0: i32, %arg1: memref<8x32xf32, #tpu.memory_space<vmem>>, %arg2: memref<1x32xf32, #tpu.memory_space<vmem>>, %arg3: memref<1x32xf32, #tpu.memory_space<vmem>>, %arg4: memref<8x1xf32, #tpu.memory_space<vmem>>, %arg5: memref<8x32xf32, #tpu.memory_space<vmem>>) attributes {dimension_semantics = [#tpu.dimension_semantics<parallel>], iteration_bounds = array<i64: 2>, scalar_prefetch = 0 : i64, scratch_operands = 0 : i64, tpu.core_type = #tpu.core_type<tc>, window_params = [{transform_indices = @transform_0, window_bounds = array<i64: 8, 32>}, {pipeline_mode = #tpu.pipeline_mode<synchronous>, transform_indices = @transform_1, window_bounds = array<i64: 1, 32>}, {pipeline_mode = #tpu.pipeline_mode<synchronous>, transform_indices = @transform_2, window_bounds = array<i64: 1, 32>}, {transform_indices = @transform_3, window_bounds = array<i64: 8, 1>}, {transform_indices = @transform_4, window_bounds = array<i64: 8, 32>}]} {
    %c0 = arith.constant 0 : index
    %c0_0 = arith.constant 0 : index
    %0 = vector.load %arg1[%c0, %c0_0] : memref<8x32xf32, #tpu.memory_space<vmem>>, vector<8x32xf32>
    %c0_1 = arith.constant 0 : index
    %c0_2 = arith.constant 0 : index
    %1 = vector.load %arg2[%c0_1, %c0_2] : memref<1x32xf32, #tpu.memory_space<vmem>>, vector<1x32xf32>
    %c0_3 = arith.constant 0 : index
    %c0_4 = arith.constant 0 : index
    %2 = vector.load %arg3[%c0_3, %c0_4] : memref<1x32xf32, #tpu.memory_space<vmem>>, vector<1x32xf32>
    %cst = arith.constant dense<0.000000e+00> : vector<8xf32>
    %3 = vector.multi_reduction <add>, %0, %cst [1] : vector<8x32xf32> to vector<8xf32>
    %4 = vector.shape_cast %3 : vector<8xf32> to vector<8x1xf32>
    %cst_5 = arith.constant 3.200000e+01 : f32
    %5 = vector.broadcast %cst_5 : f32 to vector<8x1xf32>
    %6 = arith.divf %4, %5 : vector<8x1xf32>
    %7 = vector.broadcast %6 : vector<8x1xf32> to vector<8x32xf32>
    %8 = arith.subf %0, %7 : vector<8x32xf32>
    %9 = arith.mulf %8, %8 : vector<8x32xf32>
    %cst_6 = arith.constant dense<0.000000e+00> : vector<8xf32>
    %10 = vector.multi_reduction <add>, %9, %cst_6 [1] : vector<8x32xf32> to vector<8xf32>
    %11 = vector.shape_cast %10 : vector<8xf32> to vector<8x1xf32>
    %cst_7 = arith.constant 3.200000e+01 : f32
    %12 = vector.broadcast %cst_7 : f32 to vector<8x1xf32>
    %13 = arith.divf %11, %12 : vector<8x1xf32>
    %14 = vector.broadcast %6 : vector<8x1xf32> to vector<8x32xf32>
    %15 = arith.subf %0, %14 : vector<8x32xf32>
    %cst_8 = arith.constant 9.99999974E-6 : f32
    %16 = vector.broadcast %cst_8 : f32 to vector<8x1xf32>
    %17 = arith.addf %13, %16 : vector<8x1xf32>
    %18 = math.rsqrt %17 : vector<8x1xf32>
    %19 = vector.broadcast %18 : vector<8x1xf32> to vector<8x32xf32>
    %20 = arith.mulf %15, %19 : vector<8x32xf32>
    %21 = vector.broadcast %1 : vector<1x32xf32> to vector<8x32xf32>
    %22 = arith.mulf %20, %21 : vector<8x32xf32>
    %23 = vector.broadcast %2 : vector<1x32xf32> to vector<8x32xf32>
    %24 = arith.addf %22, %23 : vector<8x32xf32>
    %c0_9 = arith.constant 0 : index
    %c0_10 = arith.constant 0 : index
    %25 = vector.load %arg4[%c0_9, %c0_10] : memref<8x1xf32, #tpu.memory_space<vmem>>, vector<8x1xf32>
    %cst_11 = arith.constant 1.000000e+00 : f32
    %26 = vector.broadcast %cst_11 : f32 to vector<8x1xf32>
    %27 = arith.subf %26, %25 : vector<8x1xf32>
    %28 = vector.broadcast %27 : vector<8x1xf32> to vector<8x32xf32>
    %29 = arith.mulf %24, %28 : vector<8x32xf32>
    %c0_12 = arith.constant 0 : index
    %c0_13 = arith.constant 0 : index
    %30 = vector.load %arg5[%c0_12, %c0_13] : memref<8x32xf32, #tpu.memory_space<vmem>>, vector<8x32xf32>
    tpu.vector_store %arg5[%c0_12, %c0_13], %29 {strides = array<i32>} : memref<8x32xf32, #tpu.memory_space<vmem>>, vector<8x32xf32>,
    return
  }
  func.func @transform_0(%arg0: i32) -> (i32, i32) {
    %c0_i32 = arith.constant 0 : i32
    %c0_i32_0 = arith.constant 0 : i32
    return %arg0, %c0_i32 : i32, i32
  }
  func.func @transform_1(%arg0: i32) -> (i32, i32) {
    %c0_i32 = arith.constant 0 : i32
    %c0_i32_0 = arith.constant 0 : i32
    %c0_i32_1 = arith.constant 0 : i32
    return %c0_i32, %c0_i32_0 : i32, i32
  }
  func.func @transform_2(%arg0: i32) -> (i32, i32) {
    %c0_i32 = arith.constant 0 : i32
    %c0_i32_0 = arith.constant 0 : i32
    %c0_i32_1 = arith.constant 0 : i32
    return %c0_i32, %c0_i32_0 : i32, i32
  }
  func.func @transform_3(%arg0: i32) -> (i32, i32) {
    %c0_i32 = arith.constant 0 : i32
    %c0_i32_0 = arith.constant 0 : i32
    return %arg0, %c0_i32 : i32, i32
  }
  func.func @transform_4(%arg0: i32) -> (i32, i32) {
    %c0_i32 = arith.constant 0 : i32
    %c0_i32_0 = arith.constant 0 : i32
    return %arg0, %c0_i32 : i32, i32
  }
}

module attributes {stable_mosaic.version = 11 : i64} {
  func.func @_outproj_ffn_kernel(%arg0: i32, %arg1: memref<8x32xbf16, #tpu.memory_space<vmem>>, %arg2: memref<8x32xf32, #tpu.memory_space<vmem>>, %arg3: memref<32x32xbf16, #tpu.memory_space<vmem>>, %arg4: memref<1x32xf32, #tpu.memory_space<vmem>>, %arg5: memref<1x32xf32, #tpu.memory_space<vmem>>, %arg6: memref<1x32xf32, #tpu.memory_space<vmem>>, %arg7: memref<32x64xbf16, #tpu.memory_space<vmem>>, %arg8: memref<1x64xf32, #tpu.memory_space<vmem>>, %arg9: memref<64x32xbf16, #tpu.memory_space<vmem>>, %arg10: memref<1x32xf32, #tpu.memory_space<vmem>>, %arg11: memref<8x32xf32, #tpu.memory_space<vmem>>) attributes {dimension_semantics = [#tpu.dimension_semantics<parallel>], iteration_bounds = array<i64: 2>, scalar_prefetch = 0 : i64, scratch_operands = 0 : i64, tpu.core_type = #tpu.core_type<tc>, window_params = [{transform_indices = @transform_0, window_bounds = array<i64: 8, 32>}, {transform_indices = @transform_1, window_bounds = array<i64: 8, 32>}, {pipeline_mode = #tpu.pipeline_mode<synchronous>, transform_indices = @transform_2, window_bounds = array<i64: 32, 32>}, {pipeline_mode = #tpu.pipeline_mode<synchronous>, transform_indices = @transform_3, window_bounds = array<i64: 1, 32>}, {pipeline_mode = #tpu.pipeline_mode<synchronous>, transform_indices = @transform_4, window_bounds = array<i64: 1, 32>}, {pipeline_mode = #tpu.pipeline_mode<synchronous>, transform_indices = @transform_5, window_bounds = array<i64: 1, 32>}, {pipeline_mode = #tpu.pipeline_mode<synchronous>, transform_indices = @transform_6, window_bounds = array<i64: 32, 64>}, {pipeline_mode = #tpu.pipeline_mode<synchronous>, transform_indices = @transform_7, window_bounds = array<i64: 1, 64>}, {pipeline_mode = #tpu.pipeline_mode<synchronous>, transform_indices = @transform_8, window_bounds = array<i64: 64, 32>}, {pipeline_mode = #tpu.pipeline_mode<synchronous>, transform_indices = @transform_9, window_bounds = array<i64: 1, 32>}, {transform_indices = @transform_10, window_bounds = array<i64: 8, 32>}]} {
    %c0 = arith.constant 0 : index
    %c0_0 = arith.constant 0 : index
    %0 = vector.load %arg1[%c0, %c0_0] : memref<8x32xbf16, #tpu.memory_space<vmem>>, vector<8x32xbf16>
    %c0_1 = arith.constant 0 : index
    %c0_2 = arith.constant 0 : index
    %1 = vector.load %arg3[%c0_1, %c0_2] : memref<32x32xbf16, #tpu.memory_space<vmem>>, vector<32x32xbf16>
    %cst = arith.constant dense<0.000000e+00> : vector<8x32xf32>
    %2 = tpu.matmul %0, %1, %cst {dimension_numbers = #tpu.dot_dimension_numbers<[1], [0], [0], [1], [0, 0, 1, 1], [], []>} : vector<8x32xbf16>, vector<32x32xbf16>, vector<8x32xf32> -> vector<8x32xf32>
    %c0_3 = arith.constant 0 : index
    %c0_4 = arith.constant 0 : index
    %3 = vector.load %arg4[%c0_3, %c0_4] : memref<1x32xf32, #tpu.memory_space<vmem>>, vector<1x32xf32>
    %4 = vector.broadcast %3 : vector<1x32xf32> to vector<8x32xf32>
    %5 = arith.addf %2, %4 : vector<8x32xf32>
    %c0_5 = arith.constant 0 : index
    %c0_6 = arith.constant 0 : index
    %6 = vector.load %arg2[%c0_5, %c0_6] : memref<8x32xf32, #tpu.memory_space<vmem>>, vector<8x32xf32>
    %7 = arith.addf %6, %5 : vector<8x32xf32>
    %c0_7 = arith.constant 0 : index
    %c0_8 = arith.constant 0 : index
    %8 = vector.load %arg5[%c0_7, %c0_8] : memref<1x32xf32, #tpu.memory_space<vmem>>, vector<1x32xf32>
    %c0_9 = arith.constant 0 : index
    %c0_10 = arith.constant 0 : index
    %9 = vector.load %arg6[%c0_9, %c0_10] : memref<1x32xf32, #tpu.memory_space<vmem>>, vector<1x32xf32>
    %cst_11 = arith.constant dense<0.000000e+00> : vector<8xf32>
    %10 = vector.multi_reduction <add>, %7, %cst_11 [1] : vector<8x32xf32> to vector<8xf32>
    %11 = vector.shape_cast %10 : vector<8xf32> to vector<8x1xf32>
    %cst_12 = arith.constant 3.200000e+01 : f32
    %12 = vector.broadcast %cst_12 : f32 to vector<8x1xf32>
    %13 = arith.divf %11, %12 : vector<8x1xf32>
    %14 = vector.broadcast %13 : vector<8x1xf32> to vector<8x32xf32>
    %15 = arith.subf %7, %14 : vector<8x32xf32>
    %16 = arith.mulf %15, %15 : vector<8x32xf32>
    %cst_13 = arith.constant dense<0.000000e+00> : vector<8xf32>
    %17 = vector.multi_reduction <add>, %16, %cst_13 [1] : vector<8x32xf32> to vector<8xf32>
    %18 = vector.shape_cast %17 : vector<8xf32> to vector<8x1xf32>
    %cst_14 = arith.constant 3.200000e+01 : f32
    %19 = vector.broadcast %cst_14 : f32 to vector<8x1xf32>
    %20 = arith.divf %18, %19 : vector<8x1xf32>
    %21 = vector.broadcast %13 : vector<8x1xf32> to vector<8x32xf32>
    %22 = arith.subf %7, %21 : vector<8x32xf32>
    %cst_15 = arith.constant 9.99999974E-6 : f32
    %23 = vector.broadcast %cst_15 : f32 to vector<8x1xf32>
    %24 = arith.addf %20, %23 : vector<8x1xf32>
    %25 = math.rsqrt %24 : vector<8x1xf32>
    %26 = vector.broadcast %25 : vector<8x1xf32> to vector<8x32xf32>
    %27 = arith.mulf %22, %26 : vector<8x32xf32>
    %28 = vector.broadcast %8 : vector<1x32xf32> to vector<8x32xf32>
    %29 = arith.mulf %27, %28 : vector<8x32xf32>
    %30 = vector.broadcast %9 : vector<1x32xf32> to vector<8x32xf32>
    %31 = arith.addf %29, %30 : vector<8x32xf32>
    %32 = arith.truncf %31 : vector<8x32xf32> to vector<8x32xbf16>
    %c0_16 = arith.constant 0 : index
    %c0_17 = arith.constant 0 : index
    %33 = vector.load %arg7[%c0_16, %c0_17] : memref<32x64xbf16, #tpu.memory_space<vmem>>, vector<32x64xbf16>
    %cst_18 = arith.constant dense<0.000000e+00> : vector<8x64xf32>
    %34 = tpu.matmul %32, %33, %cst_18 {dimension_numbers = #tpu.dot_dimension_numbers<[1], [0], [0], [1], [0, 0, 1, 1], [], []>} : vector<8x32xbf16>, vector<32x64xbf16>, vector<8x64xf32> -> vector<8x64xf32>
    %c0_19 = arith.constant 0 : index
    %c0_20 = arith.constant 0 : index
    %35 = vector.load %arg8[%c0_19, %c0_20] : memref<1x64xf32, #tpu.memory_space<vmem>>, vector<1x64xf32>
    %36 = vector.broadcast %35 : vector<1x64xf32> to vector<8x64xf32>
    %37 = arith.addf %34, %36 : vector<8x64xf32>
    %cst_21 = arith.constant 5.000000e-01 : f32
    %38 = vector.broadcast %cst_21 : f32 to vector<8x64xf32>
    %39 = arith.mulf %38, %37 : vector<8x64xf32>
    %cst_22 = arith.constant 0.707106769 : f32
    %40 = vector.broadcast %cst_22 : f32 to vector<8x64xf32>
    %41 = arith.mulf %37, %40 : vector<8x64xf32>
    %42 = math.absf %41 : vector<8x64xf32>
    %cst_23 = arith.constant 0.327591091 : f32
    %43 = vector.broadcast %cst_23 : f32 to vector<8x64xf32>
    %44 = arith.mulf %43, %42 : vector<8x64xf32>
    %cst_24 = arith.constant 1.000000e+00 : f32
    %45 = vector.broadcast %cst_24 : f32 to vector<8x64xf32>
    %46 = arith.addf %45, %44 : vector<8x64xf32>
    %cst_25 = arith.constant 1.000000e+00 : f32
    %47 = vector.broadcast %cst_25 : f32 to vector<8x64xf32>
    %48 = arith.divf %47, %46 : vector<8x64xf32>
    %cst_26 = arith.constant 1.06140542 : f32
    %49 = vector.broadcast %cst_26 : f32 to vector<8x64xf32>
    %50 = arith.mulf %49, %48 : vector<8x64xf32>
    %cst_27 = arith.constant -1.45315206 : f32
    %51 = vector.broadcast %cst_27 : f32 to vector<8x64xf32>
    %52 = arith.addf %50, %51 : vector<8x64xf32>
    %53 = arith.mulf %52, %48 : vector<8x64xf32>
    %cst_28 = arith.constant 1.42141378 : f32
    %54 = vector.broadcast %cst_28 : f32 to vector<8x64xf32>
    %55 = arith.addf %53, %54 : vector<8x64xf32>
    %56 = arith.mulf %55, %48 : vector<8x64xf32>
    %cst_29 = arith.constant -0.284496725 : f32
    %57 = vector.broadcast %cst_29 : f32 to vector<8x64xf32>
    %58 = arith.addf %56, %57 : vector<8x64xf32>
    %59 = arith.mulf %58, %48 : vector<8x64xf32>
    %cst_30 = arith.constant 0.254829586 : f32
    %60 = vector.broadcast %cst_30 : f32 to vector<8x64xf32>
    %61 = arith.addf %59, %60 : vector<8x64xf32>
    %62 = arith.mulf %61, %48 : vector<8x64xf32>
    %cst_31 = arith.constant 0.000000e+00 : f32
    %63 = vector.broadcast %cst_31 : f32 to vector<8x64xf32>
    %64 = arith.subf %63, %42 : vector<8x64xf32>
    %65 = arith.mulf %64, %42 : vector<8x64xf32>
    %66 = math.exp %65 : vector<8x64xf32>
    %67 = arith.mulf %62, %66 : vector<8x64xf32>
    %cst_32 = arith.constant 1.000000e+00 : f32
    %68 = vector.broadcast %cst_32 : f32 to vector<8x64xf32>
    %69 = arith.subf %68, %67 : vector<8x64xf32>
    %cst_33 = arith.constant 0.000000e+00 : f32
    %70 = vector.broadcast %cst_33 : f32 to vector<8x64xf32>
    %71 = arith.cmpf oge, %41, %70 : vector<8x64xf32>
    %cst_34 = arith.constant 0.000000e+00 : f32
    %72 = vector.broadcast %cst_34 : f32 to vector<8x64xf32>
    %73 = arith.subf %72, %69 : vector<8x64xf32>
    %74 = arith.select %71, %69, %73 : vector<8x64xi1>, vector<8x64xf32>
    %cst_35 = arith.constant 1.000000e+00 : f32
    %75 = vector.broadcast %cst_35 : f32 to vector<8x64xf32>
    %76 = arith.addf %75, %74 : vector<8x64xf32>
    %77 = arith.mulf %39, %76 : vector<8x64xf32>
    %78 = arith.truncf %77 : vector<8x64xf32> to vector<8x64xbf16>
    %c0_36 = arith.constant 0 : index
    %c0_37 = arith.constant 0 : index
    %79 = vector.load %arg9[%c0_36, %c0_37] : memref<64x32xbf16, #tpu.memory_space<vmem>>, vector<64x32xbf16>
    %cst_38 = arith.constant dense<0.000000e+00> : vector<8x32xf32>
    %80 = tpu.matmul %78, %79, %cst_38 {dimension_numbers = #tpu.dot_dimension_numbers<[1], [0], [0], [1], [0, 0, 1, 1], [], []>} : vector<8x64xbf16>, vector<64x32xbf16>, vector<8x32xf32> -> vector<8x32xf32>
    %c0_39 = arith.constant 0 : index
    %c0_40 = arith.constant 0 : index
    %81 = vector.load %arg10[%c0_39, %c0_40] : memref<1x32xf32, #tpu.memory_space<vmem>>, vector<1x32xf32>
    %82 = vector.broadcast %81 : vector<1x32xf32> to vector<8x32xf32>
    %83 = arith.addf %80, %82 : vector<8x32xf32>
    %84 = arith.addf %7, %83 : vector<8x32xf32>
    %c0_41 = arith.constant 0 : index
    %c0_42 = arith.constant 0 : index
    %85 = vector.load %arg11[%c0_41, %c0_42] : memref<8x32xf32, #tpu.memory_space<vmem>>, vector<8x32xf32>
    tpu.vector_store %arg11[%c0_41, %c0_42], %84 {strides = array<i32>} : memref<8x32xf32, #tpu.memory_space<vmem>>, vector<8x32xf32>,
    return
  }
  func.func @transform_0(%arg0: i32) -> (i32, i32) {
    %c0_i32 = arith.constant 0 : i32
    %c0_i32_0 = arith.constant 0 : i32
    return %arg0, %c0_i32 : i32, i32
  }
  func.func @transform_1(%arg0: i32) -> (i32, i32) {
    %c0_i32 = arith.constant 0 : i32
    %c0_i32_0 = arith.constant 0 : i32
    return %arg0, %c0_i32 : i32, i32
  }
  func.func @transform_2(%arg0: i32) -> (i32, i32) {
    %c0_i32 = arith.constant 0 : i32
    %c0_i32_0 = arith.constant 0 : i32
    %c0_i32_1 = arith.constant 0 : i32
    return %c0_i32, %c0_i32_0 : i32, i32
  }
  func.func @transform_3(%arg0: i32) -> (i32, i32) {
    %c0_i32 = arith.constant 0 : i32
    %c0_i32_0 = arith.constant 0 : i32
    %c0_i32_1 = arith.constant 0 : i32
    return %c0_i32, %c0_i32_0 : i32, i32
  }
  func.func @transform_4(%arg0: i32) -> (i32, i32) {
    %c0_i32 = arith.constant 0 : i32
    %c0_i32_0 = arith.constant 0 : i32
    %c0_i32_1 = arith.constant 0 : i32
    return %c0_i32, %c0_i32_0 : i32, i32
  }
  func.func @transform_5(%arg0: i32) -> (i32, i32) {
    %c0_i32 = arith.constant 0 : i32
    %c0_i32_0 = arith.constant 0 : i32
    %c0_i32_1 = arith.constant 0 : i32
    return %c0_i32, %c0_i32_0 : i32, i32
  }
  func.func @transform_6(%arg0: i32) -> (i32, i32) {
    %c0_i32 = arith.constant 0 : i32
    %c0_i32_0 = arith.constant 0 : i32
    %c0_i32_1 = arith.constant 0 : i32
    return %c0_i32, %c0_i32_0 : i32, i32
  }
  func.func @transform_7(%arg0: i32) -> (i32, i32) {
    %c0_i32 = arith.constant 0 : i32
    %c0_i32_0 = arith.constant 0 : i32
    %c0_i32_1 = arith.constant 0 : i32
    return %c0_i32, %c0_i32_0 : i32, i32
  }
  func.func @transform_8(%arg0: i32) -> (i32, i32) {
    %c0_i32 = arith.constant 0 : i32
    %c0_i32_0 = arith.constant 0 : i32
    %c0_i32_1 = arith.constant 0 : i32
    return %c0_i32, %c0_i32_0 : i32, i32
  }
  func.func @transform_9(%arg0: i32) -> (i32, i32) {
    %c0_i32 = arith.constant 0 : i32
    %c0_i32_0 = arith.constant 0 : i32
    %c0_i32_1 = arith.constant 0 : i32
    return %c0_i32, %c0_i32_0 : i32, i32
  }
  func.func @transform_10(%arg0: i32) -> (i32, i32) {
    %c0_i32 = arith.constant 0 : i32
    %c0_i32_0 = arith.constant 0 : i32
    return %arg0, %c0_i32 : i32, i32
  }
}

module attributes {stable_mosaic.version = 11 : i64} {
  func.func @_qkv_kernel(%arg0: i32, %arg1: memref<8x32xf32, #tpu.memory_space<vmem>>, %arg2: memref<1x32xf32, #tpu.memory_space<vmem>>, %arg3: memref<1x32xf32, #tpu.memory_space<vmem>>, %arg4: memref<32x96xbf16, #tpu.memory_space<vmem>>, %arg5: memref<1x96xf32, #tpu.memory_space<vmem>>, %arg6: memref<8x32xbf16, #tpu.memory_space<vmem>>, %arg7: memref<8x32xbf16, #tpu.memory_space<vmem>>, %arg8: memref<8x32xbf16, #tpu.memory_space<vmem>>) attributes {dimension_semantics = [#tpu.dimension_semantics<parallel>], iteration_bounds = array<i64: 2>, scalar_prefetch = 0 : i64, scratch_operands = 0 : i64, tpu.core_type = #tpu.core_type<tc>, window_params = [{transform_indices = @transform_0, window_bounds = array<i64: 8, 32>}, {pipeline_mode = #tpu.pipeline_mode<synchronous>, transform_indices = @transform_1, window_bounds = array<i64: 1, 32>}, {pipeline_mode = #tpu.pipeline_mode<synchronous>, transform_indices = @transform_2, window_bounds = array<i64: 1, 32>}, {pipeline_mode = #tpu.pipeline_mode<synchronous>, transform_indices = @transform_3, window_bounds = array<i64: 32, 96>}, {pipeline_mode = #tpu.pipeline_mode<synchronous>, transform_indices = @transform_4, window_bounds = array<i64: 1, 96>}, {transform_indices = @transform_5, window_bounds = array<i64: 8, 32>}, {transform_indices = @transform_6, window_bounds = array<i64: 8, 32>}, {transform_indices = @transform_7, window_bounds = array<i64: 8, 32>}]} {
    %c0 = arith.constant 0 : index
    %c0_0 = arith.constant 0 : index
    %0 = vector.load %arg1[%c0, %c0_0] : memref<8x32xf32, #tpu.memory_space<vmem>>, vector<8x32xf32>
    %c0_1 = arith.constant 0 : index
    %c0_2 = arith.constant 0 : index
    %1 = vector.load %arg2[%c0_1, %c0_2] : memref<1x32xf32, #tpu.memory_space<vmem>>, vector<1x32xf32>
    %c0_3 = arith.constant 0 : index
    %c0_4 = arith.constant 0 : index
    %2 = vector.load %arg3[%c0_3, %c0_4] : memref<1x32xf32, #tpu.memory_space<vmem>>, vector<1x32xf32>
    %cst = arith.constant dense<0.000000e+00> : vector<8xf32>
    %3 = vector.multi_reduction <add>, %0, %cst [1] : vector<8x32xf32> to vector<8xf32>
    %4 = vector.shape_cast %3 : vector<8xf32> to vector<8x1xf32>
    %cst_5 = arith.constant 3.200000e+01 : f32
    %5 = vector.broadcast %cst_5 : f32 to vector<8x1xf32>
    %6 = arith.divf %4, %5 : vector<8x1xf32>
    %7 = vector.broadcast %6 : vector<8x1xf32> to vector<8x32xf32>
    %8 = arith.subf %0, %7 : vector<8x32xf32>
    %9 = arith.mulf %8, %8 : vector<8x32xf32>
    %cst_6 = arith.constant dense<0.000000e+00> : vector<8xf32>
    %10 = vector.multi_reduction <add>, %9, %cst_6 [1] : vector<8x32xf32> to vector<8xf32>
    %11 = vector.shape_cast %10 : vector<8xf32> to vector<8x1xf32>
    %cst_7 = arith.constant 3.200000e+01 : f32
    %12 = vector.broadcast %cst_7 : f32 to vector<8x1xf32>
    %13 = arith.divf %11, %12 : vector<8x1xf32>
    %14 = vector.broadcast %6 : vector<8x1xf32> to vector<8x32xf32>
    %15 = arith.subf %0, %14 : vector<8x32xf32>
    %cst_8 = arith.constant 9.99999974E-6 : f32
    %16 = vector.broadcast %cst_8 : f32 to vector<8x1xf32>
    %17 = arith.addf %13, %16 : vector<8x1xf32>
    %18 = math.rsqrt %17 : vector<8x1xf32>
    %19 = vector.broadcast %18 : vector<8x1xf32> to vector<8x32xf32>
    %20 = arith.mulf %15, %19 : vector<8x32xf32>
    %21 = vector.broadcast %1 : vector<1x32xf32> to vector<8x32xf32>
    %22 = arith.mulf %20, %21 : vector<8x32xf32>
    %23 = vector.broadcast %2 : vector<1x32xf32> to vector<8x32xf32>
    %24 = arith.addf %22, %23 : vector<8x32xf32>
    %25 = arith.truncf %24 : vector<8x32xf32> to vector<8x32xbf16>
    %c0_9 = arith.constant 0 : index
    %c0_10 = arith.constant 0 : index
    %26 = vector.load %arg4[%c0_9, %c0_10] : memref<32x96xbf16, #tpu.memory_space<vmem>>, vector<32x96xbf16>
    %cst_11 = arith.constant dense<0.000000e+00> : vector<8x96xf32>
    %27 = tpu.matmul %25, %26, %cst_11 {dimension_numbers = #tpu.dot_dimension_numbers<[1], [0], [0], [1], [0, 0, 1, 1], [], []>} : vector<8x32xbf16>, vector<32x96xbf16>, vector<8x96xf32> -> vector<8x96xf32>
    %c0_12 = arith.constant 0 : index
    %c0_13 = arith.constant 0 : index
    %28 = vector.load %arg5[%c0_12, %c0_13] : memref<1x96xf32, #tpu.memory_space<vmem>>, vector<1x96xf32>
    %29 = vector.broadcast %28 : vector<1x96xf32> to vector<8x96xf32>
    %30 = arith.addf %27, %29 : vector<8x96xf32>
    %31 = vector.extract_strided_slice %30 {offsets = [0, 0], sizes = [8, 32], strides = [1, 1]} : vector<8x96xf32> to vector<8x32xf32>
    %32 = arith.truncf %31 : vector<8x32xf32> to vector<8x32xbf16>
    %c0_14 = arith.constant 0 : index
    %c0_15 = arith.constant 0 : index
    %33 = vector.load %arg6[%c0_14, %c0_15] : memref<8x32xbf16, #tpu.memory_space<vmem>>, vector<8x32xbf16>
    tpu.vector_store %arg6[%c0_14, %c0_15], %32 {strides = array<i32>} : memref<8x32xbf16, #tpu.memory_space<vmem>>, vector<8x32xbf16>,
    %34 = vector.extract_strided_slice %30 {offsets = [0, 32], sizes = [8, 32], strides = [1, 1]} : vector<8x96xf32> to vector<8x32xf32>
    %35 = arith.truncf %34 : vector<8x32xf32> to vector<8x32xbf16>
    %c0_16 = arith.constant 0 : index
    %c0_17 = arith.constant 0 : index
    %36 = vector.load %arg7[%c0_16, %c0_17] : memref<8x32xbf16, #tpu.memory_space<vmem>>, vector<8x32xbf16>
    tpu.vector_store %arg7[%c0_16, %c0_17], %35 {strides = array<i32>} : memref<8x32xbf16, #tpu.memory_space<vmem>>, vector<8x32xbf16>,
    %37 = vector.extract_strided_slice %30 {offsets = [0, 64], sizes = [8, 32], strides = [1, 1]} : vector<8x96xf32> to vector<8x32xf32>
    %38 = arith.truncf %37 : vector<8x32xf32> to vector<8x32xbf16>
    %c0_18 = arith.constant 0 : index
    %c0_19 = arith.constant 0 : index
    %39 = vector.load %arg8[%c0_18, %c0_19] : memref<8x32xbf16, #tpu.memory_space<vmem>>, vector<8x32xbf16>
    tpu.vector_store %arg8[%c0_18, %c0_19], %38 {strides = array<i32>} : memref<8x32xbf16, #tpu.memory_space<vmem>>, vector<8x32xbf16>,
    return
  }
  func.func @transform_0(%arg0: i32) -> (i32, i32) {
    %c0_i32 = arith.constant 0 : i32
    %c0_i32_0 = arith.constant 0 : i32
    return %arg0, %c0_i32 : i32, i32
  }
  func.func @transform_1(%arg0: i32) -> (i32, i32) {
    %c0_i32 = arith.constant 0 : i32
    %c0_i32_0 = arith.constant 0 : i32
    %c0_i32_1 = arith.constant 0 : i32
    return %c0_i32, %c0_i32_0 : i32, i32
  }
  func.func @transform_2(%arg0: i32) -> (i32, i32) {
    %c0_i32 = arith.constant 0 : i32
    %c0_i32_0 = arith.constant 0 : i32
    %c0_i32_1 = arith.constant 0 : i32
    return %c0_i32, %c0_i32_0 : i32, i32
  }
  func.func @transform_3(%arg0: i32) -> (i32, i32) {
    %c0_i32 = arith.constant 0 : i32
    %c0_i32_0 = arith.constant 0 : i32
    %c0_i32_1 = arith.constant 0 : i32
    return %c0_i32, %c0_i32_0 : i32, i32
  }
  func.func @transform_4(%arg0: i32) -> (i32, i32) {
    %c0_i32 = arith.constant 0 : i32
    %c0_i32_0 = arith.constant 0 : i32
    %c0_i32_1 = arith.constant 0 : i32
    return %c0_i32, %c0_i32_0 : i32, i32
  }
  func.func @transform_5(%arg0: i32) -> (i32, i32) {
    %c0_i32 = arith.constant 0 : i32
    %c0_i32_0 = arith.constant 0 : i32
    return %arg0, %c0_i32 : i32, i32
  }
  func.func @transform_6(%arg0: i32) -> (i32, i32) {
    %c0_i32 = arith.constant 0 : i32
    %c0_i32_0 = arith.constant 0 : i32
    return %arg0, %c0_i32 : i32, i32
  }
  func.func @transform_7(%arg0: i32) -> (i32, i32) {
    %c0_i32 = arith.constant 0 : i32
    %c0_i32_0 = arith.constant 0 : i32
    return %arg0, %c0_i32 : i32, i32
  }
}

module attributes {stable_mosaic.version = 11 : i64} {
  func.func @_attention_kernel(%arg0: i32, %arg1: i32, %arg2: i32, %arg3: memref<1x8x32xbf16, #tpu.memory_space<vmem>>, %arg4: memref<1x8x32xbf16, #tpu.memory_space<vmem>>, %arg5: memref<1x8x32xbf16, #tpu.memory_space<vmem>>, %arg6: memref<1x4x8x8xf32, #tpu.memory_space<vmem>>, %arg7: memref<1x4x8x8xf32, #tpu.memory_space<vmem>>, %arg8: memref<1x8x32xbf16, #tpu.memory_space<vmem>>) attributes {dimension_semantics = [#tpu.dimension_semantics<parallel>, #tpu.dimension_semantics<parallel>, #tpu.dimension_semantics<parallel>], iteration_bounds = array<i64: 2, 1, 1>, scalar_prefetch = 0 : i64, scratch_operands = 0 : i64, tpu.core_type = #tpu.core_type<tc>, window_params = [{transform_indices = @transform_0, window_bounds = array<i64: 1, 8, 32>}, {transform_indices = @transform_1, window_bounds = array<i64: 1, 8, 32>}, {transform_indices = @transform_2, window_bounds = array<i64: 1, 8, 32>}, {transform_indices = @transform_3, window_bounds = array<i64: 1, 4, 8, 8>}, {transform_indices = @transform_4, window_bounds = array<i64: 1, 4, 8, 8>}, {transform_indices = @transform_5, window_bounds = array<i64: 1, 8, 32>}]} {
    %c0 = arith.constant 0 : index
    %c0_0 = arith.constant 0 : index
    %c0_1 = arith.constant 0 : index
    %0 = vector.load %arg3[%c0, %c0_0, %c0_1] : memref<1x8x32xbf16, #tpu.memory_space<vmem>>, vector<1x8x32xbf16>
    %1 = vector.shape_cast %0 : vector<1x8x32xbf16> to vector<8x32xbf16>
    %c0_2 = arith.constant 0 : index
    %c0_3 = arith.constant 0 : index
    %c0_4 = arith.constant 0 : index
    %2 = vector.load %arg4[%c0_2, %c0_3, %c0_4] : memref<1x8x32xbf16, #tpu.memory_space<vmem>>, vector<1x8x32xbf16>
    %3 = vector.shape_cast %2 : vector<1x8x32xbf16> to vector<8x32xbf16>
    %c0_5 = arith.constant 0 : index
    %c0_6 = arith.constant 0 : index
    %c0_7 = arith.constant 0 : index
    %4 = vector.load %arg5[%c0_5, %c0_6, %c0_7] : memref<1x8x32xbf16, #tpu.memory_space<vmem>>, vector<1x8x32xbf16>
    %5 = vector.shape_cast %4 : vector<1x8x32xbf16> to vector<8x32xbf16>
    %6 = vector.extract_strided_slice %1 {offsets = [0, 0], sizes = [8, 8], strides = [1, 1]} : vector<8x32xbf16> to vector<8x8xbf16>
    %7 = vector.extract_strided_slice %3 {offsets = [0, 0], sizes = [8, 8], strides = [1, 1]} : vector<8x32xbf16> to vector<8x8xbf16>
    %cst = arith.constant dense<0.000000e+00> : vector<8x8xf32>
    %8 = tpu.matmul %6, %7, %cst {dimension_numbers = #tpu.dot_dimension_numbers<[1], [1], [0], [0], [0, 0, 1, 0], [], []>} : vector<8x8xbf16>, vector<8x8xbf16>, vector<8x8xf32> -> vector<8x8xf32>
    %c0_8 = arith.constant 0 : index
    %c0_9 = arith.constant 0 : index
    %c0_10 = arith.constant 0 : index
    %c0_11 = arith.constant 0 : index
    %9 = vector.load %arg6[%c0_8, %c0_9, %c0_10, %c0_11] : memref<1x4x8x8xf32, #tpu.memory_space<vmem>>, vector<1x1x8x8xf32>
    %10 = vector.shape_cast %9 : vector<1x1x8x8xf32> to vector<8x8xf32>
    %11 = arith.addf %8, %10 : vector<8x8xf32>
    %c0_12 = arith.constant 0 : index
    %c0_13 = arith.constant 0 : index
    %c0_14 = arith.constant 0 : index
    %c0_15 = arith.constant 0 : index
    %12 = vector.load %arg7[%c0_12, %c0_13, %c0_14, %c0_15] : memref<1x4x8x8xf32, #tpu.memory_space<vmem>>, vector<1x1x8x8xf32>
    %13 = vector.shape_cast %12 : vector<1x1x8x8xf32> to vector<8x8xf32>
    %14 = vector.shape_cast %11 : vector<8x8xf32> to vector<1x1x8x8xf32>
    tpu.vector_store %arg7[%c0_12, %c0_13, %c0_14, %c0_15], %14 {strides = array<i32>} : memref<1x4x8x8xf32, #tpu.memory_space<vmem>>, vector<1x1x8x8xf32>,
    %cst_16 = arith.constant dense<0xFF800000> : vector<8xf32>
    %15 = vector.multi_reduction <maximumf>, %11, %cst_16 [1] : vector<8x8xf32> to vector<8xf32>
    %16 = vector.shape_cast %15 : vector<8xf32> to vector<8x1xf32>
    %cst_17 = arith.constant 0xFF800000 : f32
    %17 = vector.broadcast %cst_17 : f32 to vector<8x1xf32>
    %18 = arith.cmpf oeq, %16, %17 : vector<8x1xf32>
    %cst_18 = arith.constant 0.000000e+00 : f32
    %19 = vector.broadcast %cst_18 : f32 to vector<8x1xf32>
    %20 = arith.select %18, %19, %16 : vector<8x1xi1>, vector<8x1xf32>
    %21 = vector.broadcast %20 : vector<8x1xf32> to vector<8x8xf32>
    %22 = arith.subf %11, %21 : vector<8x8xf32>
    %23 = math.exp %22 : vector<8x8xf32>
    %cst_19 = arith.constant dense<0.000000e+00> : vector<8xf32>
    %24 = vector.multi_reduction <add>, %23, %cst_19 [1] : vector<8x8xf32> to vector<8xf32>
    %25 = vector.shape_cast %24 : vector<8xf32> to vector<8x1xf32>
    %cst_20 = arith.constant 0.000000e+00 : f32
    %26 = vector.broadcast %cst_20 : f32 to vector<8x1xf32>
    %27 = arith.cmpf ogt, %25, %26 : vector<8x1xf32>
    %cst_21 = arith.constant 1.000000e+00 : f32
    %28 = vector.broadcast %cst_21 : f32 to vector<8x1xf32>
    %29 = arith.select %27, %25, %28 : vector<8x1xi1>, vector<8x1xf32>
    %30 = tpu.reciprocal %29 {approx = true} : vector<8x1xf32> -> vector<8x1xf32>
    %31 = vector.broadcast %30 : vector<8x1xf32> to vector<8x8xf32>
    %32 = arith.mulf %23, %31 : vector<8x8xf32>
    %33 = arith.truncf %32 : vector<8x8xf32> to vector<8x8xbf16>
    %34 = vector.extract_strided_slice %5 {offsets = [0, 0], sizes = [8, 8], strides = [1, 1]} : vector<8x32xbf16> to vector<8x8xbf16>
    %cst_22 = arith.constant dense<0.000000e+00> : vector<8x8xf32>
    %35 = tpu.matmul %33, %34, %cst_22 {dimension_numbers = #tpu.dot_dimension_numbers<[1], [0], [0], [1], [0, 0, 1, 1], [], []>} : vector<8x8xbf16>, vector<8x8xbf16>, vector<8x8xf32> -> vector<8x8xf32>
    %36 = vector.extract_strided_slice %1 {offsets = [0, 8], sizes = [8, 8], strides = [1, 1]} : vector<8x32xbf16> to vector<8x8xbf16>
    %37 = vector.extract_strided_slice %3 {offsets = [0, 8], sizes = [8, 8], strides = [1, 1]} : vector<8x32xbf16> to vector<8x8xbf16>
    %cst_23 = arith.constant dense<0.000000e+00> : vector<8x8xf32>
    %38 = tpu.matmul %36, %37, %cst_23 {dimension_numbers = #tpu.dot_dimension_numbers<[1], [1], [0], [0], [0, 0, 1, 0], [], []>} : vector<8x8xbf16>, vector<8x8xbf16>, vector<8x8xf32> -> vector<8x8xf32>
    %c0_24 = arith.constant 0 : index
    %c1 = arith.constant 1 : index
    %c0_25 = arith.constant 0 : index
    %c0_26 = arith.constant 0 : index
    %39 = vector.load %arg6[%c0_24, %c1, %c0_25, %c0_26] : memref<1x4x8x8xf32, #tpu.memory_space<vmem>>, vector<1x1x8x8xf32>
    %40 = vector.shape_cast %39 : vector<1x1x8x8xf32> to vector<8x8xf32>
    %41 = arith.addf %38, %40 : vector<8x8xf32>
    %c0_27 = arith.constant 0 : index
    %c1_28 = arith.constant 1 : index
    %c0_29 = arith.constant 0 : index
    %c0_30 = arith.constant 0 : index
    %42 = vector.load %arg7[%c0_27, %c1_28, %c0_29, %c0_30] : memref<1x4x8x8xf32, #tpu.memory_space<vmem>>, vector<1x1x8x8xf32>
    %43 = vector.shape_cast %42 : vector<1x1x8x8xf32> to vector<8x8xf32>
    %44 = vector.shape_cast %41 : vector<8x8xf32> to vector<1x1x8x8xf32>
    tpu.vector_store %arg7[%c0_27, %c1_28, %c0_29, %c0_30], %44 {strides = array<i32>} : memref<1x4x8x8xf32, #tpu.memory_space<vmem>>, vector<1x1x8x8xf32>,
    %cst_31 = arith.constant dense<0xFF800000> : vector<8xf32>
    %45 = vector.multi_reduction <maximumf>, %41, %cst_31 [1] : vector<8x8xf32> to vector<8xf32>
    %46 = vector.shape_cast %45 : vector<8xf32> to vector<8x1xf32>
    %cst_32 = arith.constant 0xFF800000 : f32
    %47 = vector.broadcast %cst_32 : f32 to vector<8x1xf32>
    %48 = arith.cmpf oeq, %46, %47 : vector<8x1xf32>
    %cst_33 = arith.constant 0.000000e+00 : f32
    %49 = vector.broadcast %cst_33 : f32 to vector<8x1xf32>
    %50 = arith.select %48, %49, %46 : vector<8x1xi1>, vector<8x1xf32>
    %51 = vector.broadcast %50 : vector<8x1xf32> to vector<8x8xf32>
    %52 = arith.subf %41, %51 : vector<8x8xf32>
    %53 = math.exp %52 : vector<8x8xf32>
    %cst_34 = arith.constant dense<0.000000e+00> : vector<8xf32>
    %54 = vector.multi_reduction <add>, %53, %cst_34 [1] : vector<8x8xf32> to vector<8xf32>
    %55 = vector.shape_cast %54 : vector<8xf32> to vector<8x1xf32>
    %cst_35 = arith.constant 0.000000e+00 : f32
    %56 = vector.broadcast %cst_35 : f32 to vector<8x1xf32>
    %57 = arith.cmpf ogt, %55, %56 : vector<8x1xf32>
    %cst_36 = arith.constant 1.000000e+00 : f32
    %58 = vector.broadcast %cst_36 : f32 to vector<8x1xf32>
    %59 = arith.select %57, %55, %58 : vector<8x1xi1>, vector<8x1xf32>
    %60 = tpu.reciprocal %59 {approx = true} : vector<8x1xf32> -> vector<8x1xf32>
    %61 = vector.broadcast %60 : vector<8x1xf32> to vector<8x8xf32>
    %62 = arith.mulf %53, %61 : vector<8x8xf32>
    %63 = arith.truncf %62 : vector<8x8xf32> to vector<8x8xbf16>
    %64 = vector.extract_strided_slice %5 {offsets = [0, 8], sizes = [8, 8], strides = [1, 1]} : vector<8x32xbf16> to vector<8x8xbf16>
    %cst_37 = arith.constant dense<0.000000e+00> : vector<8x8xf32>
    %65 = tpu.matmul %63, %64, %cst_37 {dimension_numbers = #tpu.dot_dimension_numbers<[1], [0], [0], [1], [0, 0, 1, 1], [], []>} : vector<8x8xbf16>, vector<8x8xbf16>, vector<8x8xf32> -> vector<8x8xf32>
    %66 = vector.extract_strided_slice %1 {offsets = [0, 16], sizes = [8, 8], strides = [1, 1]} : vector<8x32xbf16> to vector<8x8xbf16>
    %67 = vector.extract_strided_slice %3 {offsets = [0, 16], sizes = [8, 8], strides = [1, 1]} : vector<8x32xbf16> to vector<8x8xbf16>
    %cst_38 = arith.constant dense<0.000000e+00> : vector<8x8xf32>
    %68 = tpu.matmul %66, %67, %cst_38 {dimension_numbers = #tpu.dot_dimension_numbers<[1], [1], [0], [0], [0, 0, 1, 0], [], []>} : vector<8x8xbf16>, vector<8x8xbf16>, vector<8x8xf32> -> vector<8x8xf32>
    %c0_39 = arith.constant 0 : index
    %c2 = arith.constant 2 : index
    %c0_40 = arith.constant 0 : index
    %c0_41 = arith.constant 0 : index
    %69 = vector.load %arg6[%c0_39, %c2, %c0_40, %c0_41] : memref<1x4x8x8xf32, #tpu.memory_space<vmem>>, vector<1x1x8x8xf32>
    %70 = vector.shape_cast %69 : vector<1x1x8x8xf32> to vector<8x8xf32>
    %71 = arith.addf %68, %70 : vector<8x8xf32>
    %c0_42 = arith.constant 0 : index
    %c2_43 = arith.constant 2 : index
    %c0_44 = arith.constant 0 : index
    %c0_45 = arith.constant 0 : index
    %72 = vector.load %arg7[%c0_42, %c2_43, %c0_44, %c0_45] : memref<1x4x8x8xf32, #tpu.memory_space<vmem>>, vector<1x1x8x8xf32>
    %73 = vector.shape_cast %72 : vector<1x1x8x8xf32> to vector<8x8xf32>
    %74 = vector.shape_cast %71 : vector<8x8xf32> to vector<1x1x8x8xf32>
    tpu.vector_store %arg7[%c0_42, %c2_43, %c0_44, %c0_45], %74 {strides = array<i32>} : memref<1x4x8x8xf32, #tpu.memory_space<vmem>>, vector<1x1x8x8xf32>,
    %cst_46 = arith.constant dense<0xFF800000> : vector<8xf32>
    %75 = vector.multi_reduction <maximumf>, %71, %cst_46 [1] : vector<8x8xf32> to vector<8xf32>
    %76 = vector.shape_cast %75 : vector<8xf32> to vector<8x1xf32>
    %cst_47 = arith.constant 0xFF800000 : f32
    %77 = vector.broadcast %cst_47 : f32 to vector<8x1xf32>
    %78 = arith.cmpf oeq, %76, %77 : vector<8x1xf32>
    %cst_48 = arith.constant 0.000000e+00 : f32
    %79 = vector.broadcast %cst_48 : f32 to vector<8x1xf32>
    %80 = arith.select %78, %79, %76 : vector<8x1xi1>, vector<8x1xf32>
    %81 = vector.broadcast %80 : vector<8x1xf32> to vector<8x8xf32>
    %82 = arith.subf %71, %81 : vector<8x8xf32>
    %83 = math.exp %82 : vector<8x8xf32>
    %cst_49 = arith.constant dense<0.000000e+00> : vector<8xf32>
    %84 = vector.multi_reduction <add>, %83, %cst_49 [1] : vector<8x8xf32> to vector<8xf32>
    %85 = vector.shape_cast %84 : vector<8xf32> to vector<8x1xf32>
    %cst_50 = arith.constant 0.000000e+00 : f32
    %86 = vector.broadcast %cst_50 : f32 to vector<8x1xf32>
    %87 = arith.cmpf ogt, %85, %86 : vector<8x1xf32>
    %cst_51 = arith.constant 1.000000e+00 : f32
    %88 = vector.broadcast %cst_51 : f32 to vector<8x1xf32>
    %89 = arith.select %87, %85, %88 : vector<8x1xi1>, vector<8x1xf32>
    %90 = tpu.reciprocal %89 {approx = true} : vector<8x1xf32> -> vector<8x1xf32>
    %91 = vector.broadcast %90 : vector<8x1xf32> to vector<8x8xf32>
    %92 = arith.mulf %83, %91 : vector<8x8xf32>
    %93 = arith.truncf %92 : vector<8x8xf32> to vector<8x8xbf16>
    %94 = vector.extract_strided_slice %5 {offsets = [0, 16], sizes = [8, 8], strides = [1, 1]} : vector<8x32xbf16> to vector<8x8xbf16>
    %cst_52 = arith.constant dense<0.000000e+00> : vector<8x8xf32>
    %95 = tpu.matmul %93, %94, %cst_52 {dimension_numbers = #tpu.dot_dimension_numbers<[1], [0], [0], [1], [0, 0, 1, 1], [], []>} : vector<8x8xbf16>, vector<8x8xbf16>, vector<8x8xf32> -> vector<8x8xf32>
    %96 = vector.extract_strided_slice %1 {offsets = [0, 24], sizes = [8, 8], strides = [1, 1]} : vector<8x32xbf16> to vector<8x8xbf16>
    %97 = vector.extract_strided_slice %3 {offsets = [0, 24], sizes = [8, 8], strides = [1, 1]} : vector<8x32xbf16> to vector<8x8xbf16>
    %cst_53 = arith.constant dense<0.000000e+00> : vector<8x8xf32>
    %98 = tpu.matmul %96, %97, %cst_53 {dimension_numbers = #tpu.dot_dimension_numbers<[1], [1], [0], [0], [0, 0, 1, 0], [], []>} : vector<8x8xbf16>, vector<8x8xbf16>, vector<8x8xf32> -> vector<8x8xf32>
    %c0_54 = arith.constant 0 : index
    %c3 = arith.constant 3 : index
    %c0_55 = arith.constant 0 : index
    %c0_56 = arith.constant 0 : index
    %99 = vector.load %arg6[%c0_54, %c3, %c0_55, %c0_56] : memref<1x4x8x8xf32, #tpu.memory_space<vmem>>, vector<1x1x8x8xf32>
    %100 = vector.shape_cast %99 : vector<1x1x8x8xf32> to vector<8x8xf32>
    %101 = arith.addf %98, %100 : vector<8x8xf32>
    %c0_57 = arith.constant 0 : index
    %c3_58 = arith.constant 3 : index
    %c0_59 = arith.constant 0 : index
    %c0_60 = arith.constant 0 : index
    %102 = vector.load %arg7[%c0_57, %c3_58, %c0_59, %c0_60] : memref<1x4x8x8xf32, #tpu.memory_space<vmem>>, vector<1x1x8x8xf32>
    %103 = vector.shape_cast %102 : vector<1x1x8x8xf32> to vector<8x8xf32>
    %104 = vector.shape_cast %101 : vector<8x8xf32> to vector<1x1x8x8xf32>
    tpu.vector_store %arg7[%c0_57, %c3_58, %c0_59, %c0_60], %104 {strides = array<i32>} : memref<1x4x8x8xf32, #tpu.memory_space<vmem>>, vector<1x1x8x8xf32>,
    %cst_61 = arith.constant dense<0xFF800000> : vector<8xf32>
    %105 = vector.multi_reduction <maximumf>, %101, %cst_61 [1] : vector<8x8xf32> to vector<8xf32>
    %106 = vector.shape_cast %105 : vector<8xf32> to vector<8x1xf32>
    %cst_62 = arith.constant 0xFF800000 : f32
    %107 = vector.broadcast %cst_62 : f32 to vector<8x1xf32>
    %108 = arith.cmpf oeq, %106, %107 : vector<8x1xf32>
    %cst_63 = arith.constant 0.000000e+00 : f32
    %109 = vector.broadcast %cst_63 : f32 to vector<8x1xf32>
    %110 = arith.select %108, %109, %106 : vector<8x1xi1>, vector<8x1xf32>
    %111 = vector.broadcast %110 : vector<8x1xf32> to vector<8x8xf32>
    %112 = arith.subf %101, %111 : vector<8x8xf32>
    %113 = math.exp %112 : vector<8x8xf32>
    %cst_64 = arith.constant dense<0.000000e+00> : vector<8xf32>
    %114 = vector.multi_reduction <add>, %113, %cst_64 [1] : vector<8x8xf32> to vector<8xf32>
    %115 = vector.shape_cast %114 : vector<8xf32> to vector<8x1xf32>
    %cst_65 = arith.constant 0.000000e+00 : f32
    %116 = vector.broadcast %cst_65 : f32 to vector<8x1xf32>
    %117 = arith.cmpf ogt, %115, %116 : vector<8x1xf32>
    %cst_66 = arith.constant 1.000000e+00 : f32
    %118 = vector.broadcast %cst_66 : f32 to vector<8x1xf32>
    %119 = arith.select %117, %115, %118 : vector<8x1xi1>, vector<8x1xf32>
    %120 = tpu.reciprocal %119 {approx = true} : vector<8x1xf32> -> vector<8x1xf32>
    %121 = vector.broadcast %120 : vector<8x1xf32> to vector<8x8xf32>
    %122 = arith.mulf %113, %121 : vector<8x8xf32>
    %123 = arith.truncf %122 : vector<8x8xf32> to vector<8x8xbf16>
    %124 = vector.extract_strided_slice %5 {offsets = [0, 24], sizes = [8, 8], strides = [1, 1]} : vector<8x32xbf16> to vector<8x8xbf16>
    %cst_67 = arith.constant dense<0.000000e+00> : vector<8x8xf32>
    %125 = tpu.matmul %123, %124, %cst_67 {dimension_numbers = #tpu.dot_dimension_numbers<[1], [0], [0], [1], [0, 0, 1, 1], [], []>} : vector<8x8xbf16>, vector<8x8xbf16>, vector<8x8xf32> -> vector<8x8xf32>
    %126 = tpu.concatenate %35, %65, %95, %125 in 1 : vector<8x8xf32>, vector<8x8xf32>, vector<8x8xf32>, vector<8x8xf32> -> vector<8x32xf32>
    %127 = arith.truncf %126 : vector<8x32xf32> to vector<8x32xbf16>
    %c0_68 = arith.constant 0 : index
    %c0_69 = arith.constant 0 : index
    %c0_70 = arith.constant 0 : index
    %128 = vector.load %arg8[%c0_68, %c0_69, %c0_70] : memref<1x8x32xbf16, #tpu.memory_space<vmem>>, vector<1x8x32xbf16>
    %129 = vector.shape_cast %128 : vector<1x8x32xbf16> to vector<8x32xbf16>
    %130 = vector.shape_cast %127 : vector<8x32xbf16> to vector<1x8x32xbf16>
    tpu.vector_store %arg8[%c0_68, %c0_69, %c0_70], %130 {strides = array<i32>} : memref<1x8x32xbf16, #tpu.memory_space<vmem>>, vector<1x8x32xbf16>,
    return
  }
  func.func @transform_0(%arg0: i32, %arg1: i32, %arg2: i32) -> (i32, i32, i32) {
    %c0_i32 = arith.constant 0 : i32
    return %arg0, %arg2, %arg1 : i32, i32, i32
  }
  func.func @transform_1(%arg0: i32, %arg1: i32, %arg2: i32) -> (i32, i32, i32) {
    %c0_i32 = arith.constant 0 : i32
    %c0_i32_0 = arith.constant 0 : i32
    return %arg0, %c0_i32, %arg1 : i32, i32, i32
  }
  func.func @transform_2(%arg0: i32, %arg1: i32, %arg2: i32) -> (i32, i32, i32) {
    %c0_i32 = arith.constant 0 : i32
    %c0_i32_0 = arith.constant 0 : i32
    return %arg0, %c0_i32, %arg1 : i32, i32, i32
  }
  func.func @transform_3(%arg0: i32, %arg1: i32, %arg2: i32) -> (i32, i32, i32, i32) {
    %c0_i32 = arith.constant 0 : i32
    %c0_i32_0 = arith.constant 0 : i32
    return %arg0, %arg1, %arg2, %c0_i32 : i32, i32, i32, i32
  }
  func.func @transform_4(%arg0: i32, %arg1: i32, %arg2: i32) -> (i32, i32, i32, i32) {
    %c0_i32 = arith.constant 0 : i32
    %c0_i32_0 = arith.constant 0 : i32
    return %arg0, %arg1, %arg2, %c0_i32 : i32, i32, i32, i32
  }
  func.func @transform_5(%arg0: i32, %arg1: i32, %arg2: i32) -> (i32, i32, i32) {
    %c0_i32 = arith.constant 0 : i32
    return %arg0, %arg2, %arg1 : i32, i32, i32
  }
}

module attributes {stable_mosaic.version = 11 : i64} {
  func.func @_outproj_ffn_kernel(%arg0: i32, %arg1: memref<8x32xbf16, #tpu.memory_space<vmem>>, %arg2: memref<8x32xf32, #tpu.memory_space<vmem>>, %arg3: memref<32x32xbf16, #tpu.memory_space<vmem>>, %arg4: memref<1x32xf32, #tpu.memory_space<vmem>>, %arg5: memref<1x32xf32, #tpu.memory_space<vmem>>, %arg6: memref<1x32xf32, #tpu.memory_space<vmem>>, %arg7: memref<32x64xbf16, #tpu.memory_space<vmem>>, %arg8: memref<1x64xf32, #tpu.memory_space<vmem>>, %arg9: memref<64x32xbf16, #tpu.memory_space<vmem>>, %arg10: memref<1x32xf32, #tpu.memory_space<vmem>>, %arg11: memref<1x32xf32, #tpu.memory_space<vmem>>, %arg12: memref<1x32xf32, #tpu.memory_space<vmem>>, %arg13: memref<8x32xf32, #tpu.memory_space<vmem>>) attributes {dimension_semantics = [#tpu.dimension_semantics<parallel>], iteration_bounds = array<i64: 2>, scalar_prefetch = 0 : i64, scratch_operands = 0 : i64, tpu.core_type = #tpu.core_type<tc>, window_params = [{transform_indices = @transform_0, window_bounds = array<i64: 8, 32>}, {transform_indices = @transform_1, window_bounds = array<i64: 8, 32>}, {pipeline_mode = #tpu.pipeline_mode<synchronous>, transform_indices = @transform_2, window_bounds = array<i64: 32, 32>}, {pipeline_mode = #tpu.pipeline_mode<synchronous>, transform_indices = @transform_3, window_bounds = array<i64: 1, 32>}, {pipeline_mode = #tpu.pipeline_mode<synchronous>, transform_indices = @transform_4, window_bounds = array<i64: 1, 32>}, {pipeline_mode = #tpu.pipeline_mode<synchronous>, transform_indices = @transform_5, window_bounds = array<i64: 1, 32>}, {pipeline_mode = #tpu.pipeline_mode<synchronous>, transform_indices = @transform_6, window_bounds = array<i64: 32, 64>}, {pipeline_mode = #tpu.pipeline_mode<synchronous>, transform_indices = @transform_7, window_bounds = array<i64: 1, 64>}, {pipeline_mode = #tpu.pipeline_mode<synchronous>, transform_indices = @transform_8, window_bounds = array<i64: 64, 32>}, {pipeline_mode = #tpu.pipeline_mode<synchronous>, transform_indices = @transform_9, window_bounds = array<i64: 1, 32>}, {pipeline_mode = #tpu.pipeline_mode<synchronous>, transform_indices = @transform_10, window_bounds = array<i64: 1, 32>}, {pipeline_mode = #tpu.pipeline_mode<synchronous>, transform_indices = @transform_11, window_bounds = array<i64: 1, 32>}, {transform_indices = @transform_12, window_bounds = array<i64: 8, 32>}]} {
    %c0 = arith.constant 0 : index
    %c0_0 = arith.constant 0 : index
    %0 = vector.load %arg1[%c0, %c0_0] : memref<8x32xbf16, #tpu.memory_space<vmem>>, vector<8x32xbf16>
    %c0_1 = arith.constant 0 : index
    %c0_2 = arith.constant 0 : index
    %1 = vector.load %arg3[%c0_1, %c0_2] : memref<32x32xbf16, #tpu.memory_space<vmem>>, vector<32x32xbf16>
    %cst = arith.constant dense<0.000000e+00> : vector<8x32xf32>
    %2 = tpu.matmul %0, %1, %cst {dimension_numbers = #tpu.dot_dimension_numbers<[1], [0], [0], [1], [0, 0, 1, 1], [], []>} : vector<8x32xbf16>, vector<32x32xbf16>, vector<8x32xf32> -> vector<8x32xf32>
    %c0_3 = arith.constant 0 : index
    %c0_4 = arith.constant 0 : index
    %3 = vector.load %arg4[%c0_3, %c0_4] : memref<1x32xf32, #tpu.memory_space<vmem>>, vector<1x32xf32>
    %4 = vector.broadcast %3 : vector<1x32xf32> to vector<8x32xf32>
    %5 = arith.addf %2, %4 : vector<8x32xf32>
    %c0_5 = arith.constant 0 : index
    %c0_6 = arith.constant 0 : index
    %6 = vector.load %arg2[%c0_5, %c0_6] : memref<8x32xf32, #tpu.memory_space<vmem>>, vector<8x32xf32>
    %7 = arith.addf %6, %5 : vector<8x32xf32>
    %c0_7 = arith.constant 0 : index
    %c0_8 = arith.constant 0 : index
    %8 = vector.load %arg5[%c0_7, %c0_8] : memref<1x32xf32, #tpu.memory_space<vmem>>, vector<1x32xf32>
    %c0_9 = arith.constant 0 : index
    %c0_10 = arith.constant 0 : index
    %9 = vector.load %arg6[%c0_9, %c0_10] : memref<1x32xf32, #tpu.memory_space<vmem>>, vector<1x32xf32>
    %cst_11 = arith.constant dense<0.000000e+00> : vector<8xf32>
    %10 = vector.multi_reduction <add>, %7, %cst_11 [1] : vector<8x32xf32> to vector<8xf32>
    %11 = vector.shape_cast %10 : vector<8xf32> to vector<8x1xf32>
    %cst_12 = arith.constant 3.200000e+01 : f32
    %12 = vector.broadcast %cst_12 : f32 to vector<8x1xf32>
    %13 = arith.divf %11, %12 : vector<8x1xf32>
    %14 = vector.broadcast %13 : vector<8x1xf32> to vector<8x32xf32>
    %15 = arith.subf %7, %14 : vector<8x32xf32>
    %16 = arith.mulf %15, %15 : vector<8x32xf32>
    %cst_13 = arith.constant dense<0.000000e+00> : vector<8xf32>
    %17 = vector.multi_reduction <add>, %16, %cst_13 [1] : vector<8x32xf32> to vector<8xf32>
    %18 = vector.shape_cast %17 : vector<8xf32> to vector<8x1xf32>
    %cst_14 = arith.constant 3.200000e+01 : f32
    %19 = vector.broadcast %cst_14 : f32 to vector<8x1xf32>
    %20 = arith.divf %18, %19 : vector<8x1xf32>
    %21 = vector.broadcast %13 : vector<8x1xf32> to vector<8x32xf32>
    %22 = arith.subf %7, %21 : vector<8x32xf32>
    %cst_15 = arith.constant 9.99999974E-6 : f32
    %23 = vector.broadcast %cst_15 : f32 to vector<8x1xf32>
    %24 = arith.addf %20, %23 : vector<8x1xf32>
    %25 = math.rsqrt %24 : vector<8x1xf32>
    %26 = vector.broadcast %25 : vector<8x1xf32> to vector<8x32xf32>
    %27 = arith.mulf %22, %26 : vector<8x32xf32>
    %28 = vector.broadcast %8 : vector<1x32xf32> to vector<8x32xf32>
    %29 = arith.mulf %27, %28 : vector<8x32xf32>
    %30 = vector.broadcast %9 : vector<1x32xf32> to vector<8x32xf32>
    %31 = arith.addf %29, %30 : vector<8x32xf32>
    %32 = arith.truncf %31 : vector<8x32xf32> to vector<8x32xbf16>
    %c0_16 = arith.constant 0 : index
    %c0_17 = arith.constant 0 : index
    %33 = vector.load %arg7[%c0_16, %c0_17] : memref<32x64xbf16, #tpu.memory_space<vmem>>, vector<32x64xbf16>
    %cst_18 = arith.constant dense<0.000000e+00> : vector<8x64xf32>
    %34 = tpu.matmul %32, %33, %cst_18 {dimension_numbers = #tpu.dot_dimension_numbers<[1], [0], [0], [1], [0, 0, 1, 1], [], []>} : vector<8x32xbf16>, vector<32x64xbf16>, vector<8x64xf32> -> vector<8x64xf32>
    %c0_19 = arith.constant 0 : index
    %c0_20 = arith.constant 0 : index
    %35 = vector.load %arg8[%c0_19, %c0_20] : memref<1x64xf32, #tpu.memory_space<vmem>>, vector<1x64xf32>
    %36 = vector.broadcast %35 : vector<1x64xf32> to vector<8x64xf32>
    %37 = arith.addf %34, %36 : vector<8x64xf32>
    %cst_21 = arith.constant 5.000000e-01 : f32
    %38 = vector.broadcast %cst_21 : f32 to vector<8x64xf32>
    %39 = arith.mulf %38, %37 : vector<8x64xf32>
    %cst_22 = arith.constant 0.707106769 : f32
    %40 = vector.broadcast %cst_22 : f32 to vector<8x64xf32>
    %41 = arith.mulf %37, %40 : vector<8x64xf32>
    %42 = math.absf %41 : vector<8x64xf32>
    %cst_23 = arith.constant 0.327591091 : f32
    %43 = vector.broadcast %cst_23 : f32 to vector<8x64xf32>
    %44 = arith.mulf %43, %42 : vector<8x64xf32>
    %cst_24 = arith.constant 1.000000e+00 : f32
    %45 = vector.broadcast %cst_24 : f32 to vector<8x64xf32>
    %46 = arith.addf %45, %44 : vector<8x64xf32>
    %cst_25 = arith.constant 1.000000e+00 : f32
    %47 = vector.broadcast %cst_25 : f32 to vector<8x64xf32>
    %48 = arith.divf %47, %46 : vector<8x64xf32>
    %cst_26 = arith.constant 1.06140542 : f32
    %49 = vector.broadcast %cst_26 : f32 to vector<8x64xf32>
    %50 = arith.mulf %49, %48 : vector<8x64xf32>
    %cst_27 = arith.constant -1.45315206 : f32
    %51 = vector.broadcast %cst_27 : f32 to vector<8x64xf32>
    %52 = arith.addf %50, %51 : vector<8x64xf32>
    %53 = arith.mulf %52, %48 : vector<8x64xf32>
    %cst_28 = arith.constant 1.42141378 : f32
    %54 = vector.broadcast %cst_28 : f32 to vector<8x64xf32>
    %55 = arith.addf %53, %54 : vector<8x64xf32>
    %56 = arith.mulf %55, %48 : vector<8x64xf32>
    %cst_29 = arith.constant -0.284496725 : f32
    %57 = vector.broadcast %cst_29 : f32 to vector<8x64xf32>
    %58 = arith.addf %56, %57 : vector<8x64xf32>
    %59 = arith.mulf %58, %48 : vector<8x64xf32>
    %cst_30 = arith.constant 0.254829586 : f32
    %60 = vector.broadcast %cst_30 : f32 to vector<8x64xf32>
    %61 = arith.addf %59, %60 : vector<8x64xf32>
    %62 = arith.mulf %61, %48 : vector<8x64xf32>
    %cst_31 = arith.constant 0.000000e+00 : f32
    %63 = vector.broadcast %cst_31 : f32 to vector<8x64xf32>
    %64 = arith.subf %63, %42 : vector<8x64xf32>
    %65 = arith.mulf %64, %42 : vector<8x64xf32>
    %66 = math.exp %65 : vector<8x64xf32>
    %67 = arith.mulf %62, %66 : vector<8x64xf32>
    %cst_32 = arith.constant 1.000000e+00 : f32
    %68 = vector.broadcast %cst_32 : f32 to vector<8x64xf32>
    %69 = arith.subf %68, %67 : vector<8x64xf32>
    %cst_33 = arith.constant 0.000000e+00 : f32
    %70 = vector.broadcast %cst_33 : f32 to vector<8x64xf32>
    %71 = arith.cmpf oge, %41, %70 : vector<8x64xf32>
    %cst_34 = arith.constant 0.000000e+00 : f32
    %72 = vector.broadcast %cst_34 : f32 to vector<8x64xf32>
    %73 = arith.subf %72, %69 : vector<8x64xf32>
    %74 = arith.select %71, %69, %73 : vector<8x64xi1>, vector<8x64xf32>
    %cst_35 = arith.constant 1.000000e+00 : f32
    %75 = vector.broadcast %cst_35 : f32 to vector<8x64xf32>
    %76 = arith.addf %75, %74 : vector<8x64xf32>
    %77 = arith.mulf %39, %76 : vector<8x64xf32>
    %78 = arith.truncf %77 : vector<8x64xf32> to vector<8x64xbf16>
    %c0_36 = arith.constant 0 : index
    %c0_37 = arith.constant 0 : index
    %79 = vector.load %arg9[%c0_36, %c0_37] : memref<64x32xbf16, #tpu.memory_space<vmem>>, vector<64x32xbf16>
    %cst_38 = arith.constant dense<0.000000e+00> : vector<8x32xf32>
    %80 = tpu.matmul %78, %79, %cst_38 {dimension_numbers = #tpu.dot_dimension_numbers<[1], [0], [0], [1], [0, 0, 1, 1], [], []>} : vector<8x64xbf16>, vector<64x32xbf16>, vector<8x32xf32> -> vector<8x32xf32>
    %c0_39 = arith.constant 0 : index
    %c0_40 = arith.constant 0 : index
    %81 = vector.load %arg10[%c0_39, %c0_40] : memref<1x32xf32, #tpu.memory_space<vmem>>, vector<1x32xf32>
    %82 = vector.broadcast %81 : vector<1x32xf32> to vector<8x32xf32>
    %83 = arith.addf %80, %82 : vector<8x32xf32>
    %84 = arith.addf %7, %83 : vector<8x32xf32>
    %c0_41 = arith.constant 0 : index
    %c0_42 = arith.constant 0 : index
    %85 = vector.load %arg11[%c0_41, %c0_42] : memref<1x32xf32, #tpu.memory_space<vmem>>, vector<1x32xf32>
    %c0_43 = arith.constant 0 : index
    %c0_44 = arith.constant 0 : index
    %86 = vector.load %arg12[%c0_43, %c0_44] : memref<1x32xf32, #tpu.memory_space<vmem>>, vector<1x32xf32>
    %cst_45 = arith.constant dense<0.000000e+00> : vector<8xf32>
    %87 = vector.multi_reduction <add>, %84, %cst_45 [1] : vector<8x32xf32> to vector<8xf32>
    %88 = vector.shape_cast %87 : vector<8xf32> to vector<8x1xf32>
    %cst_46 = arith.constant 3.200000e+01 : f32
    %89 = vector.broadcast %cst_46 : f32 to vector<8x1xf32>
    %90 = arith.divf %88, %89 : vector<8x1xf32>
    %91 = vector.broadcast %90 : vector<8x1xf32> to vector<8x32xf32>
    %92 = arith.subf %84, %91 : vector<8x32xf32>
    %93 = arith.mulf %92, %92 : vector<8x32xf32>
    %cst_47 = arith.constant dense<0.000000e+00> : vector<8xf32>
    %94 = vector.multi_reduction <add>, %93, %cst_47 [1] : vector<8x32xf32> to vector<8xf32>
    %95 = vector.shape_cast %94 : vector<8xf32> to vector<8x1xf32>
    %cst_48 = arith.constant 3.200000e+01 : f32
    %96 = vector.broadcast %cst_48 : f32 to vector<8x1xf32>
    %97 = arith.divf %95, %96 : vector<8x1xf32>
    %98 = vector.broadcast %90 : vector<8x1xf32> to vector<8x32xf32>
    %99 = arith.subf %84, %98 : vector<8x32xf32>
    %cst_49 = arith.constant 9.99999974E-6 : f32
    %100 = vector.broadcast %cst_49 : f32 to vector<8x1xf32>
    %101 = arith.addf %97, %100 : vector<8x1xf32>
    %102 = math.rsqrt %101 : vector<8x1xf32>
    %103 = vector.broadcast %102 : vector<8x1xf32> to vector<8x32xf32>
    %104 = arith.mulf %99, %103 : vector<8x32xf32>
    %105 = vector.broadcast %85 : vector<1x32xf32> to vector<8x32xf32>
    %106 = arith.mulf %104, %105 : vector<8x32xf32>
    %107 = vector.broadcast %86 : vector<1x32xf32> to vector<8x32xf32>
    %108 = arith.addf %106, %107 : vector<8x32xf32>
    %c0_50 = arith.constant 0 : index
    %c0_51 = arith.constant 0 : index
    %109 = vector.load %arg13[%c0_50, %c0_51] : memref<8x32xf32, #tpu.memory_space<vmem>>, vector<8x32xf32>
    tpu.vector_store %arg13[%c0_50, %c0_51], %108 {strides = array<i32>} : memref<8x32xf32, #tpu.memory_space<vmem>>, vector<8x32xf32>,
    return
  }
  func.func @transform_0(%arg0: i32) -> (i32, i32) {
    %c0_i32 = arith.constant 0 : i32
    %c0_i32_0 = arith.constant 0 : i32
    return %arg0, %c0_i32 : i32, i32
  }
  func.func @transform_1(%arg0: i32) -> (i32, i32) {
    %c0_i32 = arith.constant 0 : i32
    %c0_i32_0 = arith.constant 0 : i32
    return %arg0, %c0_i32 : i32, i32
  }
  func.func @transform_2(%arg0: i32) -> (i32, i32) {
    %c0_i32 = arith.constant 0 : i32
    %c0_i32_0 = arith.constant 0 : i32
    %c0_i32_1 = arith.constant 0 : i32
    return %c0_i32, %c0_i32_0 : i32, i32
  }
  func.func @transform_3(%arg0: i32) -> (i32, i32) {
    %c0_i32 = arith.constant 0 : i32
    %c0_i32_0 = arith.constant 0 : i32
    %c0_i32_1 = arith.constant 0 : i32
    return %c0_i32, %c0_i32_0 : i32, i32
  }
  func.func @transform_4(%arg0: i32) -> (i32, i32) {
    %c0_i32 = arith.constant 0 : i32
    %c0_i32_0 = arith.constant 0 : i32
    %c0_i32_1 = arith.constant 0 : i32
    return %c0_i32, %c0_i32_0 : i32, i32
  }
  func.func @transform_5(%arg0: i32) -> (i32, i32) {
    %c0_i32 = arith.constant 0 : i32
    %c0_i32_0 = arith.constant 0 : i32
    %c0_i32_1 = arith.constant 0 : i32
    return %c0_i32, %c0_i32_0 : i32, i32
  }
  func.func @transform_6(%arg0: i32) -> (i32, i32) {
    %c0_i32 = arith.constant 0 : i32
    %c0_i32_0 = arith.constant 0 : i32
    %c0_i32_1 = arith.constant 0 : i32
    return %c0_i32, %c0_i32_0 : i32, i32
  }
  func.func @transform_7(%arg0: i32) -> (i32, i32) {
    %c0_i32 = arith.constant 0 : i32
    %c0_i32_0 = arith.constant 0 : i32
    %c0_i32_1 = arith.constant 0 : i32
    return %c0_i32, %c0_i32_0 : i32, i32
  }
  func.func @transform_8(%arg0: i32) -> (i32, i32) {
    %c0_i32 = arith.constant 0 : i32
    %c0_i32_0 = arith.constant 0 : i32
    %c0_i32_1 = arith.constant 0 : i32
    return %c0_i32, %c0_i32_0 : i32, i32
  }
  func.func @transform_9(%arg0: i32) -> (i32, i32) {
    %c0_i32 = arith.constant 0 : i32
    %c0_i32_0 = arith.constant 0 : i32
    %c0_i32_1 = arith.constant 0 : i32
    return %c0_i32, %c0_i32_0 : i32, i32
  }
  func.func @transform_10(%arg0: i32) -> (i32, i32) {
    %c0_i32 = arith.constant 0 : i32
    %c0_i32_0 = arith.constant 0 : i32
    %c0_i32_1 = arith.constant 0 : i32
    return %c0_i32, %c0_i32_0 : i32, i32
  }
  func.func @transform_11(%arg0: i32) -> (i32, i32) {
    %c0_i32 = arith.constant 0 : i32
    %c0_i32_0 = arith.constant 0 : i32
    %c0_i32_1 = arith.constant 0 : i32
    return %c0_i32, %c0_i32_0 : i32, i32
  }
  func.func @transform_12(%arg0: i32) -> (i32, i32) {
    %c0_i32 = arith.constant 0 : i32
    %c0_i32_0 = arith.constant 0 : i32
    return %arg0, %c0_i32 : i32, i32
  }
}

</mosaic_0001>

<llo_original>
// kernel: tpu_custom_call.1
$region0: #{tpu_custom_call.1}
  #allocation0 [shape = 'u32[]', space=smem, size = 0x4, offset = 0x4, fixed_abs, tag = 'smem constant byte address 0x4 - core index']
  #allocation1 [shape = 'u32[144,128]{1,0:T(1,128)}', space=vmem, size = 0x12000, scoped, tag = 'internal scratch']
  %s0 = inlined_call_operand.hbm [shape: f32[8,128], index: 0, kind: input, shape index: {}]
  %s1 = inlined_call_operand.hbm [shape: f32[16,128], index: 1, kind: output, shape index: {}]
  %s2 = sld [smem:[#allocation0]]
  $region41: #{tpu_custom_call.1} parent=0
    _
  %s4 = ssub.s32 1, %s2
  %s5 = scalar_select 0, %s4, %s2
  $region1: #{tpu_custom_call.1} parent=0
    #allocation2 [shape = 'u8[4096]{0}', space=vmem, size = 0x1000, scoped, tag = 'input window, operand 0, single buffered']
    #allocation3 [shape = 's32[2]{0}', space=sflag, size = 0x8, scoped, tag = 'scoped memory for tpu_custom_call.1']
    #allocation4 [shape = 's32[2]{0}', space=sflag, size = 0x8, scoped, tag = 'scoped memory for tpu_custom_call.1']
    #allocation5 [shape = 'u8[8192]{0}', space=vmem, size = 0x2000, scoped, tag = 'output window, operand 0']
    %6 = vsyncpa [#allocation3], 0
    %7 = vsyncpa [#allocation4], 0
    %s8 = scalar_lea.sflag [#allocation4], 1
    %9 = vsyncpa %s8, 0
    loop: start=0, step=1, limit=4
    $region2: #{tpu_custom_call.1} parent=1 // loop_pre_header
      _
    $region3: #{tpu_custom_call.1} parent=1 // loop_header
      %s11 = sphi 0, %s15
      %p12 = scmp.ge.s32.totalorder %s11, 4
      %s19 = sphi 0, %s19
      %s21 = sphi 0, %s19
      %s22 = sphi 0, %s21
      %s36 = sphi 0, %s22
      %s42 = sphi 0, %s44
      %s45 = sphi 0, %s42
      %s46 = sphi 0, %s45
      %s62 = sphi 0, %s46
    $region4: #{tpu_custom_call.1} parent=1 // loop_header_branch
      %14 = sbr.rel (%p12) target = $region8
    $region5: #{tpu_custom_call.1} parent=1 // loop_body
      %s16 = ssub.s32 %s11, 1
      %s17 = ssub.s32 %s11, 2
      %s18 = sadd.s32 %s11, 1
      %s20 = sadd.s32 %s19, 1
      %p23 = scmp.eq.s32.totalorder %s11, 1
      %p24 = scmp.ne.s32.totalorder %s19, %s21
      %p25 = scmp.eq.s32.totalorder %s11, 0
      %p26 = por %p24, %p25
      %p27 = scmp.ne.s32.totalorder %s19, %s21
      %p28 = scmp.eq.s32.totalorder %s16, 1
      %p29 = por %p27, %p28
      %p30 = scmp.ne.s32.totalorder %s21, %s22
      %p31 = scmp.eq.s32.totalorder %s16, 0
      %p32 = por %p30, %p31
      %p33 = scmp.ne.s32.totalorder %s21, %s22
      %p34 = scmp.eq.s32.totalorder %s17, 1
      %p35 = por %p33, %p34
      %p37 = scmp.ne.s32.totalorder %s22, %s36
      %p38 = scmp.eq.s32.totalorder %s17, 0
      %p39 = por %p37, %p38
      %s40 = ssub.s32 %s11, %s18
      %p41 = scmp.eq.s32.totalorder %s40, 0
      %s43 = sadd.s32 %s42, 1
      %s44 = scalar_select %p41, %s42, %s43
      %p47 = pneg %p41
      %p48 = scmp.eq.s32.totalorder %s11, 1
      %p49 = por %p47, %p48
      %p50 = scmp.ne.s32.totalorder %s42, %s45
      %p51 = scmp.eq.s32.totalorder %s11, 0
      %p52 = por %p50, %p51
      %p53 = scmp.ne.s32.totalorder %s42, %s45
      %p54 = scmp.eq.s32.totalorder %s16, 1
      %p55 = por %p53, %p54
      %p56 = scmp.ne.s32.totalorder %s45, %s46
      %p57 = scmp.eq.s32.totalorder %s16, 0
      %p58 = por %p56, %p57
      %p59 = scmp.ne.s32.totalorder %s45, %s46
      %p60 = scmp.eq.s32.totalorder %s17, 1
      %p61 = por %p59, %p60
      %p63 = scmp.ne.s32.totalorder %s46, %s62
      %p64 = scmp.eq.s32.totalorder %s17, 0
      %p65 = por %p63, %p64
      %p66 = scmp.le.s32.totalorder 1, %s11
      %p67 = scmp.lt.s32.totalorder %s11, 3
      %p68 = pnand %p66, %p67
      %p69 = pneg %p68
      // Predicated region
      $region9: #{tpu_custom_call.1} parent=5 // pred_check
        _
      $region10: #{tpu_custom_call.1} parent=5 // pred_check_branch
        %71 = sbr.rel (%p68) target = $region12
      $region11: #{tpu_custom_call.1} parent=5 // pred_region
        %s72 = ssub.s32 %s11, 1
        // Predicated region
        $region13: #{tpu_custom_call.1} parent=11 // pred_check
          %p73 = pneg %p32
        $region14: #{tpu_custom_call.1} parent=11 // pred_check_branch
          %75 = sbr.rel (%p73) target = $region16
        $region15: #{tpu_custom_call.1} parent=11 // pred_region
          %s77 = ssub.s32 128, 128
          %78 = vsyncadd [#allocation3], %s77
          %s80 = sshll.u32 [#allocation2], 4
          %s81 = int_to_ptr.vmem [resolvable:$true] %s80
          %83 = dma.hbm_to_vmem [thread:$0]  %s0, 128, %s81, [#allocation3]
        $region16: #{tpu_custom_call.1} parent=11 // pred_fallthru
          _
      $region12: #{tpu_custom_call.1} parent=5 // pred_fallthru
        _
      %p84 = scmp.lt.s32.totalorder %s11, 2
      // Predicated region
      $region17: #{tpu_custom_call.1} parent=5 // pred_check
        %p85 = pneg %p84
      $region18: #{tpu_custom_call.1} parent=5 // pred_check_branch
        %87 = sbr.rel (%p85) target = $region20
      $region19: #{tpu_custom_call.1} parent=5 // pred_region
        _
      $region20: #{tpu_custom_call.1} parent=5 // pred_fallthru
        _
      %p88 = scmp.le.s32.totalorder 1, %s11
      %p89 = scmp.lt.s32.totalorder %s11, 3
      %p90 = pnand %p88, %p89
      %p91 = pneg %p90
      // Predicated region
      $region21: #{tpu_custom_call.1} parent=5 // pred_check
        _
      $region22: #{tpu_custom_call.1} parent=5 // pred_check_branch
        %93 = sbr.rel (%p90) target = $region24
      $region23: #{tpu_custom_call.1} parent=5 // pred_region
        %s94 = ssub.s32 %s11, 1
        // Predicated region
        $region25: #{tpu_custom_call.1} parent=23 // pred_check
          %p95 = pneg %p32
        $region26: #{tpu_custom_call.1} parent=23 // pred_check_branch
          %97 = sbr.rel (%p95) target = $region28
        $region27: #{tpu_custom_call.1} parent=23 // pred_region
          %98 = dma.done [#allocation3], 128
        $region28: #{tpu_custom_call.1} parent=23 // pred_fallthru
          _
        %p99 = pneg %p32
        %p100 = pneg %p29
        %p101 = pneg %p58
        %p102 = pneg %p55
        %s103 = sand.u32 %s45, 1
        %s104 = scalar_lea.sflag [#allocation4], %s103
        %s105 = sand.u32 %s45, 1
        %s106 = smul.addr %s105, 8
        %s107 = scalar_lea.vmem [#allocation5], %s106
        %v108 = vld [vmem:[#allocation2] sm:$0xff]
        %v109 = vadd.f32 %v108, 1.0
        %110 = vst [vmem:[%s107] sm:$0xff] %v109
        %s111 = sand.u32 %s45, 1
        %s112 = scalar_lea.sflag [#allocation4], %s111
        %s113 = sand.u32 %s45, 1
        %s114 = smul.addr %s113, 8
        %s115 = scalar_lea.vmem [#allocation5], %s114
        // Predicated region
        $region29: #{tpu_custom_call.1} parent=23 // pred_check
          %p116 = pneg %p55
        $region30: #{tpu_custom_call.1} parent=23 // pred_check_branch
          %118 = sbr.rel (%p116) target = $region32
        $region31: #{tpu_custom_call.1} parent=23 // pred_region
          %s120 = ssub.s32 128, 128
          %121 = vsyncadd %s112, %s120
          %s122 = smul.addr %s16, 128
          %s123 = scalar_lea.hbm %s1, %s122
          %s125 = sshll.u32 %s115, 4
          %s126 = int_to_ptr.vmem [resolvable:$true] %s125
          %128 = dma.vmem_to_hbm [thread:$0]  %s126, 128, %s123, %s112
        $region32: #{tpu_custom_call.1} parent=23 // pred_fallthru
          _
      $region24: #{tpu_custom_call.1} parent=5 // pred_fallthru
        _
      %p129 = scmp.le.s32.totalorder 2, %s11
      // Predicated region
      $region33: #{tpu_custom_call.1} parent=5 // pred_check
        %p130 = pneg %p129
      $region34: #{tpu_custom_call.1} parent=5 // pred_check_branch
        %132 = sbr.rel (%p130) target = $region36
      $region35: #{tpu_custom_call.1} parent=5 // pred_region
        %s133 = ssub.s32 %s11, 2
        // Predicated region
        $region37: #{tpu_custom_call.1} parent=35 // pred_check
          %p134 = pneg %p61
        $region38: #{tpu_custom_call.1} parent=35 // pred_check_branch
          %136 = sbr.rel (%p134) target = $region40
        $region39: #{tpu_custom_call.1} parent=35 // pred_region
          %s137 = sand.u32 %s46, 1
          %s138 = scalar_lea.sflag [#allocation4], %s137
          %s139 = sand.u32 %s46, 1
          %s140 = smul.addr %s139, 8
          %s141 = scalar_lea.vmem [#allocation5], %s140
          %142 = dma.done %s138, 128
        $region40: #{tpu_custom_call.1} parent=35 // pred_fallthru
          _
      $region36: #{tpu_custom_call.1} parent=5 // pred_fallthru
        _
    $region6: #{tpu_custom_call.1} parent=1 // loop_footer
      %s15 = sadd.s32 1, %s11
    $region7: #{tpu_custom_call.1} parent=1 // loop_footer_branch
      %10 = sbr.rel target = $region3
    $region8: #{tpu_custom_call.1} parent=1 // loop_exit
      _
    %143 = vsyncpa [#allocation3], 1
    %s144 = scalar_lea.sflag [#allocation3], 1
    %145 = vsyncpa %s144, 1
    %146 = vsyncpa [#allocation4], 1
    %s147 = scalar_lea.sflag [#allocation4], 1
    %148 = vsyncpa %s147, 1

// kernel: transformer_encoder_with_pair.7
$region0: #{transformer_encoder_with_pair.7}
  #allocation0 [shape = 'u32[]', space=smem, size = 0x4, offset = 0x4, fixed_abs, tag = 'smem constant byte address 0x4 - core index']
  #allocation1 [shape = 'u32[144,128]{1,0:T(1,128)}', space=vmem, size = 0x12000, scoped, tag = 'internal scratch']
  %s0 = inlined_call_operand.vmem [shape: f32[16,32], index: 0, kind: input, shape index: {}]
  %s1 = inlined_call_operand.vmem [shape: f32[1,32], index: 1, kind: input, shape index: {}]
  %s2 = inlined_call_operand.vmem [shape: f32[1,32], index: 2, kind: input, shape index: {}]
  %s3 = inlined_call_operand.vmem [shape: f32[16,1], index: 3, kind: input, shape index: {}]
  %s4 = inlined_call_operand.vmem [shape: f32[16,32], index: 4, kind: output, shape index: {}]
  %s5 = sld [smem:[#allocation0]]
  $region49: #{transformer_encoder_with_pair.7} parent=0
    _
  %s7 = ssub.s32 1, %s5
  %s8 = scalar_select 0, %s7, %s5
  loop: start=0, step=1, limit=4
  $region2: #{transformer_encoder_with_pair.7} parent=0 // loop_pre_header
    _
  $region3: #{transformer_encoder_with_pair.7} parent=0 // loop_header
    %s10 = sphi 0, %s14
    %p11 = scmp.ge.s32.totalorder %s10, 4
    %s20 = sphi 0, %s22
    %s23 = sphi 0, %s20
    %s24 = sphi 0, %s23
    %s40 = sphi 0, %s24
    %s44 = sphi 0, %s44
    %s46 = sphi 0, %s44
    %s47 = sphi 0, %s46
    %s61 = sphi 0, %s47
    %s65 = sphi 0, %s65
    %s67 = sphi 0, %s65
    %s68 = sphi 0, %s67
    %s82 = sphi 0, %s68
    %s88 = sphi 0, %s90
    %s91 = sphi 0, %s88
    %s92 = sphi 0, %s91
    %s108 = sphi 0, %s92
    %s114 = sphi 0, %s116
    %s117 = sphi 0, %s114
    %s118 = sphi 0, %s117
    %s134 = sphi 0, %s118
  $region4: #{transformer_encoder_with_pair.7} parent=0 // loop_header_branch
    %13 = sbr.rel (%p11) target = $region8
  $region5: #{transformer_encoder_with_pair.7} parent=0 // loop_body
    %s15 = ssub.s32 %s10, 1
    %s16 = ssub.s32 %s10, 2
    %s17 = sadd.s32 %s10, 1
    %s18 = ssub.s32 %s10, %s17
    %p19 = scmp.eq.s32.totalorder %s18, 0
    %s21 = sadd.s32 %s20, 1
    %s22 = scalar_select %p19, %s20, %s21
    %p25 = pneg %p19
    %p26 = scmp.eq.s32.totalorder %s10, 1
    %p27 = por %p25, %p26
    %p28 = scmp.ne.s32.totalorder %s20, %s23
    %p29 = scmp.eq.s32.totalorder %s10, 0
    %p30 = por %p28, %p29
    %p31 = scmp.ne.s32.totalorder %s20, %s23
    %p32 = scmp.eq.s32.totalorder %s15, 1
    %p33 = por %p31, %p32
    %p34 = scmp.ne.s32.totalorder %s23, %s24
    %p35 = scmp.eq.s32.totalorder %s15, 0
    %p36 = por %p34, %p35
    %p37 = scmp.ne.s32.totalorder %s23, %s24
    %p38 = scmp.eq.s32.totalorder %s16, 1
    %p39 = por %p37, %p38
    %p41 = scmp.ne.s32.totalorder %s24, %s40
    %p42 = scmp.eq.s32.totalorder %s16, 0
    %p43 = por %p41, %p42
    %s45 = sadd.s32 %s44, 1
    %p48 = scmp.eq.s32.totalorder %s10, 1
    %p49 = scmp.ne.s32.totalorder %s44, %s46
    %p50 = scmp.eq.s32.totalorder %s10, 0
    %p51 = por %p49, %p50
    %p52 = scmp.ne.s32.totalorder %s44, %s46
    %p53 = scmp.eq.s32.totalorder %s15, 1
    %p54 = por %p52, %p53
    %p55 = scmp.ne.s32.totalorder %s46, %s47
    %p56 = scmp.eq.s32.totalorder %s15, 0
    %p57 = por %p55, %p56
    %p58 = scmp.ne.s32.totalorder %s46, %s47
    %p59 = scmp.eq.s32.totalorder %s16, 1
    %p60 = por %p58, %p59
    %p62 = scmp.ne.s32.totalorder %s47, %s61
    %p63 = scmp.eq.s32.totalorder %s16, 0
    %p64 = por %p62, %p63
    %s66 = sadd.s32 %s65, 1
    %p69 = scmp.eq.s32.totalorder %s10, 1
    %p70 = scmp.ne.s32.totalorder %s65, %s67
    %p71 = scmp.eq.s32.totalorder %s10, 0
    %p72 = por %p70, %p71
    %p73 = scmp.ne.s32.totalorder %s65, %s67
    %p74 = scmp.eq.s32.totalorder %s15, 1
    %p75 = por %p73, %p74
    %p76 = scmp.ne.s32.totalorder %s67, %s68
    %p77 = scmp.eq.s32.totalorder %s15, 0
    %p78 = por %p76, %p77
    %p79 = scmp.ne.s32.totalorder %s67, %s68
    %p80 = scmp.eq.s32.totalorder %s16, 1
    %p81 = por %p79, %p80
    %p83 = scmp.ne.s32.totalorder %s68, %s82
    %p84 = scmp.eq.s32.totalorder %s16, 0
    %p85 = por %p83, %p84
    %s86 = ssub.s32 %s10, %s17
    %p87 = scmp.eq.s32.totalorder %s86, 0
    %s89 = sadd.s32 %s88, 1
    %s90 = scalar_select %p87, %s88, %s89
    %p93 = pneg %p87
    %p94 = scmp.eq.s32.totalorder %s10, 1
    %p95 = por %p93, %p94
    %p96 = scmp.ne.s32.totalorder %s88, %s91
    %p97 = scmp.eq.s32.totalorder %s10, 0
    %p98 = por %p96, %p97
    %p99 = scmp.ne.s32.totalorder %s88, %s91
    %p100 = scmp.eq.s32.totalorder %s15, 1
    %p101 = por %p99, %p100
    %p102 = scmp.ne.s32.totalorder %s91, %s92
    %p103 = scmp.eq.s32.totalorder %s15, 0
    %p104 = por %p102, %p103
    %p105 = scmp.ne.s32.totalorder %s91, %s92
    %p106 = scmp.eq.s32.totalorder %s16, 1
    %p107 = por %p105, %p106
    %p109 = scmp.ne.s32.totalorder %s92, %s108
    %p110 = scmp.eq.s32.totalorder %s16, 0
    %p111 = por %p109, %p110
    %s112 = ssub.s32 %s10, %s17
    %p113 = scmp.eq.s32.totalorder %s112, 0
    %s115 = sadd.s32 %s114, 1
    %s116 = scalar_select %p113, %s114, %s115
    %p119 = pneg %p113
    %p120 = scmp.eq.s32.totalorder %s10, 1
    %p121 = por %p119, %p120
    %p122 = scmp.ne.s32.totalorder %s114, %s117
    %p123 = scmp.eq.s32.totalorder %s10, 0
    %p124 = por %p122, %p123
    %p125 = scmp.ne.s32.totalorder %s114, %s117
    %p126 = scmp.eq.s32.totalorder %s15, 1
    %p127 = por %p125, %p126
    %p128 = scmp.ne.s32.totalorder %s117, %s118
    %p129 = scmp.eq.s32.totalorder %s15, 0
    %p130 = por %p128, %p129
    %p131 = scmp.ne.s32.totalorder %s117, %s118
    %p132 = scmp.eq.s32.totalorder %s16, 1
    %p133 = por %p131, %p132
    %p135 = scmp.ne.s32.totalorder %s118, %s134
    %p136 = scmp.eq.s32.totalorder %s16, 0
    %p137 = por %p135, %p136
    %p138 = scmp.le.s32.totalorder 1, %s10
    %p139 = scmp.lt.s32.totalorder %s10, 3
    %p140 = pnand %p138, %p139
    %p141 = pneg %p140
    // Predicated region
    $region9: #{transformer_encoder_with_pair.7} parent=5 // pred_check
      _
    $region10: #{transformer_encoder_with_pair.7} parent=5 // pred_check_branch
      %143 = sbr.rel (%p140) target = $region12
    $region11: #{transformer_encoder_with_pair.7} parent=5 // pred_region
      %s144 = ssub.s32 %s10, 1
      // Predicated region
      $region13: #{transformer_encoder_with_pair.7} parent=11 // pred_check
        %p145 = pneg %p57
      $region14: #{transformer_encoder_with_pair.7} parent=11 // pred_check_branch
        %147 = sbr.rel (%p145) target = $region16
      $region15: #{transformer_encoder_with_pair.7} parent=11 // pred_region
        _
      $region16: #{transformer_encoder_with_pair.7} parent=11 // pred_fallthru
        _
      // Predicated region
      $region17: #{transformer_encoder_with_pair.7} parent=11 // pred_check
        %p148 = pneg %p78
      $region18: #{transformer_encoder_with_pair.7} parent=11 // pred_check_branch
        %150 = sbr.rel (%p148) target = $region20
      $region19: #{transformer_encoder_with_pair.7} parent=11 // pred_region
        _
      $region20: #{transformer_encoder_with_pair.7} parent=11 // pred_fallthru
        _
    $region12: #{transformer_encoder_with_pair.7} parent=5 // pred_fallthru
      _
    %p151 = scmp.lt.s32.totalorder %s10, 2
    // Predicated region
    $region21: #{transformer_encoder_with_pair.7} parent=5 // pred_check
      %p152 = pneg %p151
    $region22: #{transformer_encoder_with_pair.7} parent=5 // pred_check_branch
      %154 = sbr.rel (%p152) target = $region24
    $region23: #{transformer_encoder_with_pair.7} parent=5 // pred_region
      // Predicated region
      $region25: #{transformer_encoder_with_pair.7} parent=23 // pred_check
        %p155 = pneg %p30
      $region26: #{transformer_encoder_with_pair.7} parent=23 // pred_check_branch
        %157 = sbr.rel (%p155) target = $region28
      $region27: #{transformer_encoder_with_pair.7} parent=23 // pred_region
        %p158 = scmp.lt.s32.totalorder %s10, 1
        %s159 = scalar_select %p158, %s10, 1
        %s160 = smul.addr %s159, 8
        %s161 = scalar_lea.vmem %s0, %s160
      $region28: #{transformer_encoder_with_pair.7} parent=23 // pred_fallthru
        _
      // Predicated region
      $region29: #{transformer_encoder_with_pair.7} parent=23 // pred_check
        %p162 = pneg %p98
      $region30: #{transformer_encoder_with_pair.7} parent=23 // pred_check_branch
        %164 = sbr.rel (%p162) target = $region32
      $region31: #{transformer_encoder_with_pair.7} parent=23 // pred_region
        %p165 = scmp.lt.s32.totalorder %s10, 1
        %s166 = scalar_select %p165, %s10, 1
        %s167 = smul.addr %s166, 8
        %s168 = scalar_lea.vmem %s3, %s167
      $region32: #{transformer_encoder_with_pair.7} parent=23 // pred_fallthru
        _
    $region24: #{transformer_encoder_with_pair.7} parent=5 // pred_fallthru
      _
    %p169 = scmp.le.s32.totalorder 1, %s10
    %p170 = scmp.lt.s32.totalorder %s10, 3
    %p171 = pnand %p169, %p170
    %p172 = pneg %p171
    // Predicated region
    $region33: #{transformer_encoder_with_pair.7} parent=5 // pred_check
      _
    $region34: #{transformer_encoder_with_pair.7} parent=5 // pred_check_branch
      %174 = sbr.rel (%p171) target = $region36
    $region35: #{transformer_encoder_with_pair.7} parent=5 // pred_region
      %s175 = ssub.s32 %s10, 1
      %p176 = scmp.lt.s32.totalorder %s15, 1
      %s177 = scalar_select %p176, %s15, 1
      %s178 = smul.addr %s177, 8
      %s179 = scalar_lea.vmem %s0, %s178
      %p180 = pneg %p36
      %p181 = pneg %p33
      %p182 = pneg %p57
      %p183 = pneg %p54
      %p184 = pneg %p78
      %p185 = pneg %p75
      %p186 = scmp.lt.s32.totalorder %s15, 1
      %s187 = scalar_select %p186, %s15, 1
      %s188 = smul.addr %s187, 8
      %s189 = scalar_lea.vmem %s3, %s188
      %p190 = pneg %p104
      %p191 = pneg %p101
      %p192 = pneg %p130
      %p193 = pneg %p127
      %p194 = scmp.lt.s32.totalorder %s15, 1
      %s195 = scalar_select %p194, %s15, 1
      %s196 = smul.addr %s195, 8
      %s197 = scalar_lea.vmem %s4, %s196
      %p198 = scmp.lt.s32.totalorder %s15, 1
      %s199 = scalar_select %p198, %s15, 1
      %s200 = smul.addr %s199, 8
      %s201 = scalar_lea.vmem %s0, %s200
      %p202 = scmp.lt.s32.totalorder %s15, 1
      %s203 = scalar_select %p202, %s15, 1
      %s204 = smul.addr %s203, 8
      %s205 = scalar_lea.vmem %s3, %s204
      %p206 = scmp.lt.s32.totalorder %s15, 1
      %s207 = scalar_select %p206, %s15, 1
      %s208 = smul.addr %s207, 8
      %s209 = scalar_lea.vmem %s4, %s208
      %v210 = vld [vmem:[%s201] sm:$0xff]
      %v211 = vld [vmem:[%s1] sm:$0x1]
      %v212 = vld [vmem:[%s2] sm:$0x1]
      %vm213 = vcmask 261120
      %v214 = vsel %vm213, %v210, 0.0
      %215 = vadd.xlane.f32.xlu0 %v214
      %v216 = vpop.xlane.xlu0 %215
      %v217 = vrcp.pop 32.0
      %v218 = vmul.f32 %v216, %v217
      %v219 = vsub.f32 %v210, %v218
      %v220 = vmul.f32 %v219, %v219
      %v221 = vsel %vm213, %v220, 0.0
      %222 = vadd.xlane.f32.xlu0 %v221
      %v223 = vpop.xlane.xlu0 %222
      %v224 = vmul.f32 %v223, %v217
      %v225 = vadd.f32 %v224, 1e-05
      %v226 = vrsqrt.pop %v225
      %v227 = vmul.f32 %v219, %v226
      %v229 = vlaneseq
      %v230 = vshrl.u32 %v229, 7
      %v231 = vsub.s32 0, %v230
      %v232 = vrot.slane %v211, %v231
      %v234 = vmul.f32 %v227, %v232
      %v236 = vlaneseq
      %v237 = vshrl.u32 %v236, 7
      %v238 = vsub.s32 0, %v237
      %v239 = vrot.slane %v212, %v238
      %v241 = vadd.f32 %v234, %v239
      %v242 = vld [vmem:[%s205] sm:$0xff]
      %v243 = vsub.f32 1.0, %v242
      %245 = vset.pattern.permute.xlu0 0
      %246 = vperm.xlu0 %245, %v243
      %v247 = vpop.permute.xlu0 %246
      %v249 = vmul.f32 %v241, %v247
      %250 = vst.msk [vmem:[%s209] sm:$0xff] %vm213, %v249
      %p251 = scmp.lt.s32.totalorder %s15, 1
      %s252 = scalar_select %p251, %s15, 1
      %s253 = smul.addr %s252, 8
      %s254 = scalar_lea.vmem %s4, %s253
      // Predicated region
      $region37: #{transformer_encoder_with_pair.7} parent=35 // pred_check
        %p255 = pneg %p127
      $region38: #{transformer_encoder_with_pair.7} parent=35 // pred_check_branch
        %257 = sbr.rel (%p255) target = $region40
      $region39: #{transformer_encoder_with_pair.7} parent=35 // pred_region
        _
      $region40: #{transformer_encoder_with_pair.7} parent=35 // pred_fallthru
        _
    $region36: #{transformer_encoder_with_pair.7} parent=5 // pred_fallthru
      _
    %p258 = scmp.le.s32.totalorder 2, %s10
    // Predicated region
    $region41: #{transformer_encoder_with_pair.7} parent=5 // pred_check
      %p259 = pneg %p258
    $region42: #{transformer_encoder_with_pair.7} parent=5 // pred_check_branch
      %261 = sbr.rel (%p259) target = $region44
    $region43: #{transformer_encoder_with_pair.7} parent=5 // pred_region
      %s262 = ssub.s32 %s10, 2
      // Predicated region
      $region45: #{transformer_encoder_with_pair.7} parent=43 // pred_check
        %p263 = pneg %p133
      $region46: #{transformer_encoder_with_pair.7} parent=43 // pred_check_branch
        %265 = sbr.rel (%p263) target = $region48
      $region47: #{transformer_encoder_with_pair.7} parent=43 // pred_region
        %p266 = scmp.lt.s32.totalorder %s16, 1
        %s267 = scalar_select %p266, %s16, 1
        %s268 = smul.addr %s267, 8
        %s269 = scalar_lea.vmem %s4, %s268
      $region48: #{transformer_encoder_with_pair.7} parent=43 // pred_fallthru
        _
    $region44: #{transformer_encoder_with_pair.7} parent=5 // pred_fallthru
      _
  $region6: #{transformer_encoder_with_pair.7} parent=0 // loop_footer
    %s14 = sadd.s32 1, %s10
  $region7: #{transformer_encoder_with_pair.7} parent=0 // loop_footer_branch
    %9 = sbr.rel target = $region3
  $region8: #{transformer_encoder_with_pair.7} parent=0 // loop_exit
    _

// kernel: transformer_encoder_with_pair.8
$region0: #{transformer_encoder_with_pair.8}
  #allocation0 [shape = 'u32[]', space=smem, size = 0x4, offset = 0x4, fixed_abs, tag = 'smem constant byte address 0x4 - core index']
  #allocation1 [shape = 'u32[144,128]{1,0:T(1,128)}', space=vmem, size = 0x12000, scoped, tag = 'internal scratch']
  %s0 = inlined_call_operand.vmem [shape: f32[16,32], index: 0, kind: input, shape index: {}]
  %s1 = inlined_call_operand.vmem [shape: f32[1,32], index: 1, kind: input, shape index: {}]
  %s2 = inlined_call_operand.vmem [shape: f32[1,32], index: 2, kind: input, shape index: {}]
  %s3 = inlined_call_operand.vmem [shape: bf16[32,96], index: 3, kind: input, shape index: {}]
  %s4 = inlined_call_operand.vmem [shape: f32[1,96], index: 4, kind: input, shape index: {}]
  %s5 = inlined_call_operand.vmem [shape: bf16[16,32], index: 5, kind: output, shape index: {0}]
  %s6 = inlined_call_operand.vmem [shape: bf16[16,32], index: 6, kind: output, shape index: {1}]
  %s7 = inlined_call_operand.vmem [shape: bf16[16,32], index: 7, kind: output, shape index: {2}]
  %8 = xla_tuple %s5, %s6, %s7
  %s9 = sld [smem:[#allocation0]]
  $region69: #{transformer_encoder_with_pair.8} parent=0
    _
  %s11 = ssub.s32 1, %s9
  %s12 = scalar_select 0, %s11, %s9
  loop: start=0, step=1, limit=4
  $region2: #{transformer_encoder_with_pair.8} parent=0 // loop_pre_header
    _
  $region3: #{transformer_encoder_with_pair.8} parent=0 // loop_header
    %s14 = sphi 0, %s18
    %p15 = scmp.ge.s32.totalorder %s14, 4
    %s24 = sphi 0, %s26
    %s27 = sphi 0, %s24
    %s28 = sphi 0, %s27
    %s44 = sphi 0, %s28
    %s48 = sphi 0, %s48
    %s50 = sphi 0, %s48
    %s51 = sphi 0, %s50
    %s65 = sphi 0, %s51
    %s69 = sphi 0, %s69
    %s71 = sphi 0, %s69
    %s72 = sphi 0, %s71
    %s86 = sphi 0, %s72
    %s90 = sphi 0, %s90
    %s92 = sphi 0, %s90
    %s93 = sphi 0, %s92
    %s107 = sphi 0, %s93
    %s111 = sphi 0, %s111
    %s113 = sphi 0, %s111
    %s114 = sphi 0, %s113
    %s128 = sphi 0, %s114
    %s134 = sphi 0, %s136
    %s137 = sphi 0, %s134
    %s138 = sphi 0, %s137
    %s154 = sphi 0, %s138
    %s160 = sphi 0, %s162
    %s163 = sphi 0, %s160
    %s164 = sphi 0, %s163
    %s180 = sphi 0, %s164
    %s186 = sphi 0, %s188
    %s189 = sphi 0, %s186
    %s190 = sphi 0, %s189
    %s206 = sphi 0, %s190
  $region4: #{transformer_encoder_with_pair.8} parent=0 // loop_header_branch
    %17 = sbr.rel (%p15) target = $region8
  $region5: #{transformer_encoder_with_pair.8} parent=0 // loop_body
    %s19 = ssub.s32 %s14, 1
    %s20 = ssub.s32 %s14, 2
    %s21 = sadd.s32 %s14, 1
    %s22 = ssub.s32 %s14, %s21
    %p23 = scmp.eq.s32.totalorder %s22, 0
    %s25 = sadd.s32 %s24, 1
    %s26 = scalar_select %p23, %s24, %s25
    %p29 = pneg %p23
    %p30 = scmp.eq.s32.totalorder %s14, 1
    %p31 = por %p29, %p30
    %p32 = scmp.ne.s32.totalorder %s24, %s27
    %p33 = scmp.eq.s32.totalorder %s14, 0
    %p34 = por %p32, %p33
    %p35 = scmp.ne.s32.totalorder %s24, %s27
    %p36 = scmp.eq.s32.totalorder %s19, 1
    %p37 = por %p35, %p36
    %p38 = scmp.ne.s32.totalorder %s27, %s28
    %p39 = scmp.eq.s32.totalorder %s19, 0
    %p40 = por %p38, %p39
    %p41 = scmp.ne.s32.totalorder %s27, %s28
    %p42 = scmp.eq.s32.totalorder %s20, 1
    %p43 = por %p41, %p42
    %p45 = scmp.ne.s32.totalorder %s28, %s44
    %p46 = scmp.eq.s32.totalorder %s20, 0
    %p47 = por %p45, %p46
    %s49 = sadd.s32 %s48, 1
    %p52 = scmp.eq.s32.totalorder %s14, 1
    %p53 = scmp.ne.s32.totalorder %s48, %s50
    %p54 = scmp.eq.s32.totalorder %s14, 0
    %p55 = por %p53, %p54
    %p56 = scmp.ne.s32.totalorder %s48, %s50
    %p57 = scmp.eq.s32.totalorder %s19, 1
    %p58 = por %p56, %p57
    %p59 = scmp.ne.s32.totalorder %s50, %s51
    %p60 = scmp.eq.s32.totalorder %s19, 0
    %p61 = por %p59, %p60
    %p62 = scmp.ne.s32.totalorder %s50, %s51
    %p63 = scmp.eq.s32.totalorder %s20, 1
    %p64 = por %p62, %p63
    %p66 = scmp.ne.s32.totalorder %s51, %s65
    %p67 = scmp.eq.s32.totalorder %s20, 0
    %p68 = por %p66, %p67
    %s70 = sadd.s32 %s69, 1
    %p73 = scmp.eq.s32.totalorder %s14, 1
    %p74 = scmp.ne.s32.totalorder %s69, %s71
    %p75 = scmp.eq.s32.totalorder %s14, 0
    %p76 = por %p74, %p75
    %p77 = scmp.ne.s32.totalorder %s69, %s71
    %p78 = scmp.eq.s32.totalorder %s19, 1
    %p79 = por %p77, %p78
    %p80 = scmp.ne.s32.totalorder %s71, %s72
    %p81 = scmp.eq.s32.totalorder %s19, 0
    %p82 = por %p80, %p81
    %p83 = scmp.ne.s32.totalorder %s71, %s72
    %p84 = scmp.eq.s32.totalorder %s20, 1
    %p85 = por %p83, %p84
    %p87 = scmp.ne.s32.totalorder %s72, %s86
    %p88 = scmp.eq.s32.totalorder %s20, 0
    %p89 = por %p87, %p88
    %s91 = sadd.s32 %s90, 1
    %p94 = scmp.eq.s32.totalorder %s14, 1
    %p95 = scmp.ne.s32.totalorder %s90, %s92
    %p96 = scmp.eq.s32.totalorder %s14, 0
    %p97 = por %p95, %p96
    %p98 = scmp.ne.s32.totalorder %s90, %s92
    %p99 = scmp.eq.s32.totalorder %s19, 1
    %p100 = por %p98, %p99
    %p101 = scmp.ne.s32.totalorder %s92, %s93
    %p102 = scmp.eq.s32.totalorder %s19, 0
    %p103 = por %p101, %p102
    %p104 = scmp.ne.s32.totalorder %s92, %s93
    %p105 = scmp.eq.s32.totalorder %s20, 1
    %p106 = por %p104, %p105
    %p108 = scmp.ne.s32.totalorder %s93, %s107
    %p109 = scmp.eq.s32.totalorder %s20, 0
    %p110 = por %p108, %p109
    %s112 = sadd.s32 %s111, 1
    %p115 = scmp.eq.s32.totalorder %s14, 1
    %p116 = scmp.ne.s32.totalorder %s111, %s113
    %p117 = scmp.eq.s32.totalorder %s14, 0
    %p118 = por %p116, %p117
    %p119 = scmp.ne.s32.totalorder %s111, %s113
    %p120 = scmp.eq.s32.totalorder %s19, 1
    %p121 = por %p119, %p120
    %p122 = scmp.ne.s32.totalorder %s113, %s114
    %p123 = scmp.eq.s32.totalorder %s19, 0
    %p124 = por %p122, %p123
    %p125 = scmp.ne.s32.totalorder %s113, %s114
    %p126 = scmp.eq.s32.totalorder %s20, 1
    %p127 = por %p125, %p126
    %p129 = scmp.ne.s32.totalorder %s114, %s128
    %p130 = scmp.eq.s32.totalorder %s20, 0
    %p131 = por %p129, %p130
    %s132 = ssub.s32 %s14, %s21
    %p133 = scmp.eq.s32.totalorder %s132, 0
    %s135 = sadd.s32 %s134, 1
    %s136 = scalar_select %p133, %s134, %s135
    %p139 = pneg %p133
    %p140 = scmp.eq.s32.totalorder %s14, 1
    %p141 = por %p139, %p140
    %p142 = scmp.ne.s32.totalorder %s134, %s137
    %p143 = scmp.eq.s32.totalorder %s14, 0
    %p144 = por %p142, %p143
    %p145 = scmp.ne.s32.totalorder %s134, %s137
    %p146 = scmp.eq.s32.totalorder %s19, 1
    %p147 = por %p145, %p146
    %p148 = scmp.ne.s32.totalorder %s137, %s138
    %p149 = scmp.eq.s32.totalorder %s19, 0
    %p150 = por %p148, %p149
    %p151 = scmp.ne.s32.totalorder %s137, %s138
    %p152 = scmp.eq.s32.totalorder %s20, 1
    %p153 = por %p151, %p152
    %p155 = scmp.ne.s32.totalorder %s138, %s154
    %p156 = scmp.eq.s32.totalorder %s20, 0
    %p157 = por %p155, %p156
    %s158 = ssub.s32 %s14, %s21
    %p159 = scmp.eq.s32.totalorder %s158, 0
    %s161 = sadd.s32 %s160, 1
    %s162 = scalar_select %p159, %s160, %s161
    %p165 = pneg %p159
    %p166 = scmp.eq.s32.totalorder %s14, 1
    %p167 = por %p165, %p166
    %p168 = scmp.ne.s32.totalorder %s160, %s163
    %p169 = scmp.eq.s32.totalorder %s14, 0
    %p170 = por %p168, %p169
    %p171 = scmp.ne.s32.totalorder %s160, %s163
    %p172 = scmp.eq.s32.totalorder %s19, 1
    %p173 = por %p171, %p172
    %p174 = scmp.ne.s32.totalorder %s163, %s164
    %p175 = scmp.eq.s32.totalorder %s19, 0
    %p176 = por %p174, %p175
    %p177 = scmp.ne.s32.totalorder %s163, %s164
    %p178 = scmp.eq.s32.totalorder %s20, 1
    %p179 = por %p177, %p178
    %p181 = scmp.ne.s32.totalorder %s164, %s180
    %p182 = scmp.eq.s32.totalorder %s20, 0
    %p183 = por %p181, %p182
    %s184 = ssub.s32 %s14, %s21
    %p185 = scmp.eq.s32.totalorder %s184, 0
    %s187 = sadd.s32 %s186, 1
    %s188 = scalar_select %p185, %s186, %s187
    %p191 = pneg %p185
    %p192 = scmp.eq.s32.totalorder %s14, 1
    %p193 = por %p191, %p192
    %p194 = scmp.ne.s32.totalorder %s186, %s189
    %p195 = scmp.eq.s32.totalorder %s14, 0
    %p196 = por %p194, %p195
    %p197 = scmp.ne.s32.totalorder %s186, %s189
    %p198 = scmp.eq.s32.totalorder %s19, 1
    %p199 = por %p197, %p198
    %p200 = scmp.ne.s32.totalorder %s189, %s190
    %p201 = scmp.eq.s32.totalorder %s19, 0
    %p202 = por %p200, %p201
    %p203 = scmp.ne.s32.totalorder %s189, %s190
    %p204 = scmp.eq.s32.totalorder %s20, 1
    %p205 = por %p203, %p204
    %p207 = scmp.ne.s32.totalorder %s190, %s206
    %p208 = scmp.eq.s32.totalorder %s20, 0
    %p209 = por %p207, %p208
    %p210 = scmp.le.s32.totalorder 1, %s14
    %p211 = scmp.lt.s32.totalorder %s14, 3
    %p212 = pnand %p210, %p211
    %p213 = pneg %p212
    // Predicated region
    $region9: #{transformer_encoder_with_pair.8} parent=5 // pred_check
      _
    $region10: #{transformer_encoder_with_pair.8} parent=5 // pred_check_branch
      %215 = sbr.rel (%p212) target = $region12
    $region11: #{transformer_encoder_with_pair.8} parent=5 // pred_region
      %s216 = ssub.s32 %s14, 1
      // Predicated region
      $region13: #{transformer_encoder_with_pair.8} parent=11 // pred_check
        %p217 = pneg %p61
      $region14: #{transformer_encoder_with_pair.8} parent=11 // pred_check_branch
        %219 = sbr.rel (%p217) target = $region16
      $region15: #{transformer_encoder_with_pair.8} parent=11 // pred_region
        _
      $region16: #{transformer_encoder_with_pair.8} parent=11 // pred_fallthru
        _
      // Predicated region
      $region17: #{transformer_encoder_with_pair.8} parent=11 // pred_check
        %p220 = pneg %p82
      $region18: #{transformer_encoder_with_pair.8} parent=11 // pred_check_branch
        %222 = sbr.rel (%p220) target = $region20
      $region19: #{transformer_encoder_with_pair.8} parent=11 // pred_region
        _
      $region20: #{transformer_encoder_with_pair.8} parent=11 // pred_fallthru
        _
      // Predicated region
      $region21: #{transformer_encoder_with_pair.8} parent=11 // pred_check
        %p223 = pneg %p103
      $region22: #{transformer_encoder_with_pair.8} parent=11 // pred_check_branch
        %225 = sbr.rel (%p223) target = $region24
      $region23: #{transformer_encoder_with_pair.8} parent=11 // pred_region
        _
      $region24: #{transformer_encoder_with_pair.8} parent=11 // pred_fallthru
        _
      // Predicated region
      $region25: #{transformer_encoder_with_pair.8} parent=11 // pred_check
        %p226 = pneg %p124
      $region26: #{transformer_encoder_with_pair.8} parent=11 // pred_check_branch
        %228 = sbr.rel (%p226) target = $region28
      $region27: #{transformer_encoder_with_pair.8} parent=11 // pred_region
        _
      $region28: #{transformer_encoder_with_pair.8} parent=11 // pred_fallthru
        _
    $region12: #{transformer_encoder_with_pair.8} parent=5 // pred_fallthru
      _
    %p229 = scmp.lt.s32.totalorder %s14, 2
    // Predicated region
    $region29: #{transformer_encoder_with_pair.8} parent=5 // pred_check
      %p230 = pneg %p229
    $region30: #{transformer_encoder_with_pair.8} parent=5 // pred_check_branch
      %232 = sbr.rel (%p230) target = $region32
    $region31: #{transformer_encoder_with_pair.8} parent=5 // pred_region
      // Predicated region
      $region33: #{transformer_encoder_with_pair.8} parent=31 // pred_check
        %p233 = pneg %p34
      $region34: #{transformer_encoder_with_pair.8} parent=31 // pred_check_branch
        %235 = sbr.rel (%p233) target = $region36
      $region35: #{transformer_encoder_with_pair.8} parent=31 // pred_region
        %p236 = scmp.lt.s32.totalorder %s14, 1
        %s237 = scalar_select %p236, %s14, 1
        %s238 = smul.addr %s237, 8
        %s239 = scalar_lea.vmem %s0, %s238
      $region36: #{transformer_encoder_with_pair.8} parent=31 // pred_fallthru
        _
    $region32: #{transformer_encoder_with_pair.8} parent=5 // pred_fallthru
      _
    %p240 = scmp.le.s32.totalorder 1, %s14
    %p241 = scmp.lt.s32.totalorder %s14, 3
    %p242 = pnand %p240, %p241
    %p243 = pneg %p242
    // Predicated region
    $region37: #{transformer_encoder_with_pair.8} parent=5 // pred_check
      _
    $region38: #{transformer_encoder_with_pair.8} parent=5 // pred_check_branch
      %245 = sbr.rel (%p242) target = $region40
    $region39: #{transformer_encoder_with_pair.8} parent=5 // pred_region
      %s246 = ssub.s32 %s14, 1
      %p247 = scmp.lt.s32.totalorder %s19, 1
      %s248 = scalar_select %p247, %s19, 1
      %s249 = smul.addr %s248, 8
      %s250 = scalar_lea.vmem %s0, %s249
      %p251 = pneg %p40
      %p252 = pneg %p37
      %p253 = pneg %p61
      %p254 = pneg %p58
      %p255 = pneg %p82
      %p256 = pneg %p79
      %p257 = pneg %p103
      %p258 = pneg %p100
      %p259 = pneg %p124
      %p260 = pneg %p121
      %p261 = pneg %p150
      %p262 = pneg %p147
      %p263 = scmp.lt.s32.totalorder %s19, 1
      %s264 = scalar_select %p263, %s19, 1
      %s265 = smul.addr %s264, 4
      %s266 = scalar_lea.vmem %s5, %s265
      %p267 = pneg %p176
      %p268 = pneg %p173
      %p269 = scmp.lt.s32.totalorder %s19, 1
      %s270 = scalar_select %p269, %s19, 1
      %s271 = smul.addr %s270, 4
      %s272 = scalar_lea.vmem %s6, %s271
      %p273 = pneg %p202
      %p274 = pneg %p199
      %p275 = scmp.lt.s32.totalorder %s19, 1
      %s276 = scalar_select %p275, %s19, 1
      %s277 = smul.addr %s276, 4
      %s278 = scalar_lea.vmem %s7, %s277
      %p279 = scmp.lt.s32.totalorder %s19, 1
      %s280 = scalar_select %p279, %s19, 1
      %s281 = smul.addr %s280, 8
      %s282 = scalar_lea.vmem %s0, %s281
      %p283 = scmp.lt.s32.totalorder %s19, 1
      %s284 = scalar_select %p283, %s19, 1
      %s285 = smul.addr %s284, 4
      %s286 = scalar_lea.vmem %s5, %s285
      %p287 = scmp.lt.s32.totalorder %s19, 1
      %s288 = scalar_select %p287, %s19, 1
      %s289 = smul.addr %s288, 4
      %s290 = scalar_lea.vmem %s6, %s289
      %p291 = scmp.lt.s32.totalorder %s19, 1
      %s292 = scalar_select %p291, %s19, 1
      %s293 = smul.addr %s292, 4
      %s294 = scalar_lea.vmem %s7, %s293
      %v296 = vld [vmem:[%s282] sm:$0xff]
      %v297 = vld [vmem:[%s1] sm:$0x1]
      %v298 = vld [vmem:[%s2] sm:$0x1]
      %vm299 = vcmask 261120
      %v300 = vsel %vm299, %v296, 0.0
      %301 = vadd.xlane.f32.xlu0 %v300
      %v302 = vpop.xlane.xlu0 %301
      %v303 = vrcp.pop 32.0
      %v304 = vmul.f32 %v302, %v303
      %v305 = vsub.f32 %v296, %v304
      %v306 = vmul.f32 %v305, %v305
      %v307 = vsel %vm299, %v306, 0.0
      %308 = vadd.xlane.f32.xlu0 %v307
      %v309 = vpop.xlane.xlu0 %308
      %v310 = vmul.f32 %v309, %v303
      %v311 = vadd.f32 %v310, 1e-05
      %v312 = vrsqrt.pop %v311
      %v313 = vmul.f32 %v305, %v312
      %v315 = vlaneseq
      %v316 = vshrl.u32 %v315, 7
      %v317 = vsub.s32 0, %v316
      %v318 = vrot.slane %v297, %v317
      %v320 = vmul.f32 %v313, %v318
      %v322 = vlaneseq
      %v323 = vshrl.u32 %v322, 7
      %v324 = vsub.s32 0, %v323
      %v325 = vrot.slane %v298, %v324
      %v327 = vadd.f32 %v320, %v325
      %v328 = vpack.c.bf16 %v327, %v327
      %v329 = vld [vmem:[%s3] sm:$0xf]
      %v330 = vld [vmem:[%s3 + $0x4] sm:$0xf]
      %v331 = vld [vmem:[%s3 + $0x8] sm:$0xf]
      %v332 = vld [vmem:[%s3 + $0xc] sm:$0xf]
      %v333 = vld [vmem:[%s4] sm:$0x1]
      %v335 = vlaneseq
      %v336 = vshrl.u32 %v335, 7
      %v337 = vsub.s32 0, %v336
      %v338 = vrot.slane %v333, %v337
      %v344 = vunpack.c.l.b16 %v329
      %v345 = vunpack.c.l.b16 %v330
      %v346 = vunpack.c.l.b16 %v331
      %v347 = vunpack.c.l.b16 %v332
      %v348 = vpack.c.b16 %v345, %v344
      %v349 = vpack.c.b16 %v347, %v346
      %v353 = vsel %vm299, %v328, 0
      %355 = vmatprep.subr.bf16.mxu0 0
      %356 = vmatpush1.bf16.msra.mxu0 %v348
      %357 = vmatprep.subr.bf16.mxu0 0
      %358 = vmatpush1.bf16.msra.mxu0 %v349
      %359 = vmatprep.subr.bf16.mxu0 0
      %360 = vmatpush1.bf16.msra.mxu0 0
      %361 = vmatprep.subr.bf16.mxu0 0
      %362 = vmatpush1.bf16.msra.mxu0 0
      %363 = vmatprep.subr.bf16.mxu0 0
      %364 = vmatpush1.bf16.msra.mxu0 0
      %365 = vmatprep.subr.bf16.mxu0 0
      %366 = vmatpush1.bf16.msra.mxu0 0
      %367 = vmatprep.subr.bf16.mxu0 0
      %368 = vmatpush1.bf16.msra.mxu0 0
      %369 = vmatprep.subr.bf16.mxu0 0
      %370 = vmatpush1.bf16.msra.mxu0 0
      %371 = vmatprep.subr.bf16.mxu0 0
      %372 = vmatpush1.bf16.msra.mxu0 0
      %373 = vmatprep.subr.bf16.mxu0 0
      %374 = vmatpush1.bf16.msra.mxu0 0
      %375 = vmatprep.subr.bf16.mxu0 0
      %376 = vmatpush1.bf16.msra.mxu0 0
      %377 = vmatprep.subr.bf16.mxu0 0
      %378 = vmatpush1.bf16.msra.mxu0 0
      %379 = vmatprep.subr.bf16.mxu0 0
      %380 = vmatpush1.bf16.msra.mxu0 0
      %381 = vmatprep.subr.bf16.mxu0 0
      %382 = vmatpush1.bf16.msra.mxu0 0
      %383 = vmatprep.subr.bf16.mxu0 0
      %384 = vmatpush1.bf16.msra.mxu0 0
      %385 = vmatprep.subr.bf16.mxu0 0
      %386 = vmatpush1.bf16.msra.mxu0 0
      %387 = vmatprep.mubr.bf16.mxu0 0
      %388 = vmatmul.mubr.bf16.gmra.mrb[0].mxu0 %v353
      %v389 = vpop.f32.mrb[0].mxu0
      %v390 = vadd.f32 %v338, %v389
      %v391 = vpop.f32.mrb[0].mxu0
      %v392 = vpop.f32.mrb[0].mxu0
      %v393 = vpop.f32.mrb[0].mxu0
      %394 = vdwg.mxu0
      %v395 = vpack.c.bf16 %v390, %v390
      %vm396 = vcmask 257024
      %397 = vst.msk [vmem:[%s286] sm:$0xf] %vm396, %v395
      %v399 = vunpack.c.l.b16 %v395
      %v400 = vpack.c.b16 %v399, %v399
      %401 = vrot.lane.b32.xlu0 %v400, 96
      %v402 = vpop.permute.xlu0 %401
      %404 = vst.msk [vmem:[%s290] sm:$0xf] %vm396, %v402
      %405 = vrot.lane.b32.xlu0 %v400, 64
      %v406 = vpop.permute.xlu0 %405
      %408 = vst.msk [vmem:[%s294] sm:$0xf] %vm396, %v406
      %p409 = scmp.lt.s32.totalorder %s19, 1
      %s410 = scalar_select %p409, %s19, 1
      %s411 = smul.addr %s410, 4
      %s412 = scalar_lea.vmem %s5, %s411
      %p413 = scmp.lt.s32.totalorder %s19, 1
      %s414 = scalar_select %p413, %s19, 1
      %s415 = smul.addr %s414, 4
      %s416 = scalar_lea.vmem %s6, %s415
      %p417 = scmp.lt.s32.totalorder %s19, 1
      %s418 = scalar_select %p417, %s19, 1
      %s419 = smul.addr %s418, 4
      %s420 = scalar_lea.vmem %s7, %s419
      // Predicated region
      $region41: #{transformer_encoder_with_pair.8} parent=39 // pred_check
        %p421 = pneg %p147
      $region42: #{transformer_encoder_with_pair.8} parent=39 // pred_check_branch
        %423 = sbr.rel (%p421) target = $region44
      $region43: #{transformer_encoder_with_pair.8} parent=39 // pred_region
        _
      $region44: #{transformer_encoder_with_pair.8} parent=39 // pred_fallthru
        _
      // Predicated region
      $region45: #{transformer_encoder_with_pair.8} parent=39 // pred_check
        %p424 = pneg %p173
      $region46: #{transformer_encoder_with_pair.8} parent=39 // pred_check_branch
        %426 = sbr.rel (%p424) target = $region48
      $region47: #{transformer_encoder_with_pair.8} parent=39 // pred_region
        _
      $region48: #{transformer_encoder_with_pair.8} parent=39 // pred_fallthru
        _
      // Predicated region
      $region49: #{transformer_encoder_with_pair.8} parent=39 // pred_check
        %p427 = pneg %p199
      $region50: #{transformer_encoder_with_pair.8} parent=39 // pred_check_branch
        %429 = sbr.rel (%p427) target = $region52
      $region51: #{transformer_encoder_with_pair.8} parent=39 // pred_region
        _
      $region52: #{transformer_encoder_with_pair.8} parent=39 // pred_fallthru
        _
    $region40: #{transformer_encoder_with_pair.8} parent=5 // pred_fallthru
      _
    %p430 = scmp.le.s32.totalorder 2, %s14
    // Predicated region
    $region53: #{transformer_encoder_with_pair.8} parent=5 // pred_check
      %p431 = pneg %p430
    $region54: #{transformer_encoder_with_pair.8} parent=5 // pred_check_branch
      %433 = sbr.rel (%p431) target = $region56
    $region55: #{transformer_encoder_with_pair.8} parent=5 // pred_region
      %s434 = ssub.s32 %s14, 2
      // Predicated region
      $region57: #{transformer_encoder_with_pair.8} parent=55 // pred_check
        %p435 = pneg %p153
      $region58: #{transformer_encoder_with_pair.8} parent=55 // pred_check_branch
        %437 = sbr.rel (%p435) target = $region60
      $region59: #{transformer_encoder_with_pair.8} parent=55 // pred_region
        %p438 = scmp.lt.s32.totalorder %s20, 1
        %s439 = scalar_select %p438, %s20, 1
        %s440 = smul.addr %s439, 4
        %s441 = scalar_lea.vmem %s5, %s440
      $region60: #{transformer_encoder_with_pair.8} parent=55 // pred_fallthru
        _
      // Predicated region
      $region61: #{transformer_encoder_with_pair.8} parent=55 // pred_check
        %p442 = pneg %p179
      $region62: #{transformer_encoder_with_pair.8} parent=55 // pred_check_branch
        %444 = sbr.rel (%p442) target = $region64
      $region63: #{transformer_encoder_with_pair.8} parent=55 // pred_region
        %p445 = scmp.lt.s32.totalorder %s20, 1
        %s446 = scalar_select %p445, %s20, 1
        %s447 = smul.addr %s446, 4
        %s448 = scalar_lea.vmem %s6, %s447
      $region64: #{transformer_encoder_with_pair.8} parent=55 // pred_fallthru
        _
      // Predicated region
      $region65: #{transformer_encoder_with_pair.8} parent=55 // pred_check
        %p449 = pneg %p205
      $region66: #{transformer_encoder_with_pair.8} parent=55 // pred_check_branch
        %451 = sbr.rel (%p449) target = $region68
      $region67: #{transformer_encoder_with_pair.8} parent=55 // pred_region
        %p452 = scmp.lt.s32.totalorder %s20, 1
        %s453 = scalar_select %p452, %s20, 1
        %s454 = smul.addr %s453, 4
        %s455 = scalar_lea.vmem %s7, %s454
      $region68: #{transformer_encoder_with_pair.8} parent=55 // pred_fallthru
        _
    $region56: #{transformer_encoder_with_pair.8} parent=5 // pred_fallthru
      _
  $region6: #{transformer_encoder_with_pair.8} parent=0 // loop_footer
    %s18 = sadd.s32 1, %s14
  $region7: #{transformer_encoder_with_pair.8} parent=0 // loop_footer_branch
    %13 = sbr.rel target = $region3
  $region8: #{transformer_encoder_with_pair.8} parent=0 // loop_exit
    _

// kernel: transformer_encoder_with_pair.10
$region0: #{transformer_encoder_with_pair.10}
  #allocation0 [shape = 'u32[]', space=smem, size = 0x4, offset = 0x4, fixed_abs, tag = 'smem constant byte address 0x4 - core index']
  #allocation1 [shape = 'u32[144,128]{1,0:T(1,128)}', space=vmem, size = 0x12000, scoped, tag = 'internal scratch']
  %s0 = inlined_call_operand.vmem [shape: bf16[16,32], index: 0, kind: input, shape index: {}]
  %s1 = inlined_call_operand.vmem [shape: f32[16,32], index: 1, kind: input, shape index: {}]
  %s2 = inlined_call_operand.vmem [shape: bf16[32,32], index: 2, kind: input, shape index: {}]
  %s3 = inlined_call_operand.vmem [shape: f32[1,32], index: 3, kind: input, shape index: {}]
  %s4 = inlined_call_operand.vmem [shape: f32[1,32], index: 4, kind: input, shape index: {}]
  %s5 = inlined_call_operand.vmem [shape: f32[1,32], index: 5, kind: input, shape index: {}]
  %s6 = inlined_call_operand.vmem [shape: bf16[32,64], index: 6, kind: input, shape index: {}]
  %s7 = inlined_call_operand.vmem [shape: f32[1,64], index: 7, kind: input, shape index: {}]
  %s8 = inlined_call_operand.vmem [shape: bf16[64,32], index: 8, kind: input, shape index: {}]
  %s9 = inlined_call_operand.vmem [shape: f32[1,32], index: 9, kind: input, shape index: {}]
  %s10 = inlined_call_operand.vmem [shape: f32[16,32], index: 10, kind: output, shape index: {}]
  %s11 = sld [smem:[#allocation0]]
  $region73: #{transformer_encoder_with_pair.10} parent=0
    _
  %s13 = ssub.s32 1, %s11
  %s14 = scalar_select 0, %s13, %s11
  loop: start=0, step=1, limit=4
  $region2: #{transformer_encoder_with_pair.10} parent=0 // loop_pre_header
    _
  $region3: #{transformer_encoder_with_pair.10} parent=0 // loop_header
    %s16 = sphi 0, %s20
    %p17 = scmp.ge.s32.totalorder %s16, 4
    %s26 = sphi 0, %s28
    %s29 = sphi 0, %s26
    %s30 = sphi 0, %s29
    %s46 = sphi 0, %s30
    %s52 = sphi 0, %s54
    %s55 = sphi 0, %s52
    %s56 = sphi 0, %s55
    %s72 = sphi 0, %s56
    %s76 = sphi 0, %s76
    %s78 = sphi 0, %s76
    %s79 = sphi 0, %s78
    %s93 = sphi 0, %s79
    %s97 = sphi 0, %s97
    %s99 = sphi 0, %s97
    %s100 = sphi 0, %s99
    %s114 = sphi 0, %s100
    %s118 = sphi 0, %s118
    %s120 = sphi 0, %s118
    %s121 = sphi 0, %s120
    %s135 = sphi 0, %s121
    %s139 = sphi 0, %s139
    %s141 = sphi 0, %s139
    %s142 = sphi 0, %s141
    %s156 = sphi 0, %s142
    %s160 = sphi 0, %s160
    %s162 = sphi 0, %s160
    %s163 = sphi 0, %s162
    %s177 = sphi 0, %s163
    %s181 = sphi 0, %s181
    %s183 = sphi 0, %s181
    %s184 = sphi 0, %s183
    %s198 = sphi 0, %s184
    %s202 = sphi 0, %s202
    %s204 = sphi 0, %s202
    %s205 = sphi 0, %s204
    %s219 = sphi 0, %s205
    %s223 = sphi 0, %s223
    %s225 = sphi 0, %s223
    %s226 = sphi 0, %s225
    %s240 = sphi 0, %s226
    %s246 = sphi 0, %s248
    %s249 = sphi 0, %s246
    %s250 = sphi 0, %s249
    %s266 = sphi 0, %s250
  $region4: #{transformer_encoder_with_pair.10} parent=0 // loop_header_branch
    %19 = sbr.rel (%p17) target = $region8
  $region5: #{transformer_encoder_with_pair.10} parent=0 // loop_body
    %s21 = ssub.s32 %s16, 1
    %s22 = ssub.s32 %s16, 2
    %s23 = sadd.s32 %s16, 1
    %s24 = ssub.s32 %s16, %s23
    %p25 = scmp.eq.s32.totalorder %s24, 0
    %s27 = sadd.s32 %s26, 1
    %s28 = scalar_select %p25, %s26, %s27
    %p31 = pneg %p25
    %p32 = scmp.eq.s32.totalorder %s16, 1
    %p33 = por %p31, %p32
    %p34 = scmp.ne.s32.totalorder %s26, %s29
    %p35 = scmp.eq.s32.totalorder %s16, 0
    %p36 = por %p34, %p35
    %p37 = scmp.ne.s32.totalorder %s26, %s29
    %p38 = scmp.eq.s32.totalorder %s21, 1
    %p39 = por %p37, %p38
    %p40 = scmp.ne.s32.totalorder %s29, %s30
    %p41 = scmp.eq.s32.totalorder %s21, 0
    %p42 = por %p40, %p41
    %p43 = scmp.ne.s32.totalorder %s29, %s30
    %p44 = scmp.eq.s32.totalorder %s22, 1
    %p45 = por %p43, %p44
    %p47 = scmp.ne.s32.totalorder %s30, %s46
    %p48 = scmp.eq.s32.totalorder %s22, 0
    %p49 = por %p47, %p48
    %s50 = ssub.s32 %s16, %s23
    %p51 = scmp.eq.s32.totalorder %s50, 0
    %s53 = sadd.s32 %s52, 1
    %s54 = scalar_select %p51, %s52, %s53
    %p57 = pneg %p51
    %p58 = scmp.eq.s32.totalorder %s16, 1
    %p59 = por %p57, %p58
    %p60 = scmp.ne.s32.totalorder %s52, %s55
    %p61 = scmp.eq.s32.totalorder %s16, 0
    %p62 = por %p60, %p61
    %p63 = scmp.ne.s32.totalorder %s52, %s55
    %p64 = scmp.eq.s32.totalorder %s21, 1
    %p65 = por %p63, %p64
    %p66 = scmp.ne.s32.totalorder %s55, %s56
    %p67 = scmp.eq.s32.totalorder %s21, 0
    %p68 = por %p66, %p67
    %p69 = scmp.ne.s32.totalorder %s55, %s56
    %p70 = scmp.eq.s32.totalorder %s22, 1
    %p71 = por %p69, %p70
    %p73 = scmp.ne.s32.totalorder %s56, %s72
    %p74 = scmp.eq.s32.totalorder %s22, 0
    %p75 = por %p73, %p74
    %s77 = sadd.s32 %s76, 1
    %p80 = scmp.eq.s32.totalorder %s16, 1
    %p81 = scmp.ne.s32.totalorder %s76, %s78
    %p82 = scmp.eq.s32.totalorder %s16, 0
    %p83 = por %p81, %p82
    %p84 = scmp.ne.s32.totalorder %s76, %s78
    %p85 = scmp.eq.s32.totalorder %s21, 1
    %p86 = por %p84, %p85
    %p87 = scmp.ne.s32.totalorder %s78, %s79
    %p88 = scmp.eq.s32.totalorder %s21, 0
    %p89 = por %p87, %p88
    %p90 = scmp.ne.s32.totalorder %s78, %s79
    %p91 = scmp.eq.s32.totalorder %s22, 1
    %p92 = por %p90, %p91
    %p94 = scmp.ne.s32.totalorder %s79, %s93
    %p95 = scmp.eq.s32.totalorder %s22, 0
    %p96 = por %p94, %p95
    %s98 = sadd.s32 %s97, 1
    %p101 = scmp.eq.s32.totalorder %s16, 1
    %p102 = scmp.ne.s32.totalorder %s97, %s99
    %p103 = scmp.eq.s32.totalorder %s16, 0
    %p104 = por %p102, %p103
    %p105 = scmp.ne.s32.totalorder %s97, %s99
    %p106 = scmp.eq.s32.totalorder %s21, 1
    %p107 = por %p105, %p106
    %p108 = scmp.ne.s32.totalorder %s99, %s100
    %p109 = scmp.eq.s32.totalorder %s21, 0
    %p110 = por %p108, %p109
    %p111 = scmp.ne.s32.totalorder %s99, %s100
    %p112 = scmp.eq.s32.totalorder %s22, 1
    %p113 = por %p111, %p112
    %p115 = scmp.ne.s32.totalorder %s100, %s114
    %p116 = scmp.eq.s32.totalorder %s22, 0
    %p117 = por %p115, %p116
    %s119 = sadd.s32 %s118, 1
    %p122 = scmp.eq.s32.totalorder %s16, 1
    %p123 = scmp.ne.s32.totalorder %s118, %s120
    %p124 = scmp.eq.s32.totalorder %s16, 0
    %p125 = por %p123, %p124
    %p126 = scmp.ne.s32.totalorder %s118, %s120
    %p127 = scmp.eq.s32.totalorder %s21, 1
    %p128 = por %p126, %p127
    %p129 = scmp.ne.s32.totalorder %s120, %s121
    %p130 = scmp.eq.s32.totalorder %s21, 0
    %p131 = por %p129, %p130
    %p132 = scmp.ne.s32.totalorder %s120, %s121
    %p133 = scmp.eq.s32.totalorder %s22, 1
    %p134 = por %p132, %p133
    %p136 = scmp.ne.s32.totalorder %s121, %s135
    %p137 = scmp.eq.s32.totalorder %s22, 0
    %p138 = por %p136, %p137
    %s140 = sadd.s32 %s139, 1
    %p143 = scmp.eq.s32.totalorder %s16, 1
    %p144 = scmp.ne.s32.totalorder %s139, %s141
    %p145 = scmp.eq.s32.totalorder %s16, 0
    %p146 = por %p144, %p145
    %p147 = scmp.ne.s32.totalorder %s139, %s141
    %p148 = scmp.eq.s32.totalorder %s21, 1
    %p149 = por %p147, %p148
    %p150 = scmp.ne.s32.totalorder %s141, %s142
    %p151 = scmp.eq.s32.totalorder %s21, 0
    %p152 = por %p150, %p151
    %p153 = scmp.ne.s32.totalorder %s141, %s142
    %p154 = scmp.eq.s32.totalorder %s22, 1
    %p155 = por %p153, %p154
    %p157 = scmp.ne.s32.totalorder %s142, %s156
    %p158 = scmp.eq.s32.totalorder %s22, 0
    %p159 = por %p157, %p158
    %s161 = sadd.s32 %s160, 1
    %p164 = scmp.eq.s32.totalorder %s16, 1
    %p165 = scmp.ne.s32.totalorder %s160, %s162
    %p166 = scmp.eq.s32.totalorder %s16, 0
    %p167 = por %p165, %p166
    %p168 = scmp.ne.s32.totalorder %s160, %s162
    %p169 = scmp.eq.s32.totalorder %s21, 1
    %p170 = por %p168, %p169
    %p171 = scmp.ne.s32.totalorder %s162, %s163
    %p172 = scmp.eq.s32.totalorder %s21, 0
    %p173 = por %p171, %p172
    %p174 = scmp.ne.s32.totalorder %s162, %s163
    %p175 = scmp.eq.s32.totalorder %s22, 1
    %p176 = por %p174, %p175
    %p178 = scmp.ne.s32.totalorder %s163, %s177
    %p179 = scmp.eq.s32.totalorder %s22, 0
    %p180 = por %p178, %p179
    %s182 = sadd.s32 %s181, 1
    %p185 = scmp.eq.s32.totalorder %s16, 1
    %p186 = scmp.ne.s32.totalorder %s181, %s183
    %p187 = scmp.eq.s32.totalorder %s16, 0
    %p188 = por %p186, %p187
    %p189 = scmp.ne.s32.totalorder %s181, %s183
    %p190 = scmp.eq.s32.totalorder %s21, 1
    %p191 = por %p189, %p190
    %p192 = scmp.ne.s32.totalorder %s183, %s184
    %p193 = scmp.eq.s32.totalorder %s21, 0
    %p194 = por %p192, %p193
    %p195 = scmp.ne.s32.totalorder %s183, %s184
    %p196 = scmp.eq.s32.totalorder %s22, 1
    %p197 = por %p195, %p196
    %p199 = scmp.ne.s32.totalorder %s184, %s198
    %p200 = scmp.eq.s32.totalorder %s22, 0
    %p201 = por %p199, %p200
    %s203 = sadd.s32 %s202, 1
    %p206 = scmp.eq.s32.totalorder %s16, 1
    %p207 = scmp.ne.s32.totalorder %s202, %s204
    %p208 = scmp.eq.s32.totalorder %s16, 0
    %p209 = por %p207, %p208
    %p210 = scmp.ne.s32.totalorder %s202, %s204
    %p211 = scmp.eq.s32.totalorder %s21, 1
    %p212 = por %p210, %p211
    %p213 = scmp.ne.s32.totalorder %s204, %s205
    %p214 = scmp.eq.s32.totalorder %s21, 0
    %p215 = por %p213, %p214
    %p216 = scmp.ne.s32.totalorder %s204, %s205
    %p217 = scmp.eq.s32.totalorder %s22, 1
    %p218 = por %p216, %p217
    %p220 = scmp.ne.s32.totalorder %s205, %s219
    %p221 = scmp.eq.s32.totalorder %s22, 0
    %p222 = por %p220, %p221
    %s224 = sadd.s32 %s223, 1
    %p227 = scmp.eq.s32.totalorder %s16, 1
    %p228 = scmp.ne.s32.totalorder %s223, %s225
    %p229 = scmp.eq.s32.totalorder %s16, 0
    %p230 = por %p228, %p229
    %p231 = scmp.ne.s32.totalorder %s223, %s225
    %p232 = scmp.eq.s32.totalorder %s21, 1
    %p233 = por %p231, %p232
    %p234 = scmp.ne.s32.totalorder %s225, %s226
    %p235 = scmp.eq.s32.totalorder %s21, 0
    %p236 = por %p234, %p235
    %p237 = scmp.ne.s32.totalorder %s225, %s226
    %p238 = scmp.eq.s32.totalorder %s22, 1
    %p239 = por %p237, %p238
    %p241 = scmp.ne.s32.totalorder %s226, %s240
    %p242 = scmp.eq.s32.totalorder %s22, 0
    %p243 = por %p241, %p242
    %s244 = ssub.s32 %s16, %s23
    %p245 = scmp.eq.s32.totalorder %s244, 0
    %s247 = sadd.s32 %s246, 1
    %s248 = scalar_select %p245, %s246, %s247
    %p251 = pneg %p245
    %p252 = scmp.eq.s32.totalorder %s16, 1
    %p253 = por %p251, %p252
    %p254 = scmp.ne.s32.totalorder %s246, %s249
    %p255 = scmp.eq.s32.totalorder %s16, 0
    %p256 = por %p254, %p255
    %p257 = scmp.ne.s32.totalorder %s246, %s249
    %p258 = scmp.eq.s32.totalorder %s21, 1
    %p259 = por %p257, %p258
    %p260 = scmp.ne.s32.totalorder %s249, %s250
    %p261 = scmp.eq.s32.totalorder %s21, 0
    %p262 = por %p260, %p261
    %p263 = scmp.ne.s32.totalorder %s249, %s250
    %p264 = scmp.eq.s32.totalorder %s22, 1
    %p265 = por %p263, %p264
    %p267 = scmp.ne.s32.totalorder %s250, %s266
    %p268 = scmp.eq.s32.totalorder %s22, 0
    %p269 = por %p267, %p268
    %p270 = scmp.le.s32.totalorder 1, %s16
    %p271 = scmp.lt.s32.totalorder %s16, 3
    %p272 = pnand %p270, %p271
    %p273 = pneg %p272
    // Predicated region
    $region9: #{transformer_encoder_with_pair.10} parent=5 // pred_check
      _
    $region10: #{transformer_encoder_with_pair.10} parent=5 // pred_check_branch
      %275 = sbr.rel (%p272) target = $region12
    $region11: #{transformer_encoder_with_pair.10} parent=5 // pred_region
      %s276 = ssub.s32 %s16, 1
      // Predicated region
      $region13: #{transformer_encoder_with_pair.10} parent=11 // pred_check
        %p277 = pneg %p89
      $region14: #{transformer_encoder_with_pair.10} parent=11 // pred_check_branch
        %279 = sbr.rel (%p277) target = $region16
      $region15: #{transformer_encoder_with_pair.10} parent=11 // pred_region
        _
      $region16: #{transformer_encoder_with_pair.10} parent=11 // pred_fallthru
        _
      // Predicated region
      $region17: #{transformer_encoder_with_pair.10} parent=11 // pred_check
        %p280 = pneg %p110
      $region18: #{transformer_encoder_with_pair.10} parent=11 // pred_check_branch
        %282 = sbr.rel (%p280) target = $region20
      $region19: #{transformer_encoder_with_pair.10} parent=11 // pred_region
        _
      $region20: #{transformer_encoder_with_pair.10} parent=11 // pred_fallthru
        _
      // Predicated region
      $region21: #{transformer_encoder_with_pair.10} parent=11 // pred_check
        %p283 = pneg %p131
      $region22: #{transformer_encoder_with_pair.10} parent=11 // pred_check_branch
        %285 = sbr.rel (%p283) target = $region24
      $region23: #{transformer_encoder_with_pair.10} parent=11 // pred_region
        _
      $region24: #{transformer_encoder_with_pair.10} parent=11 // pred_fallthru
        _
      // Predicated region
      $region25: #{transformer_encoder_with_pair.10} parent=11 // pred_check
        %p286 = pneg %p152
      $region26: #{transformer_encoder_with_pair.10} parent=11 // pred_check_branch
        %288 = sbr.rel (%p286) target = $region28
      $region27: #{transformer_encoder_with_pair.10} parent=11 // pred_region
        _
      $region28: #{transformer_encoder_with_pair.10} parent=11 // pred_fallthru
        _
      // Predicated region
      $region29: #{transformer_encoder_with_pair.10} parent=11 // pred_check
        %p289 = pneg %p173
      $region30: #{transformer_encoder_with_pair.10} parent=11 // pred_check_branch
        %291 = sbr.rel (%p289) target = $region32
      $region31: #{transformer_encoder_with_pair.10} parent=11 // pred_region
        _
      $region32: #{transformer_encoder_with_pair.10} parent=11 // pred_fallthru
        _
      // Predicated region
      $region33: #{transformer_encoder_with_pair.10} parent=11 // pred_check
        %p292 = pneg %p194
      $region34: #{transformer_encoder_with_pair.10} parent=11 // pred_check_branch
        %294 = sbr.rel (%p292) target = $region36
      $region35: #{transformer_encoder_with_pair.10} parent=11 // pred_region
        _
      $region36: #{transformer_encoder_with_pair.10} parent=11 // pred_fallthru
        _
      // Predicated region
      $region37: #{transformer_encoder_with_pair.10} parent=11 // pred_check
        %p295 = pneg %p215
      $region38: #{transformer_encoder_with_pair.10} parent=11 // pred_check_branch
        %297 = sbr.rel (%p295) target = $region40
      $region39: #{transformer_encoder_with_pair.10} parent=11 // pred_region
        _
      $region40: #{transformer_encoder_with_pair.10} parent=11 // pred_fallthru
        _
      // Predicated region
      $region41: #{transformer_encoder_with_pair.10} parent=11 // pred_check
        %p298 = pneg %p236
      $region42: #{transformer_encoder_with_pair.10} parent=11 // pred_check_branch
        %300 = sbr.rel (%p298) target = $region44
      $region43: #{transformer_encoder_with_pair.10} parent=11 // pred_region
        _
      $region44: #{transformer_encoder_with_pair.10} parent=11 // pred_fallthru
        _
    $region12: #{transformer_encoder_with_pair.10} parent=5 // pred_fallthru
      _
    %p301 = scmp.lt.s32.totalorder %s16, 2
    // Predicated region
    $region45: #{transformer_encoder_with_pair.10} parent=5 // pred_check
      %p302 = pneg %p301
    $region46: #{transformer_encoder_with_pair.10} parent=5 // pred_check_branch
      %304 = sbr.rel (%p302) target = $region48
    $region47: #{transformer_encoder_with_pair.10} parent=5 // pred_region
      // Predicated region
      $region49: #{transformer_encoder_with_pair.10} parent=47 // pred_check
        %p305 = pneg %p36
      $region50: #{transformer_encoder_with_pair.10} parent=47 // pred_check_branch
        %307 = sbr.rel (%p305) target = $region52
      $region51: #{transformer_encoder_with_pair.10} parent=47 // pred_region
        %p308 = scmp.lt.s32.totalorder %s16, 1
        %s309 = scalar_select %p308, %s16, 1
        %s310 = smul.addr %s309, 4
        %s311 = scalar_lea.vmem %s0, %s310
      $region52: #{transformer_encoder_with_pair.10} parent=47 // pred_fallthru
        _
      // Predicated region
      $region53: #{transformer_encoder_with_pair.10} parent=47 // pred_check
        %p312 = pneg %p62
      $region54: #{transformer_encoder_with_pair.10} parent=47 // pred_check_branch
        %314 = sbr.rel (%p312) target = $region56
      $region55: #{transformer_encoder_with_pair.10} parent=47 // pred_region
        %p315 = scmp.lt.s32.totalorder %s16, 1
        %s316 = scalar_select %p315, %s16, 1
        %s317 = smul.addr %s316, 8
        %s318 = scalar_lea.vmem %s1, %s317
      $region56: #{transformer_encoder_with_pair.10} parent=47 // pred_fallthru
        _
    $region48: #{transformer_encoder_with_pair.10} parent=5 // pred_fallthru
      _
    %p319 = scmp.le.s32.totalorder 1, %s16
    %p320 = scmp.lt.s32.totalorder %s16, 3
    %p321 = pnand %p319, %p320
    %p322 = pneg %p321
    // Predicated region
    $region57: #{transformer_encoder_with_pair.10} parent=5 // pred_check
      _
    $region58: #{transformer_encoder_with_pair.10} parent=5 // pred_check_branch
      %324 = sbr.rel (%p321) target = $region60
    $region59: #{transformer_encoder_with_pair.10} parent=5 // pred_region
      %s325 = ssub.s32 %s16, 1
      %p326 = scmp.lt.s32.totalorder %s21, 1
      %s327 = scalar_select %p326, %s21, 1
      %s328 = smul.addr %s327, 4
      %s329 = scalar_lea.vmem %s0, %s328
      %p330 = pneg %p42
      %p331 = pneg %p39
      %p332 = scmp.lt.s32.totalorder %s21, 1
      %s333 = scalar_select %p332, %s21, 1
      %s334 = smul.addr %s333, 8
      %s335 = scalar_lea.vmem %s1, %s334
      %p336 = pneg %p68
      %p337 = pneg %p65
      %p338 = pneg %p89
      %p339 = pneg %p86
      %p340 = pneg %p110
      %p341 = pneg %p107
      %p342 = pneg %p131
      %p343 = pneg %p128
      %p344 = pneg %p152
      %p345 = pneg %p149
      %p346 = pneg %p173
      %p347 = pneg %p170
      %p348 = pneg %p194
      %p349 = pneg %p191
      %p350 = pneg %p215
      %p351 = pneg %p212
      %p352 = pneg %p236
      %p353 = pneg %p233
      %p354 = pneg %p262
      %p355 = pneg %p259
      %p356 = scmp.lt.s32.totalorder %s21, 1
      %s357 = scalar_select %p356, %s21, 1
      %s358 = smul.addr %s357, 8
      %s359 = scalar_lea.vmem %s10, %s358
      %p360 = scmp.lt.s32.totalorder %s21, 1
      %s361 = scalar_select %p360, %s21, 1
      %s362 = smul.addr %s361, 4
      %s363 = scalar_lea.vmem %s0, %s362
      %p364 = scmp.lt.s32.totalorder %s21, 1
      %s365 = scalar_select %p364, %s21, 1
      %s366 = smul.addr %s365, 8
      %s367 = scalar_lea.vmem %s1, %s366
      %p368 = scmp.lt.s32.totalorder %s21, 1
      %s369 = scalar_select %p368, %s21, 1
      %s370 = smul.addr %s369, 8
      %s371 = scalar_lea.vmem %s10, %s370
      %v373 = vld [vmem:[%s363] sm:$0xf]
      %v374 = vld [vmem:[%s2] sm:$0xf]
      %v375 = vld [vmem:[%s2 + $0x4] sm:$0xf]
      %v376 = vld [vmem:[%s2 + $0x8] sm:$0xf]
      %v377 = vld [vmem:[%s2 + $0xc] sm:$0xf]
      %v378 = vld [vmem:[%s3] sm:$0x1]
      %v380 = vlaneseq
      %v381 = vshrl.u32 %v380, 7
      %v382 = vsub.s32 0, %v381
      %v383 = vrot.slane %v378, %v382
      %v389 = vunpack.c.l.b16 %v374
      %v390 = vunpack.c.l.b16 %v375
      %v391 = vunpack.c.l.b16 %v376
      %v392 = vunpack.c.l.b16 %v377
      %v393 = vpack.c.b16 %v390, %v389
      %v394 = vpack.c.b16 %v392, %v391
      %vm397 = vcmask 261120
      %v399 = vsel %vm397, %v373, 0
      %401 = vmatprep.subr.bf16.mxu0 0
      %402 = vmatpush1.bf16.msra.mxu0 %v393
      %403 = vmatprep.subr.bf16.mxu0 0
      %404 = vmatpush1.bf16.msra.mxu0 %v394
      %405 = vmatprep.subr.bf16.mxu0 0
      %406 = vmatpush1.bf16.msra.mxu0 0
      %407 = vmatprep.subr.bf16.mxu0 0
      %408 = vmatpush1.bf16.msra.mxu0 0
      %409 = vmatprep.subr.bf16.mxu0 0
      %410 = vmatpush1.bf16.msra.mxu0 0
      %411 = vmatprep.subr.bf16.mxu0 0
      %412 = vmatpush1.bf16.msra.mxu0 0
      %413 = vmatprep.subr.bf16.mxu0 0
      %414 = vmatpush1.bf16.msra.mxu0 0
      %415 = vmatprep.subr.bf16.mxu0 0
      %416 = vmatpush1.bf16.msra.mxu0 0
      %417 = vmatprep.subr.bf16.mxu0 0
      %418 = vmatpush1.bf16.msra.mxu0 0
      %419 = vmatprep.subr.bf16.mxu0 0
      %420 = vmatpush1.bf16.msra.mxu0 0
      %421 = vmatprep.subr.bf16.mxu0 0
      %422 = vmatpush1.bf16.msra.mxu0 0
      %423 = vmatprep.subr.bf16.mxu0 0
      %424 = vmatpush1.bf16.msra.mxu0 0
      %425 = vmatprep.subr.bf16.mxu0 0
      %426 = vmatpush1.bf16.msra.mxu0 0
      %427 = vmatprep.subr.bf16.mxu0 0
      %428 = vmatpush1.bf16.msra.mxu0 0
      %429 = vmatprep.subr.bf16.mxu0 0
      %430 = vmatpush1.bf16.msra.mxu0 0
      %431 = vmatprep.subr.bf16.mxu0 0
      %432 = vmatpush1.bf16.msra.mxu0 0
      %433 = vmatprep.mubr.bf16.mxu0 0
      %434 = vmatmul.mubr.bf16.gmra.mrb[0].mxu0 %v399
      %v435 = vpop.f32.mrb[0].mxu0
      %v436 = vadd.f32 %v383, %v435
      %v437 = vpop.f32.mrb[0].mxu0
      %v438 = vpop.f32.mrb[0].mxu0
      %v439 = vpop.f32.mrb[0].mxu0
      %440 = vdwg.mxu0
      %v441 = vld [vmem:[%s367] sm:$0xff]
      %v442 = vadd.f32 %v441, %v436
      %v443 = vld [vmem:[%s4] sm:$0x1]
      %v444 = vld [vmem:[%s5] sm:$0x1]
      %v445 = vsel %vm397, %v442, 0.0
      %446 = vadd.xlane.f32.xlu0 %v445
      %v447 = vpop.xlane.xlu0 %446
      %v448 = vrcp.pop 32.0
      %v449 = vmul.f32 %v447, %v448
      %v450 = vsub.f32 %v442, %v449
      %v451 = vmul.f32 %v450, %v450
      %v452 = vsel %vm397, %v451, 0.0
      %453 = vadd.xlane.f32.xlu0 %v452
      %v454 = vpop.xlane.xlu0 %453
      %v455 = vmul.f32 %v454, %v448
      %v456 = vadd.f32 %v455, 1e-05
      %v457 = vrsqrt.pop %v456
      %v458 = vmul.f32 %v450, %v457
      %v460 = vlaneseq
      %v461 = vshrl.u32 %v460, 7
      %v462 = vsub.s32 0, %v461
      %v463 = vrot.slane %v443, %v462
      %v465 = vmul.f32 %v458, %v463
      %v467 = vlaneseq
      %v468 = vshrl.u32 %v467, 7
      %v469 = vsub.s32 0, %v468
      %v470 = vrot.slane %v444, %v469
      %v472 = vadd.f32 %v465, %v470
      %v473 = vpack.c.bf16 %v472, %v472
      %v474 = vld [vmem:[%s6] sm:$0xf]
      %v475 = vld [vmem:[%s6 + $0x4] sm:$0xf]
      %v476 = vld [vmem:[%s6 + $0x8] sm:$0xf]
      %v477 = vld [vmem:[%s6 + $0xc] sm:$0xf]
      %v478 = vld [vmem:[%s7] sm:$0x1]
      %v480 = vlaneseq
      %v481 = vshrl.u32 %v480, 7
      %v482 = vsub.s32 0, %v481
      %v483 = vrot.slane %v478, %v482
      %v489 = vunpack.c.l.b16 %v474
      %v490 = vunpack.c.l.b16 %v475
      %v491 = vunpack.c.l.b16 %v476
      %v492 = vunpack.c.l.b16 %v477
      %v493 = vpack.c.b16 %v490, %v489
      %v494 = vpack.c.b16 %v492, %v491
      %v498 = vsel %vm397, %v473, 0
      %500 = vmatprep.subr.bf16.mxu0 0
      %501 = vmatpush1.bf16.msra.mxu0 %v493
      %502 = vmatprep.subr.bf16.mxu0 0
      %503 = vmatpush1.bf16.msra.mxu0 %v494
      %504 = vmatprep.subr.bf16.mxu0 0
      %505 = vmatpush1.bf16.msra.mxu0 0
      %506 = vmatprep.subr.bf16.mxu0 0
      %507 = vmatpush1.bf16.msra.mxu0 0
      %508 = vmatprep.subr.bf16.mxu0 0
      %509 = vmatpush1.bf16.msra.mxu0 0
      %510 = vmatprep.subr.bf16.mxu0 0
      %511 = vmatpush1.bf16.msra.mxu0 0
      %512 = vmatprep.subr.bf16.mxu0 0
      %513 = vmatpush1.bf16.msra.mxu0 0
      %514 = vmatprep.subr.bf16.mxu0 0
      %515 = vmatpush1.bf16.msra.mxu0 0
      %516 = vmatprep.subr.bf16.mxu0 0
      %517 = vmatpush1.bf16.msra.mxu0 0
      %518 = vmatprep.subr.bf16.mxu0 0
      %519 = vmatpush1.bf16.msra.mxu0 0
      %520 = vmatprep.subr.bf16.mxu0 0
      %521 = vmatpush1.bf16.msra.mxu0 0
      %522 = vmatprep.subr.bf16.mxu0 0
      %523 = vmatpush1.bf16.msra.mxu0 0
      %524 = vmatprep.subr.bf16.mxu0 0
      %525 = vmatpush1.bf16.msra.mxu0 0
      %526 = vmatprep.subr.bf16.mxu0 0
      %527 = vmatpush1.bf16.msra.mxu0 0
      %528 = vmatprep.subr.bf16.mxu0 0
      %529 = vmatpush1.bf16.msra.mxu0 0
      %530 = vmatprep.subr.bf16.mxu0 0
      %531 = vmatpush1.bf16.msra.mxu0 0
      %532 = vmatprep.mubr.bf16.mxu0 0
      %533 = vmatmul.mubr.bf16.gmra.mrb[0].mxu0 %v498
      %v534 = vpop.f32.mrb[0].mxu0
      %v535 = vadd.f32 %v483, %v534
      %v536 = vpop.f32.mrb[0].mxu0
      %v537 = vpop.f32.mrb[0].mxu0
      %v538 = vpop.f32.mrb[0].mxu0
      %539 = vdwg.mxu0
      %v540 = vmul.f32 %v535, 0.5
      %v541 = vmul.f32 %v535, 0.70710677
      %v542 = vand.u32 2147483647, %v541
      %v543 = vmul.f32 %v542, 0.3275911
      %v544 = vadd.f32 %v543, 1.0
      %v545 = vrcp.pop %v544
      %v546 = vmul.f32 1.0, %v545
      %v547 = vmul.f32 %v546, 1.0614054
      %v548 = vadd.f32 %v547, -1.4531521
      %v549 = vmul.f32 %v548, %v546
      %v550 = vadd.f32 %v549, 1.4214138
      %v551 = vmul.f32 %v550, %v546
      %v552 = vadd.f32 %v551, -0.28449672
      %v553 = vmul.f32 %v552, %v546
      %v554 = vadd.f32 %v553, 0.2548296
      %v555 = vmul.f32 %v554, %v546
      %v556 = vsub.f32 0.0, %v542
      %v557 = vmul.f32 %v556, %v542
      %v558 = vmul.f32 %v557, 1.442695
      %v559 = vpow.pop %v558
      %v560 = vmul.f32 %v555, %v559
      %v561 = vsub.f32 1.0, %v560
      %vm562 = vcmp.ge.f32.partialorder %v541, 0.0
      %v563 = vsub.f32 0.0, %v561
      %v564 = vsel %vm562, %v561, %v563
      %v565 = vadd.f32 %v564, 1.0
      %v566 = vmul.f32 %v540, %v565
      %v567 = vpack.c.bf16 %v566, %v566
      %v568 = vld [vmem:[%s8] sm:$0xf]
      %v569 = vld [vmem:[%s8 + $0x4] sm:$0xf]
      %v570 = vld [vmem:[%s8 + $0x8] sm:$0xf]
      %v571 = vld [vmem:[%s8 + $0xc] sm:$0xf]
      %v572 = vld [vmem:[%s8 + $0x10] sm:$0xf]
      %v573 = vld [vmem:[%s8 + $0x14] sm:$0xf]
      %v574 = vld [vmem:[%s8 + $0x18] sm:$0xf]
      %v575 = vld [vmem:[%s8 + $0x1c] sm:$0xf]
      %v576 = vld [vmem:[%s9] sm:$0x1]
      %v578 = vlaneseq
      %v579 = vshrl.u32 %v578, 7
      %v580 = vsub.s32 0, %v579
      %v581 = vrot.slane %v576, %v580
      %v591 = vunpack.c.l.b16 %v568
      %v592 = vunpack.c.l.b16 %v569
      %v593 = vunpack.c.l.b16 %v570
      %v594 = vunpack.c.l.b16 %v571
      %v595 = vunpack.c.l.b16 %v572
      %v596 = vunpack.c.l.b16 %v573
      %v597 = vunpack.c.l.b16 %v574
      %v598 = vunpack.c.l.b16 %v575
      %v599 = vpack.c.b16 %v592, %v591
      %v600 = vpack.c.b16 %v594, %v593
      %v601 = vpack.c.b16 %v596, %v595
      %v602 = vpack.c.b16 %v598, %v597
      %vm607 = vcmask 523264
      %v609 = vsel %vm607, %v567, 0
      %611 = vmatprep.subr.bf16.mxu0 0
      %612 = vmatpush1.bf16.msra.mxu0 %v599
      %613 = vmatprep.subr.bf16.mxu0 0
      %614 = vmatpush1.bf16.msra.mxu0 %v600
      %615 = vmatprep.subr.bf16.mxu0 0
      %616 = vmatpush1.bf16.msra.mxu0 %v601
      %617 = vmatprep.subr.bf16.mxu0 0
      %618 = vmatpush1.bf16.msra.mxu0 %v602
      %619 = vmatprep.subr.bf16.mxu0 0
      %620 = vmatpush1.bf16.msra.mxu0 0
      %621 = vmatprep.subr.bf16.mxu0 0
      %622 = vmatpush1.bf16.msra.mxu0 0
      %623 = vmatprep.subr.bf16.mxu0 0
      %624 = vmatpush1.bf16.msra.mxu0 0
      %625 = vmatprep.subr.bf16.mxu0 0
      %626 = vmatpush1.bf16.msra.mxu0 0
      %627 = vmatprep.subr.bf16.mxu0 0
      %628 = vmatpush1.bf16.msra.mxu0 0
      %629 = vmatprep.subr.bf16.mxu0 0
      %630 = vmatpush1.bf16.msra.mxu0 0
      %631 = vmatprep.subr.bf16.mxu0 0
      %632 = vmatpush1.bf16.msra.mxu0 0
      %633 = vmatprep.subr.bf16.mxu0 0
      %634 = vmatpush1.bf16.msra.mxu0 0
      %635 = vmatprep.subr.bf16.mxu0 0
      %636 = vmatpush1.bf16.msra.mxu0 0
      %637 = vmatprep.subr.bf16.mxu0 0
      %638 = vmatpush1.bf16.msra.mxu0 0
      %639 = vmatprep.subr.bf16.mxu0 0
      %640 = vmatpush1.bf16.msra.mxu0 0
      %641 = vmatprep.subr.bf16.mxu0 0
      %642 = vmatpush1.bf16.msra.mxu0 0
      %643 = vmatprep.mubr.bf16.mxu0 0
      %644 = vmatmul.mubr.bf16.gmra.mrb[0].mxu0 %v609
      %v645 = vpop.f32.mrb[0].mxu0
      %v646 = vadd.f32 %v581, %v645
      %v647 = vpop.f32.mrb[0].mxu0
      %v648 = vpop.f32.mrb[0].mxu0
      %v649 = vpop.f32.mrb[0].mxu0
      %650 = vdwg.mxu0
      %v651 = vadd.f32 %v442, %v646
      %652 = vst.msk [vmem:[%s371] sm:$0xff] %vm397, %v651
      %p653 = scmp.lt.s32.totalorder %s21, 1
      %s654 = scalar_select %p653, %s21, 1
      %s655 = smul.addr %s654, 8
      %s656 = scalar_lea.vmem %s10, %s655
      // Predicated region
      $region61: #{transformer_encoder_with_pair.10} parent=59 // pred_check
        %p657 = pneg %p259
      $region62: #{transformer_encoder_with_pair.10} parent=59 // pred_check_branch
        %659 = sbr.rel (%p657) target = $region64
      $region63: #{transformer_encoder_with_pair.10} parent=59 // pred_region
        _
      $region64: #{transformer_encoder_with_pair.10} parent=59 // pred_fallthru
        _
    $region60: #{transformer_encoder_with_pair.10} parent=5 // pred_fallthru
      _
    %p660 = scmp.le.s32.totalorder 2, %s16
    // Predicated region
    $region65: #{transformer_encoder_with_pair.10} parent=5 // pred_check
      %p661 = pneg %p660
    $region66: #{transformer_encoder_with_pair.10} parent=5 // pred_check_branch
      %663 = sbr.rel (%p661) target = $region68
    $region67: #{transformer_encoder_with_pair.10} parent=5 // pred_region
      %s664 = ssub.s32 %s16, 2
      // Predicated region
      $region69: #{transformer_encoder_with_pair.10} parent=67 // pred_check
        %p665 = pneg %p265
      $region70: #{transformer_encoder_with_pair.10} parent=67 // pred_check_branch
        %667 = sbr.rel (%p665) target = $region72
      $region71: #{transformer_encoder_with_pair.10} parent=67 // pred_region
        %p668 = scmp.lt.s32.totalorder %s22, 1
        %s669 = scalar_select %p668, %s22, 1
        %s670 = smul.addr %s669, 8
        %s671 = scalar_lea.vmem %s10, %s670
      $region72: #{transformer_encoder_with_pair.10} parent=67 // pred_fallthru
        _
    $region68: #{transformer_encoder_with_pair.10} parent=5 // pred_fallthru
      _
  $region6: #{transformer_encoder_with_pair.10} parent=0 // loop_footer
    %s20 = sadd.s32 1, %s16
  $region7: #{transformer_encoder_with_pair.10} parent=0 // loop_footer_branch
    %15 = sbr.rel target = $region3
  $region8: #{transformer_encoder_with_pair.10} parent=0 // loop_exit
    _

// kernel: transformer_encoder_with_pair.9
$region0: #{transformer_encoder_with_pair.9}
  #allocation0 [shape = 'u32[]', space=smem, size = 0x4, offset = 0x4, fixed_abs, tag = 'smem constant byte address 0x4 - core index']
  #allocation1 [shape = 'u32[144,128]{1,0:T(1,128)}', space=vmem, size = 0x12000, scoped, tag = 'internal scratch']
  %s0 = inlined_call_operand.vmem [shape: bf16[2,8,32], index: 0, kind: input, shape index: {}]
  %s1 = inlined_call_operand.vmem [shape: bf16[2,8,32], index: 1, kind: input, shape index: {}]
  %s2 = inlined_call_operand.vmem [shape: bf16[2,8,32], index: 2, kind: input, shape index: {}]
  %s3 = inlined_call_operand.vmem [shape: f32[2,4,8,8], index: 3, kind: input, shape index: {}, may-alias: {3,4}]
  %s4 = inlined_call_operand.vmem [shape: f32[2,4,8,8], index: 4, kind: output, shape index: {0}, may-alias: {3,4}]
  %s5 = inlined_call_operand.vmem [shape: bf16[2,8,32], index: 5, kind: output, shape index: {1}]
  %6 = xla_tuple %s4, %s5
  %s7 = sld [smem:[#allocation0]]
  $region57: #{transformer_encoder_with_pair.9} parent=0
    _
  %s9 = ssub.s32 1, %s7
  %s10 = scalar_select 0, %s9, %s7
  loop: start=0, step=1, limit=4
  $region2: #{transformer_encoder_with_pair.9} parent=0 // loop_pre_header
    _
  $region3: #{transformer_encoder_with_pair.9} parent=0 // loop_header
    %s12 = sphi 0, %s16
    %p13 = scmp.ge.s32.totalorder %s12, 4
    %s19 = sphi 0, %s38
    %s20 = sphi 0, %s34
    %s21 = sphi 0, %s30
    %s22 = sphi 0, %s19
    %s23 = sphi 0, %s20
    %s24 = sphi 0, %s21
    %s25 = sphi 0, %s22
    %s26 = sphi 0, %s23
    %s27 = sphi 0, %s24
    %s45 = sphi 0, %s47
    %s48 = sphi 0, %s45
    %s49 = sphi 0, %s48
    %s65 = sphi 0, %s49
    %s73 = sphi 0, %s75
    %s76 = sphi 0, %s73
    %s77 = sphi 0, %s76
    %s93 = sphi 0, %s77
    %s101 = sphi 0, %s103
    %s104 = sphi 0, %s101
    %s105 = sphi 0, %s104
    %s121 = sphi 0, %s105
    %s131 = sphi 0, %s133
    %s134 = sphi 0, %s131
    %s135 = sphi 0, %s134
    %s151 = sphi 0, %s135
    %s161 = sphi 0, %s163
    %s164 = sphi 0, %s161
    %s165 = sphi 0, %s164
    %s181 = sphi 0, %s165
    %s191 = sphi 0, %s193
    %s194 = sphi 0, %s191
    %s195 = sphi 0, %s194
    %s211 = sphi 0, %s195
  $region4: #{transformer_encoder_with_pair.9} parent=0 // loop_header_branch
    %15 = sbr.rel (%p13) target = $region8
  $region5: #{transformer_encoder_with_pair.9} parent=0 // loop_body
    %s17 = ssub.s32 %s12, 1
    %s18 = ssub.s32 %s12, 2
    %s28 = sadd.s32 1, %s21
    %p29 = scmp.ge.s32.totalorder %s28, 1
    %s30 = scalar_select %p29, 0, %s28
    %s31 = sadd.s32 1, %s20
    %s32 = scalar_select %p29, %s31, %s20
    %p33 = scmp.ge.s32.totalorder %s32, 1
    %s34 = scalar_select %p33, 0, %s32
    %s35 = sadd.s32 1, %s19
    %s36 = scalar_select %p33, %s35, %s19
    %p37 = scmp.ge.s32.totalorder %s36, 2
    %s38 = scalar_select %p37, 0, %s36
    %s39 = ssub.s32 %s19, %s38
    %s40 = ssub.s32 %s21, %s30
    %s41 = sor.u32 %s39, %s40
    %s42 = ssub.s32 %s20, %s34
    %s43 = sor.u32 %s41, %s42
    %p44 = scmp.eq.s32.totalorder %s43, 0
    %s46 = sadd.s32 %s45, 1
    %s47 = scalar_select %p44, %s45, %s46
    %p50 = pneg %p44
    %p51 = scmp.eq.s32.totalorder %s12, 1
    %p52 = por %p50, %p51
    %p53 = scmp.ne.s32.totalorder %s45, %s48
    %p54 = scmp.eq.s32.totalorder %s12, 0
    %p55 = por %p53, %p54
    %p56 = scmp.ne.s32.totalorder %s45, %s48
    %p57 = scmp.eq.s32.totalorder %s17, 1
    %p58 = por %p56, %p57
    %p59 = scmp.ne.s32.totalorder %s48, %s49
    %p60 = scmp.eq.s32.totalorder %s17, 0
    %p61 = por %p59, %p60
    %p62 = scmp.ne.s32.totalorder %s48, %s49
    %p63 = scmp.eq.s32.totalorder %s18, 1
    %p64 = por %p62, %p63
    %p66 = scmp.ne.s32.totalorder %s49, %s65
    %p67 = scmp.eq.s32.totalorder %s18, 0
    %p68 = por %p66, %p67
    %s69 = ssub.s32 %s19, %s38
    %s70 = ssub.s32 %s20, %s34
    %s71 = sor.u32 %s69, %s70
    %p72 = scmp.eq.s32.totalorder %s71, 0
    %s74 = sadd.s32 %s73, 1
    %s75 = scalar_select %p72, %s73, %s74
    %p78 = pneg %p72
    %p79 = scmp.eq.s32.totalorder %s12, 1
    %p80 = por %p78, %p79
    %p81 = scmp.ne.s32.totalorder %s73, %s76
    %p82 = scmp.eq.s32.totalorder %s12, 0
    %p83 = por %p81, %p82
    %p84 = scmp.ne.s32.totalorder %s73, %s76
    %p85 = scmp.eq.s32.totalorder %s17, 1
    %p86 = por %p84, %p85
    %p87 = scmp.ne.s32.totalorder %s76, %s77
    %p88 = scmp.eq.s32.totalorder %s17, 0
    %p89 = por %p87, %p88
    %p90 = scmp.ne.s32.totalorder %s76, %s77
    %p91 = scmp.eq.s32.totalorder %s18, 1
    %p92 = por %p90, %p91
    %p94 = scmp.ne.s32.totalorder %s77, %s93
    %p95 = scmp.eq.s32.totalorder %s18, 0
    %p96 = por %p94, %p95
    %s97 = ssub.s32 %s19, %s38
    %s98 = ssub.s32 %s20, %s34
    %s99 = sor.u32 %s97, %s98
    %p100 = scmp.eq.s32.totalorder %s99, 0
    %s102 = sadd.s32 %s101, 1
    %s103 = scalar_select %p100, %s101, %s102
    %p106 = pneg %p100
    %p107 = scmp.eq.s32.totalorder %s12, 1
    %p108 = por %p106, %p107
    %p109 = scmp.ne.s32.totalorder %s101, %s104
    %p110 = scmp.eq.s32.totalorder %s12, 0
    %p111 = por %p109, %p110
    %p112 = scmp.ne.s32.totalorder %s101, %s104
    %p113 = scmp.eq.s32.totalorder %s17, 1
    %p114 = por %p112, %p113
    %p115 = scmp.ne.s32.totalorder %s104, %s105
    %p116 = scmp.eq.s32.totalorder %s17, 0
    %p117 = por %p115, %p116
    %p118 = scmp.ne.s32.totalorder %s104, %s105
    %p119 = scmp.eq.s32.totalorder %s18, 1
    %p120 = por %p118, %p119
    %p122 = scmp.ne.s32.totalorder %s105, %s121
    %p123 = scmp.eq.s32.totalorder %s18, 0
    %p124 = por %p122, %p123
    %s125 = ssub.s32 %s19, %s38
    %s126 = ssub.s32 %s20, %s34
    %s127 = sor.u32 %s125, %s126
    %s128 = ssub.s32 %s21, %s30
    %s129 = sor.u32 %s127, %s128
    %p130 = scmp.eq.s32.totalorder %s129, 0
    %s132 = sadd.s32 %s131, 1
    %s133 = scalar_select %p130, %s131, %s132
    %p136 = pneg %p130
    %p137 = scmp.eq.s32.totalorder %s12, 1
    %p138 = por %p136, %p137
    %p139 = scmp.ne.s32.totalorder %s131, %s134
    %p140 = scmp.eq.s32.totalorder %s12, 0
    %p141 = por %p139, %p140
    %p142 = scmp.ne.s32.totalorder %s131, %s134
    %p143 = scmp.eq.s32.totalorder %s17, 1
    %p144 = por %p142, %p143
    %p145 = scmp.ne.s32.totalorder %s134, %s135
    %p146 = scmp.eq.s32.totalorder %s17, 0
    %p147 = por %p145, %p146
    %p148 = scmp.ne.s32.totalorder %s134, %s135
    %p149 = scmp.eq.s32.totalorder %s18, 1
    %p150 = por %p148, %p149
    %p152 = scmp.ne.s32.totalorder %s135, %s151
    %p153 = scmp.eq.s32.totalorder %s18, 0
    %p154 = por %p152, %p153
    %s155 = ssub.s32 %s19, %s38
    %s156 = ssub.s32 %s20, %s34
    %s157 = sor.u32 %s155, %s156
    %s158 = ssub.s32 %s21, %s30
    %s159 = sor.u32 %s157, %s158
    %p160 = scmp.eq.s32.totalorder %s159, 0
    %s162 = sadd.s32 %s161, 1
    %s163 = scalar_select %p160, %s161, %s162
    %p166 = pneg %p160
    %p167 = scmp.eq.s32.totalorder %s12, 1
    %p168 = por %p166, %p167
    %p169 = scmp.ne.s32.totalorder %s161, %s164
    %p170 = scmp.eq.s32.totalorder %s12, 0
    %p171 = por %p169, %p170
    %p172 = scmp.ne.s32.totalorder %s161, %s164
    %p173 = scmp.eq.s32.totalorder %s17, 1
    %p174 = por %p172, %p173
    %p175 = scmp.ne.s32.totalorder %s164, %s165
    %p176 = scmp.eq.s32.totalorder %s17, 0
    %p177 = por %p175, %p176
    %p178 = scmp.ne.s32.totalorder %s164, %s165
    %p179 = scmp.eq.s32.totalorder %s18, 1
    %p180 = por %p178, %p179
    %p182 = scmp.ne.s32.totalorder %s165, %s181
    %p183 = scmp.eq.s32.totalorder %s18, 0
    %p184 = por %p182, %p183
    %s185 = ssub.s32 %s19, %s38
    %s186 = ssub.s32 %s21, %s30
    %s187 = sor.u32 %s185, %s186
    %s188 = ssub.s32 %s20, %s34
    %s189 = sor.u32 %s187, %s188
    %p190 = scmp.eq.s32.totalorder %s189, 0
    %s192 = sadd.s32 %s191, 1
    %s193 = scalar_select %p190, %s191, %s192
    %p196 = pneg %p190
    %p197 = scmp.eq.s32.totalorder %s12, 1
    %p198 = por %p196, %p197
    %p199 = scmp.ne.s32.totalorder %s191, %s194
    %p200 = scmp.eq.s32.totalorder %s12, 0
    %p201 = por %p199, %p200
    %p202 = scmp.ne.s32.totalorder %s191, %s194
    %p203 = scmp.eq.s32.totalorder %s17, 1
    %p204 = por %p202, %p203
    %p205 = scmp.ne.s32.totalorder %s194, %s195
    %p206 = scmp.eq.s32.totalorder %s17, 0
    %p207 = por %p205, %p206
    %p208 = scmp.ne.s32.totalorder %s194, %s195
    %p209 = scmp.eq.s32.totalorder %s18, 1
    %p210 = por %p208, %p209
    %p212 = scmp.ne.s32.totalorder %s195, %s211
    %p213 = scmp.eq.s32.totalorder %s18, 0
    %p214 = por %p212, %p213
    %p215 = scmp.le.s32.totalorder 1, %s12
    %p216 = scmp.lt.s32.totalorder %s12, 3
    %p217 = pnand %p215, %p216
    %p218 = pneg %p217
    // Predicated region
    $region9: #{transformer_encoder_with_pair.9} parent=5 // pred_check
      _
    $region10: #{transformer_encoder_with_pair.9} parent=5 // pred_check_branch
      %220 = sbr.rel (%p217) target = $region12
    $region11: #{transformer_encoder_with_pair.9} parent=5 // pred_region
      %s221 = ssub.s32 %s12, 1
    $region12: #{transformer_encoder_with_pair.9} parent=5 // pred_fallthru
      _
    %p222 = scmp.lt.s32.totalorder %s12, 2
    // Predicated region
    $region13: #{transformer_encoder_with_pair.9} parent=5 // pred_check
      %p223 = pneg %p222
    $region14: #{transformer_encoder_with_pair.9} parent=5 // pred_check_branch
      %225 = sbr.rel (%p223) target = $region16
    $region15: #{transformer_encoder_with_pair.9} parent=5 // pred_region
      // Predicated region
      $region17: #{transformer_encoder_with_pair.9} parent=15 // pred_check
        %p226 = pneg %p55
      $region18: #{transformer_encoder_with_pair.9} parent=15 // pred_check_branch
        %228 = sbr.rel (%p226) target = $region20
      $region19: #{transformer_encoder_with_pair.9} parent=15 // pred_region
        %p229 = scmp.lt.s32.totalorder %s19, 1
        %s230 = scalar_select %p229, %s19, 1
        %p231 = scmp.lt.s32.totalorder %s21, 0
        %s232 = scalar_select %p231, %s21, 0
        %p233 = scmp.lt.s32.totalorder %s20, 0
        %s234 = scalar_select %p233, %s20, 0
        %s235 = sadd.s32 %s234, %s232
        %s236 = sadd.s32 %s235, %s230
        %s237 = smul.addr %s236, 4
        %s238 = scalar_lea.vmem %s0, %s237
      $region20: #{transformer_encoder_with_pair.9} parent=15 // pred_fallthru
        _
      // Predicated region
      $region21: #{transformer_encoder_with_pair.9} parent=15 // pred_check
        %p239 = pneg %p83
      $region22: #{transformer_encoder_with_pair.9} parent=15 // pred_check_branch
        %241 = sbr.rel (%p239) target = $region24
      $region23: #{transformer_encoder_with_pair.9} parent=15 // pred_region
        %p242 = scmp.lt.s32.totalorder %s19, 1
        %s243 = scalar_select %p242, %s19, 1
        %p244 = scmp.lt.s32.totalorder %s20, 0
        %s245 = scalar_select %p244, %s20, 0
        %s246 = sadd.s32 %s245, %s243
        %s247 = smul.addr %s246, 4
        %s248 = scalar_lea.vmem %s1, %s247
      $region24: #{transformer_encoder_with_pair.9} parent=15 // pred_fallthru
        _
      // Predicated region
      $region25: #{transformer_encoder_with_pair.9} parent=15 // pred_check
        %p249 = pneg %p111
      $region26: #{transformer_encoder_with_pair.9} parent=15 // pred_check_branch
        %251 = sbr.rel (%p249) target = $region28
      $region27: #{transformer_encoder_with_pair.9} parent=15 // pred_region
        %p252 = scmp.lt.s32.totalorder %s19, 1
        %s253 = scalar_select %p252, %s19, 1
        %p254 = scmp.lt.s32.totalorder %s20, 0
        %s255 = scalar_select %p254, %s20, 0
        %s256 = sadd.s32 %s255, %s253
        %s257 = smul.addr %s256, 4
        %s258 = scalar_lea.vmem %s2, %s257
      $region28: #{transformer_encoder_with_pair.9} parent=15 // pred_fallthru
        _
      // Predicated region
      $region29: #{transformer_encoder_with_pair.9} parent=15 // pred_check
        %p259 = pneg %p141
      $region30: #{transformer_encoder_with_pair.9} parent=15 // pred_check_branch
        %261 = sbr.rel (%p259) target = $region32
      $region31: #{transformer_encoder_with_pair.9} parent=15 // pred_region
        %s262 = smul.u32 4, %s20
        %p263 = scmp.lt.s32.totalorder %s19, 1
        %s264 = scalar_select %p263, %s19, 1
        %p265 = scmp.lt.s32.totalorder %s262, 3
        %s266 = scalar_select %p265, %s262, 3
        %p267 = scmp.lt.s32.totalorder %s21, 0
        %s268 = scalar_select %p267, %s21, 0
        %s269 = sadd.s32 %s268, %s266
        %s270 = smul.addr %s264, 4
        %s271 = sadd.s32 %s269, %s270
        %s272 = smul.addr %s271, 8
        %s273 = scalar_lea.vmem %s3, %s272
        %s274 = smul.u32 4, %s20
      $region32: #{transformer_encoder_with_pair.9} parent=15 // pred_fallthru
        _
    $region16: #{transformer_encoder_with_pair.9} parent=5 // pred_fallthru
      _
    %p275 = scmp.le.s32.totalorder 1, %s12
    %p276 = scmp.lt.s32.totalorder %s12, 3
    %p277 = pnand %p275, %p276
    %p278 = pneg %p277
    // Predicated region
    $region33: #{transformer_encoder_with_pair.9} parent=5 // pred_check
      _
    $region34: #{transformer_encoder_with_pair.9} parent=5 // pred_check_branch
      %280 = sbr.rel (%p277) target = $region36
    $region35: #{transformer_encoder_with_pair.9} parent=5 // pred_region
      %s281 = ssub.s32 %s12, 1
      %p282 = scmp.lt.s32.totalorder %s22, 1
      %s283 = scalar_select %p282, %s22, 1
      %p284 = scmp.lt.s32.totalorder %s24, 0
      %s285 = scalar_select %p284, %s24, 0
      %p286 = scmp.lt.s32.totalorder %s23, 0
      %s287 = scalar_select %p286, %s23, 0
      %s288 = sadd.s32 %s287, %s285
      %s289 = sadd.s32 %s288, %s283
      %s290 = smul.addr %s289, 4
      %s291 = scalar_lea.vmem %s0, %s290
      %p292 = pneg %p61
      %p293 = pneg %p58
      %p294 = scmp.lt.s32.totalorder %s22, 1
      %s295 = scalar_select %p294, %s22, 1
      %p296 = scmp.lt.s32.totalorder %s23, 0
      %s297 = scalar_select %p296, %s23, 0
      %s298 = sadd.s32 %s297, %s295
      %s299 = smul.addr %s298, 4
      %s300 = scalar_lea.vmem %s1, %s299
      %p301 = pneg %p89
      %p302 = pneg %p86
      %p303 = scmp.lt.s32.totalorder %s22, 1
      %s304 = scalar_select %p303, %s22, 1
      %p305 = scmp.lt.s32.totalorder %s23, 0
      %s306 = scalar_select %p305, %s23, 0
      %s307 = sadd.s32 %s306, %s304
      %s308 = smul.addr %s307, 4
      %s309 = scalar_lea.vmem %s2, %s308
      %p310 = pneg %p117
      %p311 = pneg %p114
      %s312 = smul.u32 4, %s23
      %p313 = scmp.lt.s32.totalorder %s22, 1
      %s314 = scalar_select %p313, %s22, 1
      %p315 = scmp.lt.s32.totalorder %s312, 3
      %s316 = scalar_select %p315, %s312, 3
      %p317 = scmp.lt.s32.totalorder %s24, 0
      %s318 = scalar_select %p317, %s24, 0
      %s319 = sadd.s32 %s318, %s316
      %s320 = smul.addr %s314, 4
      %s321 = sadd.s32 %s319, %s320
      %s322 = smul.addr %s321, 8
      %s323 = scalar_lea.vmem %s3, %s322
      %p324 = pneg %p147
      %p325 = pneg %p144
      %p326 = pneg %p177
      %p327 = pneg %p174
      %s328 = smul.u32 4, %s23
      %p329 = scmp.lt.s32.totalorder %s22, 1
      %s330 = scalar_select %p329, %s22, 1
      %p331 = scmp.lt.s32.totalorder %s328, 3
      %s332 = scalar_select %p331, %s328, 3
      %p333 = scmp.lt.s32.totalorder %s24, 0
      %s334 = scalar_select %p333, %s24, 0
      %s335 = sadd.s32 %s334, %s332
      %s336 = smul.addr %s330, 4
      %s337 = sadd.s32 %s335, %s336
      %s338 = smul.addr %s337, 8
      %s339 = scalar_lea.vmem %s4, %s338
      %p340 = pneg %p207
      %p341 = pneg %p204
      %p342 = scmp.lt.s32.totalorder %s22, 1
      %s343 = scalar_select %p342, %s22, 1
      %p344 = scmp.lt.s32.totalorder %s24, 0
      %s345 = scalar_select %p344, %s24, 0
      %p346 = scmp.lt.s32.totalorder %s23, 0
      %s347 = scalar_select %p346, %s23, 0
      %s348 = sadd.s32 %s347, %s345
      %s349 = sadd.s32 %s348, %s343
      %s350 = smul.addr %s349, 4
      %s351 = scalar_lea.vmem %s5, %s350
      %p352 = scmp.lt.s32.totalorder %s22, 1
      %s353 = scalar_select %p352, %s22, 1
      %p354 = scmp.lt.s32.totalorder %s24, 0
      %s355 = scalar_select %p354, %s24, 0
      %p356 = scmp.lt.s32.totalorder %s23, 0
      %s357 = scalar_select %p356, %s23, 0
      %s358 = sadd.s32 %s357, %s355
      %s359 = sadd.s32 %s358, %s353
      %s360 = smul.addr %s359, 4
      %s361 = scalar_lea.vmem %s0, %s360
      %p362 = scmp.lt.s32.totalorder %s22, 1
      %s363 = scalar_select %p362, %s22, 1
      %p364 = scmp.lt.s32.totalorder %s23, 0
      %s365 = scalar_select %p364, %s23, 0
      %s366 = sadd.s32 %s365, %s363
      %s367 = smul.addr %s366, 4
      %s368 = scalar_lea.vmem %s1, %s367
      %p369 = scmp.lt.s32.totalorder %s22, 1
      %s370 = scalar_select %p369, %s22, 1
      %p371 = scmp.lt.s32.totalorder %s23, 0
      %s372 = scalar_select %p371, %s23, 0
      %s373 = sadd.s32 %s372, %s370
      %s374 = smul.addr %s373, 4
      %s375 = scalar_lea.vmem %s2, %s374
      %s376 = smul.u32 4, %s23
      %p377 = scmp.lt.s32.totalorder %s22, 1
      %s378 = scalar_select %p377, %s22, 1
      %p379 = scmp.lt.s32.totalorder %s376, 3
      %s380 = scalar_select %p379, %s376, 3
      %p381 = scmp.lt.s32.totalorder %s24, 0
      %s382 = scalar_select %p381, %s24, 0
      %s383 = sadd.s32 %s382, %s380
      %s384 = smul.addr %s378, 4
      %s385 = sadd.s32 %s383, %s384
      %s386 = smul.addr %s385, 8
      %s387 = scalar_lea.vmem %s3, %s386
      %s388 = smul.u32 4, %s23
      %s389 = smul.u32 4, %s23
      %p390 = scmp.lt.s32.totalorder %s22, 1
      %s391 = scalar_select %p390, %s22, 1
      %p392 = scmp.lt.s32.totalorder %s389, 3
      %s393 = scalar_select %p392, %s389, 3
      %p394 = scmp.lt.s32.totalorder %s24, 0
      %s395 = scalar_select %p394, %s24, 0
      %s396 = sadd.s32 %s395, %s393
      %s397 = smul.addr %s391, 4
      %s398 = sadd.s32 %s396, %s397
      %s399 = smul.addr %s398, 8
      %s400 = scalar_lea.vmem %s4, %s399
      %s401 = smul.u32 4, %s23
      %p402 = scmp.lt.s32.totalorder %s22, 1
      %s403 = scalar_select %p402, %s22, 1
      %p404 = scmp.lt.s32.totalorder %s24, 0
      %s405 = scalar_select %p404, %s24, 0
      %p406 = scmp.lt.s32.totalorder %s23, 0
      %s407 = scalar_select %p406, %s23, 0
      %s408 = sadd.s32 %s407, %s405
      %s409 = sadd.s32 %s408, %s403
      %s410 = smul.addr %s409, 4
      %s411 = scalar_lea.vmem %s5, %s410
      %v413 = vld [vmem:[%s361] sm:$0xf]
      %v414 = vld [vmem:[%s368] sm:$0xf]
      %v415 = vld [vmem:[%s375] sm:$0xf]
      %v416 = vld [vmem:[%s387] sm:$0xff]
      %vm417 = vcmask 64512
      %v419 = vsel %vm417, %v413, 0
      %v422 = vsel %vm417, %v414, 0
      %424 = vmatprep.subr.bf16.mxu0 0
      %425 = vmatpush1.bf16.xpose.msra.mxu0 %v422
      %426 = vmatprep.subr.bf16.mxu0 0
      %427 = vmatpush1.bf16.xpose.msra.mxu0 0
      %428 = vmatprep.subr.bf16.mxu0 0
      %429 = vmatpush1.bf16.xpose.msra.mxu0 0
      %430 = vmatprep.subr.bf16.mxu0 0
      %431 = vmatpush1.bf16.xpose.msra.mxu0 0
      %432 = vmatprep.subr.bf16.mxu0 0
      %433 = vmatpush1.bf16.xpose.msra.mxu0 0
      %434 = vmatprep.subr.bf16.mxu0 0
      %435 = vmatpush1.bf16.xpose.msra.mxu0 0
      %436 = vmatprep.subr.bf16.mxu0 0
      %437 = vmatpush1.bf16.xpose.msra.mxu0 0
      %438 = vmatprep.subr.bf16.mxu0 0
      %439 = vmatpush1.bf16.xpose.msra.mxu0 0
      %440 = vmatprep.subr.bf16.mxu0 0
      %441 = vmatpush1.bf16.xpose.msra.mxu0 0
      %442 = vmatprep.subr.bf16.mxu0 0
      %443 = vmatpush1.bf16.xpose.msra.mxu0 0
      %444 = vmatprep.subr.bf16.mxu0 0
      %445 = vmatpush1.bf16.xpose.msra.mxu0 0
      %446 = vmatprep.subr.bf16.mxu0 0
      %447 = vmatpush1.bf16.xpose.msra.mxu0 0
      %448 = vmatprep.subr.bf16.mxu0 0
      %449 = vmatpush1.bf16.xpose.msra.mxu0 0
      %450 = vmatprep.subr.bf16.mxu0 0
      %451 = vmatpush1.bf16.xpose.msra.mxu0 0
      %452 = vmatprep.subr.bf16.mxu0 0
      %453 = vmatpush1.bf16.xpose.msra.mxu0 0
      %454 = vmatprep.subr.bf16.mxu0 0
      %455 = vmatpush1.bf16.xpose.msra.mxu0 0
      %456 = vmatprep.mubr.bf16.mxu0 0
      %457 = vmatmul.mubr.bf16.gmra.mrb[0].mxu0 %v419
      %v458 = vpop.f32.mrb[0].mxu0
      %v459 = vadd.f32 %v416, %v458
      %v460 = vpop.f32.mrb[0].mxu0
      %v461 = vpop.f32.mrb[0].mxu0
      %v462 = vpop.f32.mrb[0].mxu0
      %463 = vdwg.mxu0
      %464 = vst.msk [vmem:[%s400] sm:$0xff] %vm417, %v459
      %v465 = vsel %vm417, %v459, -inf
      %466 = vmax.xlane.f32.xlu0 %v465
      %v467 = vpop.xlane.xlu0 %466
      %vm468 = vcmp.eq.f32.partialorder %v467, -inf
      %v469 = vsel %vm468, 0.0, %v467
      %v470 = vsub.f32 %v459, %v469
      %v471 = vmul.f32 %v470, 1.442695
      %v472 = vpow.pop %v471
      %v473 = vsel %vm417, %v472, 0.0
      %474 = vadd.xlane.f32.xlu0 %v473
      %v475 = vpop.xlane.xlu0 %474
      %vm476 = vcmp.gt.f32.partialorder %v475, 0.0
      %v477 = vsel %vm476, %v475, 1.0
      %v478 = vrcp.pop %v477
      %v479 = vmul.f32 %v472, %v478
      %v480 = vpack.c.bf16 %v479, %v479
      %v482 = vsel %vm417, %v480, 0
      %vm484 = vcmask 1043456
      %v486 = vsel %vm484, %v415, 0
      %488 = vmatprep.subr.bf16.mxu0 0
      %489 = vmatpush1.bf16.msra.mxu0 %v486
      %490 = vmatprep.subr.bf16.mxu0 0
      %491 = vmatpush1.bf16.msra.mxu0 0
      %492 = vmatprep.subr.bf16.mxu0 0
      %493 = vmatpush1.bf16.msra.mxu0 0
      %494 = vmatprep.subr.bf16.mxu0 0
      %495 = vmatpush1.bf16.msra.mxu0 0
      %496 = vmatprep.subr.bf16.mxu0 0
      %497 = vmatpush1.bf16.msra.mxu0 0
      %498 = vmatprep.subr.bf16.mxu0 0
      %499 = vmatpush1.bf16.msra.mxu0 0
      %500 = vmatprep.subr.bf16.mxu0 0
      %501 = vmatpush1.bf16.msra.mxu0 0
      %502 = vmatprep.subr.bf16.mxu0 0
      %503 = vmatpush1.bf16.msra.mxu0 0
      %504 = vmatprep.subr.bf16.mxu0 0
      %505 = vmatpush1.bf16.msra.mxu0 0
      %506 = vmatprep.subr.bf16.mxu0 0
      %507 = vmatpush1.bf16.msra.mxu0 0
      %508 = vmatprep.subr.bf16.mxu0 0
      %509 = vmatpush1.bf16.msra.mxu0 0
      %510 = vmatprep.subr.bf16.mxu0 0
      %511 = vmatpush1.bf16.msra.mxu0 0
      %512 = vmatprep.subr.bf16.mxu0 0
      %513 = vmatpush1.bf16.msra.mxu0 0
      %514 = vmatprep.subr.bf16.mxu0 0
      %515 = vmatpush1.bf16.msra.mxu0 0
      %516 = vmatprep.subr.bf16.mxu0 0
      %517 = vmatpush1.bf16.msra.mxu0 0
      %518 = vmatprep.subr.bf16.mxu0 0
      %519 = vmatpush1.bf16.msra.mxu0 0
      %520 = vmatprep.mubr.bf16.mxu0 0
      %521 = vmatmul.mubr.bf16.gmra.mrb[0].mxu0 %v482
      %v522 = vpop.f32.mrb[0].mxu0
      %v523 = vadd.f32 0.0, %v522
      %v524 = vpop.f32.mrb[0].mxu0
      %v525 = vpop.f32.mrb[0].mxu0
      %v526 = vpop.f32.mrb[0].mxu0
      %527 = vdwg.mxu0
      %s528 = scalar_lea.vmem %s387, 8
      %v529 = vld [vmem:[%s528] sm:$0xff]
      %v531 = vunpack.c.l.b16 %v413
      %v532 = vpack.c.b16 %v531, %v531
      %533 = vrot.lane.b32.xlu0 %v532, 120
      %v534 = vpop.permute.xlu0 %533
      %v536 = vunpack.c.l.b16 %v414
      %v537 = vpack.c.b16 %v536, %v536
      %538 = vrot.lane.b32.xlu0 %v537, 120
      %v539 = vpop.permute.xlu0 %538
      %v541 = vsel %vm417, %v534, 0
      %v544 = vsel %vm417, %v539, 0
      %546 = vmatprep.subr.bf16.mxu0 0
      %547 = vmatpush1.bf16.xpose.msra.mxu0 %v544
      %548 = vmatprep.subr.bf16.mxu0 0
      %549 = vmatpush1.bf16.xpose.msra.mxu0 0
      %550 = vmatprep.subr.bf16.mxu0 0
      %551 = vmatpush1.bf16.xpose.msra.mxu0 0
      %552 = vmatprep.subr.bf16.mxu0 0
      %553 = vmatpush1.bf16.xpose.msra.mxu0 0
      %554 = vmatprep.subr.bf16.mxu0 0
      %555 = vmatpush1.bf16.xpose.msra.mxu0 0
      %556 = vmatprep.subr.bf16.mxu0 0
      %557 = vmatpush1.bf16.xpose.msra.mxu0 0
      %558 = vmatprep.subr.bf16.mxu0 0
      %559 = vmatpush1.bf16.xpose.msra.mxu0 0
      %560 = vmatprep.subr.bf16.mxu0 0
      %561 = vmatpush1.bf16.xpose.msra.mxu0 0
      %562 = vmatprep.subr.bf16.mxu0 0
      %563 = vmatpush1.bf16.xpose.msra.mxu0 0
      %564 = vmatprep.subr.bf16.mxu0 0
      %565 = vmatpush1.bf16.xpose.msra.mxu0 0
      %566 = vmatprep.subr.bf16.mxu0 0
      %567 = vmatpush1.bf16.xpose.msra.mxu0 0
      %568 = vmatprep.subr.bf16.mxu0 0
      %569 = vmatpush1.bf16.xpose.msra.mxu0 0
      %570 = vmatprep.subr.bf16.mxu0 0
      %571 = vmatpush1.bf16.xpose.msra.mxu0 0
      %572 = vmatprep.subr.bf16.mxu0 0
      %573 = vmatpush1.bf16.xpose.msra.mxu0 0
      %574 = vmatprep.subr.bf16.mxu0 0
      %575 = vmatpush1.bf16.xpose.msra.mxu0 0
      %576 = vmatprep.subr.bf16.mxu0 0
      %577 = vmatpush1.bf16.xpose.msra.mxu0 0
      %578 = vmatprep.mubr.bf16.mxu0 0
      %579 = vmatmul.mubr.bf16.gmra.mrb[0].mxu0 %v541
      %v580 = vpop.f32.mrb[0].mxu0
      %v581 = vadd.f32 %v529, %v580
      %v582 = vpop.f32.mrb[0].mxu0
      %v583 = vpop.f32.mrb[0].mxu0
      %v584 = vpop.f32.mrb[0].mxu0
      %585 = vdwg.mxu0
      %s586 = scalar_lea.vmem %s400, 8
      %587 = vst.msk [vmem:[%s586] sm:$0xff] %vm417, %v581
      %v588 = vsel %vm417, %v581, -inf
      %589 = vmax.xlane.f32.xlu0 %v588
      %v590 = vpop.xlane.xlu0 %589
      %vm591 = vcmp.eq.f32.partialorder %v590, -inf
      %v592 = vsel %vm591, 0.0, %v590
      %v593 = vsub.f32 %v581, %v592
      %v594 = vmul.f32 %v593, 1.442695
      %v595 = vpow.pop %v594
      %v596 = vsel %vm417, %v595, 0.0
      %597 = vadd.xlane.f32.xlu0 %v596
      %v598 = vpop.xlane.xlu0 %597
      %vm599 = vcmp.gt.f32.partialorder %v598, 0.0
      %v600 = vsel %vm599, %v598, 1.0
      %v601 = vrcp.pop %v600
      %v602 = vmul.f32 %v595, %v601
      %v603 = vpack.c.bf16 %v602, %v602
      %v605 = vunpack.c.l.b16 %v415
      %v606 = vpack.c.b16 %v605, %v605
      %607 = vrot.lane.b32.xlu0 %v606, 120
      %v608 = vpop.permute.xlu0 %607
      %v610 = vsel %vm417, %v603, 0
      %v613 = vsel %vm484, %v608, 0
      %615 = vmatprep.subr.bf16.mxu0 0
      %616 = vmatpush1.bf16.msra.mxu0 %v613
      %617 = vmatprep.subr.bf16.mxu0 0
      %618 = vmatpush1.bf16.msra.mxu0 0
      %619 = vmatprep.subr.bf16.mxu0 0
      %620 = vmatpush1.bf16.msra.mxu0 0
      %621 = vmatprep.subr.bf16.mxu0 0
      %622 = vmatpush1.bf16.msra.mxu0 0
      %623 = vmatprep.subr.bf16.mxu0 0
      %624 = vmatpush1.bf16.msra.mxu0 0
      %625 = vmatprep.subr.bf16.mxu0 0
      %626 = vmatpush1.bf16.msra.mxu0 0
      %627 = vmatprep.subr.bf16.mxu0 0
      %628 = vmatpush1.bf16.msra.mxu0 0
      %629 = vmatprep.subr.bf16.mxu0 0
      %630 = vmatpush1.bf16.msra.mxu0 0
      %631 = vmatprep.subr.bf16.mxu0 0
      %632 = vmatpush1.bf16.msra.mxu0 0
      %633 = vmatprep.subr.bf16.mxu0 0
      %634 = vmatpush1.bf16.msra.mxu0 0
      %635 = vmatprep.subr.bf16.mxu0 0
      %636 = vmatpush1.bf16.msra.mxu0 0
      %637 = vmatprep.subr.bf16.mxu0 0
      %638 = vmatpush1.bf16.msra.mxu0 0
      %639 = vmatprep.subr.bf16.mxu0 0
      %640 = vmatpush1.bf16.msra.mxu0 0
      %641 = vmatprep.subr.bf16.mxu0 0
      %642 = vmatpush1.bf16.msra.mxu0 0
      %643 = vmatprep.subr.bf16.mxu0 0
      %644 = vmatpush1.bf16.msra.mxu0 0
      %645 = vmatprep.subr.bf16.mxu0 0
      %646 = vmatpush1.bf16.msra.mxu0 0
      %647 = vmatprep.mubr.bf16.mxu0 0
      %648 = vmatmul.mubr.bf16.gmra.mrb[0].mxu0 %v610
      %v649 = vpop.f32.mrb[0].mxu0
      %v650 = vadd.f32 0.0, %v649
      %v651 = vpop.f32.mrb[0].mxu0
      %v652 = vpop.f32.mrb[0].mxu0
      %v653 = vpop.f32.mrb[0].mxu0
      %654 = vdwg.mxu0
      %s655 = scalar_lea.vmem %s387, 16
      %v656 = vld [vmem:[%s655] sm:$0xff]
      %657 = vrot.lane.b32.xlu0 %v532, 112
      %v658 = vpop.permute.xlu0 %657
      %659 = vrot.lane.b32.xlu0 %v537, 112
      %v660 = vpop.permute.xlu0 %659
      %v662 = vsel %vm417, %v658, 0
      %v665 = vsel %vm417, %v660, 0
      %667 = vmatprep.subr.bf16.mxu0 0
      %668 = vmatpush1.bf16.xpose.msra.mxu0 %v665
      %669 = vmatprep.subr.bf16.mxu0 0
      %670 = vmatpush1.bf16.xpose.msra.mxu0 0
      %671 = vmatprep.subr.bf16.mxu0 0
      %672 = vmatpush1.bf16.xpose.msra.mxu0 0
      %673 = vmatprep.subr.bf16.mxu0 0
      %674 = vmatpush1.bf16.xpose.msra.mxu0 0
      %675 = vmatprep.subr.bf16.mxu0 0
      %676 = vmatpush1.bf16.xpose.msra.mxu0 0
      %677 = vmatprep.subr.bf16.mxu0 0
      %678 = vmatpush1.bf16.xpose.msra.mxu0 0
      %679 = vmatprep.subr.bf16.mxu0 0
      %680 = vmatpush1.bf16.xpose.msra.mxu0 0
      %681 = vmatprep.subr.bf16.mxu0 0
      %682 = vmatpush1.bf16.xpose.msra.mxu0 0
      %683 = vmatprep.subr.bf16.mxu0 0
      %684 = vmatpush1.bf16.xpose.msra.mxu0 0
      %685 = vmatprep.subr.bf16.mxu0 0
      %686 = vmatpush1.bf16.xpose.msra.mxu0 0
      %687 = vmatprep.subr.bf16.mxu0 0
      %688 = vmatpush1.bf16.xpose.msra.mxu0 0
      %689 = vmatprep.subr.bf16.mxu0 0
      %690 = vmatpush1.bf16.xpose.msra.mxu0 0
      %691 = vmatprep.subr.bf16.mxu0 0
      %692 = vmatpush1.bf16.xpose.msra.mxu0 0
      %693 = vmatprep.subr.bf16.mxu0 0
      %694 = vmatpush1.bf16.xpose.msra.mxu0 0
      %695 = vmatprep.subr.bf16.mxu0 0
      %696 = vmatpush1.bf16.xpose.msra.mxu0 0
      %697 = vmatprep.subr.bf16.mxu0 0
      %698 = vmatpush1.bf16.xpose.msra.mxu0 0
      %699 = vmatprep.mubr.bf16.mxu0 0
      %700 = vmatmul.mubr.bf16.gmra.mrb[0].mxu0 %v662
      %v701 = vpop.f32.mrb[0].mxu0
      %v702 = vadd.f32 %v656, %v701
      %v703 = vpop.f32.mrb[0].mxu0
      %v704 = vpop.f32.mrb[0].mxu0
      %v705 = vpop.f32.mrb[0].mxu0
      %706 = vdwg.mxu0
      %s707 = scalar_lea.vmem %s400, 16
      %708 = vst.msk [vmem:[%s707] sm:$0xff] %vm417, %v702
      %v709 = vsel %vm417, %v702, -inf
      %710 = vmax.xlane.f32.xlu0 %v709
      %v711 = vpop.xlane.xlu0 %710
      %vm712 = vcmp.eq.f32.partialorder %v711, -inf
      %v713 = vsel %vm712, 0.0, %v711
      %v714 = vsub.f32 %v702, %v713
      %v715 = vmul.f32 %v714, 1.442695
      %v716 = vpow.pop %v715
      %v717 = vsel %vm417, %v716, 0.0
      %718 = vadd.xlane.f32.xlu0 %v717
      %v719 = vpop.xlane.xlu0 %718
      %vm720 = vcmp.gt.f32.partialorder %v719, 0.0
      %v721 = vsel %vm720, %v719, 1.0
      %v722 = vrcp.pop %v721
      %v723 = vmul.f32 %v716, %v722
      %v724 = vpack.c.bf16 %v723, %v723
      %725 = vrot.lane.b32.xlu0 %v606, 112
      %v726 = vpop.permute.xlu0 %725
      %v728 = vsel %vm417, %v724, 0
      %v731 = vsel %vm484, %v726, 0
      %733 = vmatprep.subr.bf16.mxu0 0
      %734 = vmatpush1.bf16.msra.mxu0 %v731
      %735 = vmatprep.subr.bf16.mxu0 0
      %736 = vmatpush1.bf16.msra.mxu0 0
      %737 = vmatprep.subr.bf16.mxu0 0
      %738 = vmatpush1.bf16.msra.mxu0 0
      %739 = vmatprep.subr.bf16.mxu0 0
      %740 = vmatpush1.bf16.msra.mxu0 0
      %741 = vmatprep.subr.bf16.mxu0 0
      %742 = vmatpush1.bf16.msra.mxu0 0
      %743 = vmatprep.subr.bf16.mxu0 0
      %744 = vmatpush1.bf16.msra.mxu0 0
      %745 = vmatprep.subr.bf16.mxu0 0
      %746 = vmatpush1.bf16.msra.mxu0 0
      %747 = vmatprep.subr.bf16.mxu0 0
      %748 = vmatpush1.bf16.msra.mxu0 0
      %749 = vmatprep.subr.bf16.mxu0 0
      %750 = vmatpush1.bf16.msra.mxu0 0
      %751 = vmatprep.subr.bf16.mxu0 0
      %752 = vmatpush1.bf16.msra.mxu0 0
      %753 = vmatprep.subr.bf16.mxu0 0
      %754 = vmatpush1.bf16.msra.mxu0 0
      %755 = vmatprep.subr.bf16.mxu0 0
      %756 = vmatpush1.bf16.msra.mxu0 0
      %757 = vmatprep.subr.bf16.mxu0 0
      %758 = vmatpush1.bf16.msra.mxu0 0
      %759 = vmatprep.subr.bf16.mxu0 0
      %760 = vmatpush1.bf16.msra.mxu0 0
      %761 = vmatprep.subr.bf16.mxu0 0
      %762 = vmatpush1.bf16.msra.mxu0 0
      %763 = vmatprep.subr.bf16.mxu0 0
      %764 = vmatpush1.bf16.msra.mxu0 0
      %765 = vmatprep.mubr.bf16.mxu0 0
      %766 = vmatmul.mubr.bf16.gmra.mrb[0].mxu0 %v728
      %v767 = vpop.f32.mrb[0].mxu0
      %v768 = vadd.f32 0.0, %v767
      %v769 = vpop.f32.mrb[0].mxu0
      %v770 = vpop.f32.mrb[0].mxu0
      %v771 = vpop.f32.mrb[0].mxu0
      %772 = vdwg.mxu0
      %s773 = scalar_lea.vmem %s387, 24
      %v774 = vld [vmem:[%s773] sm:$0xff]
      %775 = vrot.lane.b32.xlu0 %v532, 104
      %v776 = vpop.permute.xlu0 %775
      %777 = vrot.lane.b32.xlu0 %v537, 104
      %v778 = vpop.permute.xlu0 %777
      %v780 = vsel %vm417, %v776, 0
      %v783 = vsel %vm417, %v778, 0
      %785 = vmatprep.subr.bf16.mxu0 0
      %786 = vmatpush1.bf16.xpose.msra.mxu0 %v783
      %787 = vmatprep.subr.bf16.mxu0 0
      %788 = vmatpush1.bf16.xpose.msra.mxu0 0
      %789 = vmatprep.subr.bf16.mxu0 0
      %790 = vmatpush1.bf16.xpose.msra.mxu0 0
      %791 = vmatprep.subr.bf16.mxu0 0
      %792 = vmatpush1.bf16.xpose.msra.mxu0 0
      %793 = vmatprep.subr.bf16.mxu0 0
      %794 = vmatpush1.bf16.xpose.msra.mxu0 0
      %795 = vmatprep.subr.bf16.mxu0 0
      %796 = vmatpush1.bf16.xpose.msra.mxu0 0
      %797 = vmatprep.subr.bf16.mxu0 0
      %798 = vmatpush1.bf16.xpose.msra.mxu0 0
      %799 = vmatprep.subr.bf16.mxu0 0
      %800 = vmatpush1.bf16.xpose.msra.mxu0 0
      %801 = vmatprep.subr.bf16.mxu0 0
      %802 = vmatpush1.bf16.xpose.msra.mxu0 0
      %803 = vmatprep.subr.bf16.mxu0 0
      %804 = vmatpush1.bf16.xpose.msra.mxu0 0
      %805 = vmatprep.subr.bf16.mxu0 0
      %806 = vmatpush1.bf16.xpose.msra.mxu0 0
      %807 = vmatprep.subr.bf16.mxu0 0
      %808 = vmatpush1.bf16.xpose.msra.mxu0 0
      %809 = vmatprep.subr.bf16.mxu0 0
      %810 = vmatpush1.bf16.xpose.msra.mxu0 0
      %811 = vmatprep.subr.bf16.mxu0 0
      %812 = vmatpush1.bf16.xpose.msra.mxu0 0
      %813 = vmatprep.subr.bf16.mxu0 0
      %814 = vmatpush1.bf16.xpose.msra.mxu0 0
      %815 = vmatprep.subr.bf16.mxu0 0
      %816 = vmatpush1.bf16.xpose.msra.mxu0 0
      %817 = vmatprep.mubr.bf16.mxu0 0
      %818 = vmatmul.mubr.bf16.gmra.mrb[0].mxu0 %v780
      %v819 = vpop.f32.mrb[0].mxu0
      %v820 = vadd.f32 %v774, %v819
      %v821 = vpop.f32.mrb[0].mxu0
      %v822 = vpop.f32.mrb[0].mxu0
      %v823 = vpop.f32.mrb[0].mxu0
      %824 = vdwg.mxu0
      %s825 = scalar_lea.vmem %s400, 24
      %826 = vst.msk [vmem:[%s825] sm:$0xff] %vm417, %v820
      %v827 = vsel %vm417, %v820, -inf
      %828 = vmax.xlane.f32.xlu0 %v827
      %v829 = vpop.xlane.xlu0 %828
      %vm830 = vcmp.eq.f32.partialorder %v829, -inf
      %v831 = vsel %vm830, 0.0, %v829
      %v832 = vsub.f32 %v820, %v831
      %v833 = vmul.f32 %v832, 1.442695
      %v834 = vpow.pop %v833
      %v835 = vsel %vm417, %v834, 0.0
      %836 = vadd.xlane.f32.xlu0 %v835
      %v837 = vpop.xlane.xlu0 %836
      %vm838 = vcmp.gt.f32.partialorder %v837, 0.0
      %v839 = vsel %vm838, %v837, 1.0
      %v840 = vrcp.pop %v839
      %v841 = vmul.f32 %v834, %v840
      %v842 = vpack.c.bf16 %v841, %v841
      %843 = vrot.lane.b32.xlu0 %v606, 104
      %v844 = vpop.permute.xlu0 %843
      %v846 = vsel %vm417, %v842, 0
      %v849 = vsel %vm484, %v844, 0
      %851 = vmatprep.subr.bf16.mxu0 0
      %852 = vmatpush1.bf16.msra.mxu0 %v849
      %853 = vmatprep.subr.bf16.mxu0 0
      %854 = vmatpush1.bf16.msra.mxu0 0
      %855 = vmatprep.subr.bf16.mxu0 0
      %856 = vmatpush1.bf16.msra.mxu0 0
      %857 = vmatprep.subr.bf16.mxu0 0
      %858 = vmatpush1.bf16.msra.mxu0 0
      %859 = vmatprep.subr.bf16.mxu0 0
      %860 = vmatpush1.bf16.msra.mxu0 0
      %861 = vmatprep.subr.bf16.mxu0 0
      %862 = vmatpush1.bf16.msra.mxu0 0
      %863 = vmatprep.subr.bf16.mxu0 0
      %864 = vmatpush1.bf16.msra.mxu0 0
      %865 = vmatprep.subr.bf16.mxu0 0
      %866 = vmatpush1.bf16.msra.mxu0 0
      %867 = vmatprep.subr.bf16.mxu0 0
      %868 = vmatpush1.bf16.msra.mxu0 0
      %869 = vmatprep.subr.bf16.mxu0 0
      %870 = vmatpush1.bf16.msra.mxu0 0
      %871 = vmatprep.subr.bf16.mxu0 0
      %872 = vmatpush1.bf16.msra.mxu0 0
      %873 = vmatprep.subr.bf16.mxu0 0
      %874 = vmatpush1.bf16.msra.mxu0 0
      %875 = vmatprep.subr.bf16.mxu0 0
      %876 = vmatpush1.bf16.msra.mxu0 0
      %877 = vmatprep.subr.bf16.mxu0 0
      %878 = vmatpush1.bf16.msra.mxu0 0
      %879 = vmatprep.subr.bf16.mxu0 0
      %880 = vmatpush1.bf16.msra.mxu0 0
      %881 = vmatprep.subr.bf16.mxu0 0
      %882 = vmatpush1.bf16.msra.mxu0 0
      %883 = vmatprep.mubr.bf16.mxu0 0
      %884 = vmatmul.mubr.bf16.gmra.mrb[0].mxu0 %v846
      %v885 = vpop.f32.mrb[0].mxu0
      %v886 = vadd.f32 0.0, %v885
      %v887 = vpop.f32.mrb[0].mxu0
      %v888 = vpop.f32.mrb[0].mxu0
      %v889 = vpop.f32.mrb[0].mxu0
      %890 = vdwg.mxu0
      %892 = vrot.lane.b32.xlu0 %v650, 8
      %v893 = vpop.permute.xlu0 %892
      %896 = vrot.lane.b32.xlu0 %v768, 16
      %v897 = vpop.permute.xlu0 %896
      %900 = vrot.lane.b32.xlu0 %v886, 24
      %v901 = vpop.permute.xlu0 %900
      %v903 = vsel %vm417, %v523, %v893
      %vm904 = vcmask 130048
      %v905 = vsel %vm904, %v903, %v897
      %vm906 = vcmask 195584
      %v907 = vsel %vm906, %v905, %v901
      %v908 = vpack.c.bf16 %v907, %v907
      %vm909 = vcmask 257024
      %910 = vst.msk [vmem:[%s411] sm:$0xf] %vm909, %v908
      %s911 = smul.u32 4, %s23
      %p912 = scmp.lt.s32.totalorder %s22, 1
      %s913 = scalar_select %p912, %s22, 1
      %p914 = scmp.lt.s32.totalorder %s911, 3
      %s915 = scalar_select %p914, %s911, 3
      %p916 = scmp.lt.s32.totalorder %s24, 0
      %s917 = scalar_select %p916, %s24, 0
      %s918 = sadd.s32 %s917, %s915
      %s919 = smul.addr %s913, 4
      %s920 = sadd.s32 %s918, %s919
      %s921 = smul.addr %s920, 8
      %s922 = scalar_lea.vmem %s4, %s921
      %p923 = scmp.lt.s32.totalorder %s22, 1
      %s924 = scalar_select %p923, %s22, 1
      %p925 = scmp.lt.s32.totalorder %s24, 0
      %s926 = scalar_select %p925, %s24, 0
      %p927 = scmp.lt.s32.totalorder %s23, 0
      %s928 = scalar_select %p927, %s23, 0
      %s929 = sadd.s32 %s928, %s926
      %s930 = sadd.s32 %s929, %s924
      %s931 = smul.addr %s930, 4
      %s932 = scalar_lea.vmem %s5, %s931
      // Predicated region
      $region37: #{transformer_encoder_with_pair.9} parent=35 // pred_check
        %p933 = pneg %p174
      $region38: #{transformer_encoder_with_pair.9} parent=35 // pred_check_branch
        %935 = sbr.rel (%p933) target = $region40
      $region39: #{transformer_encoder_with_pair.9} parent=35 // pred_region
        %s936 = smul.u32 4, %s23
      $region40: #{transformer_encoder_with_pair.9} parent=35 // pred_fallthru
        _
      // Predicated region
      $region41: #{transformer_encoder_with_pair.9} parent=35 // pred_check
        %p937 = pneg %p204
      $region42: #{transformer_encoder_with_pair.9} parent=35 // pred_check_branch
        %939 = sbr.rel (%p937) target = $region44
      $region43: #{transformer_encoder_with_pair.9} parent=35 // pred_region
        _
      $region44: #{transformer_encoder_with_pair.9} parent=35 // pred_fallthru
        _
    $region36: #{transformer_encoder_with_pair.9} parent=5 // pred_fallthru
      _
    %p940 = scmp.le.s32.totalorder 2, %s12
    // Predicated region
    $region45: #{transformer_encoder_with_pair.9} parent=5 // pred_check
      %p941 = pneg %p940
    $region46: #{transformer_encoder_with_pair.9} parent=5 // pred_check_branch
      %943 = sbr.rel (%p941) target = $region48
    $region47: #{transformer_encoder_with_pair.9} parent=5 // pred_region
      %s944 = ssub.s32 %s12, 2
      // Predicated region
      $region49: #{transformer_encoder_with_pair.9} parent=47 // pred_check
        %p945 = pneg %p180
      $region50: #{transformer_encoder_with_pair.9} parent=47 // pred_check_branch
        %947 = sbr.rel (%p945) target = $region52
      $region51: #{transformer_encoder_with_pair.9} parent=47 // pred_region
        %s948 = smul.u32 4, %s26
        %p949 = scmp.lt.s32.totalorder %s25, 1
        %s950 = scalar_select %p949, %s25, 1
        %p951 = scmp.lt.s32.totalorder %s948, 3
        %s952 = scalar_select %p951, %s948, 3
        %p953 = scmp.lt.s32.totalorder %s27, 0
        %s954 = scalar_select %p953, %s27, 0
        %s955 = sadd.s32 %s954, %s952
        %s956 = smul.addr %s950, 4
        %s957 = sadd.s32 %s955, %s956
        %s958 = smul.addr %s957, 8
        %s959 = scalar_lea.vmem %s4, %s958
      $region52: #{transformer_encoder_with_pair.9} parent=47 // pred_fallthru
        _
      // Predicated region
      $region53: #{transformer_encoder_with_pair.9} parent=47 // pred_check
        %p960 = pneg %p210
      $region54: #{transformer_encoder_with_pair.9} parent=47 // pred_check_branch
        %962 = sbr.rel (%p960) target = $region56
      $region55: #{transformer_encoder_with_pair.9} parent=47 // pred_region
        %p963 = scmp.lt.s32.totalorder %s25, 1
        %s964 = scalar_select %p963, %s25, 1
        %p965 = scmp.lt.s32.totalorder %s27, 0
        %s966 = scalar_select %p965, %s27, 0
        %p967 = scmp.lt.s32.totalorder %s26, 0
        %s968 = scalar_select %p967, %s26, 0
        %s969 = sadd.s32 %s968, %s966
        %s970 = sadd.s32 %s969, %s964
        %s971 = smul.addr %s970, 4
        %s972 = scalar_lea.vmem %s5, %s971
      $region56: #{transformer_encoder_with_pair.9} parent=47 // pred_fallthru
        _
    $region48: #{transformer_encoder_with_pair.9} parent=5 // pred_fallthru
      _
  $region6: #{transformer_encoder_with_pair.9} parent=0 // loop_footer
    %s16 = sadd.s32 1, %s12
  $region7: #{transformer_encoder_with_pair.9} parent=0 // loop_footer_branch
    %11 = sbr.rel target = $region3
  $region8: #{transformer_encoder_with_pair.9} parent=0 // loop_exit
    _

// kernel: transformer_encoder_with_pair.13
$region0: #{transformer_encoder_with_pair.13}
  #allocation0 [shape = 'u32[]', space=smem, size = 0x4, offset = 0x4, fixed_abs, tag = 'smem constant byte address 0x4 - core index']
  #allocation1 [shape = 'u32[144,128]{1,0:T(1,128)}', space=vmem, size = 0x12000, scoped, tag = 'internal scratch']
  %s0 = inlined_call_operand.vmem [shape: bf16[16,32], index: 0, kind: input, shape index: {}]
  %s1 = inlined_call_operand.vmem [shape: f32[16,32], index: 1, kind: input, shape index: {}]
  %s2 = inlined_call_operand.vmem [shape: bf16[32,32], index: 2, kind: input, shape index: {}]
  %s3 = inlined_call_operand.vmem [shape: f32[1,32], index: 3, kind: input, shape index: {}]
  %s4 = inlined_call_operand.vmem [shape: f32[1,32], index: 4, kind: input, shape index: {}]
  %s5 = inlined_call_operand.vmem [shape: f32[1,32], index: 5, kind: input, shape index: {}]
  %s6 = inlined_call_operand.vmem [shape: bf16[32,64], index: 6, kind: input, shape index: {}]
  %s7 = inlined_call_operand.vmem [shape: f32[1,64], index: 7, kind: input, shape index: {}]
  %s8 = inlined_call_operand.vmem [shape: bf16[64,32], index: 8, kind: input, shape index: {}]
  %s9 = inlined_call_operand.vmem [shape: f32[1,32], index: 9, kind: input, shape index: {}]
  %s10 = inlined_call_operand.vmem [shape: f32[1,32], index: 10, kind: input, shape index: {}]
  %s11 = inlined_call_operand.vmem [shape: f32[1,32], index: 11, kind: input, shape index: {}]
  %s12 = inlined_call_operand.hbm [shape: f32[16,32], index: 12, kind: output, shape index: {}]
  %s13 = sld [smem:[#allocation0]]
  $region81: #{transformer_encoder_with_pair.13} parent=0
    _
  %s15 = ssub.s32 1, %s13
  %s16 = scalar_select 0, %s15, %s13
  $region1: #{transformer_encoder_with_pair.13} parent=0
    #allocation2 [shape = 'u8[8192]{0}', space=vmem, size = 0x2000, scoped, tag = 'output window, operand 0']
    #allocation3 [shape = 's32[2]{0}', space=sflag, size = 0x8, scoped, tag = 'scoped memory for transformer_encoder_with_pair.13']
    %17 = vsyncpa [#allocation3], 0
    %s18 = scalar_lea.sflag [#allocation3], 1
    %19 = vsyncpa %s18, 0
    loop: start=0, step=1, limit=4
    $region2: #{transformer_encoder_with_pair.13} parent=1 // loop_pre_header
      _
    $region3: #{transformer_encoder_with_pair.13} parent=1 // loop_header
      %s21 = sphi 0, %s25
      %p22 = scmp.ge.s32.totalorder %s21, 4
      %s31 = sphi 0, %s33
      %s34 = sphi 0, %s31
      %s35 = sphi 0, %s34
      %s51 = sphi 0, %s35
      %s57 = sphi 0, %s59
      %s60 = sphi 0, %s57
      %s61 = sphi 0, %s60
      %s77 = sphi 0, %s61
      %s81 = sphi 0, %s81
      %s83 = sphi 0, %s81
      %s84 = sphi 0, %s83
      %s98 = sphi 0, %s84
      %s102 = sphi 0, %s102
      %s104 = sphi 0, %s102
      %s105 = sphi 0, %s104
      %s119 = sphi 0, %s105
      %s123 = sphi 0, %s123
      %s125 = sphi 0, %s123
      %s126 = sphi 0, %s125
      %s140 = sphi 0, %s126
      %s144 = sphi 0, %s144
      %s146 = sphi 0, %s144
      %s147 = sphi 0, %s146
      %s161 = sphi 0, %s147
      %s165 = sphi 0, %s165
      %s167 = sphi 0, %s165
      %s168 = sphi 0, %s167
      %s182 = sphi 0, %s168
      %s186 = sphi 0, %s186
      %s188 = sphi 0, %s186
      %s189 = sphi 0, %s188
      %s203 = sphi 0, %s189
      %s207 = sphi 0, %s207
      %s209 = sphi 0, %s207
      %s210 = sphi 0, %s209
      %s224 = sphi 0, %s210
      %s228 = sphi 0, %s228
      %s230 = sphi 0, %s228
      %s231 = sphi 0, %s230
      %s245 = sphi 0, %s231
      %s249 = sphi 0, %s249
      %s251 = sphi 0, %s249
      %s252 = sphi 0, %s251
      %s266 = sphi 0, %s252
      %s270 = sphi 0, %s270
      %s272 = sphi 0, %s270
      %s273 = sphi 0, %s272
      %s287 = sphi 0, %s273
      %s293 = sphi 0, %s295
      %s296 = sphi 0, %s293
      %s297 = sphi 0, %s296
      %s313 = sphi 0, %s297
    $region4: #{transformer_encoder_with_pair.13} parent=1 // loop_header_branch
      %24 = sbr.rel (%p22) target = $region8
    $region5: #{transformer_encoder_with_pair.13} parent=1 // loop_body
      %s26 = ssub.s32 %s21, 1
      %s27 = ssub.s32 %s21, 2
      %s28 = sadd.s32 %s21, 1
      %s29 = ssub.s32 %s21, %s28
      %p30 = scmp.eq.s32.totalorder %s29, 0
      %s32 = sadd.s32 %s31, 1
      %s33 = scalar_select %p30, %s31, %s32
      %p36 = pneg %p30
      %p37 = scmp.eq.s32.totalorder %s21, 1
      %p38 = por %p36, %p37
      %p39 = scmp.ne.s32.totalorder %s31, %s34
      %p40 = scmp.eq.s32.totalorder %s21, 0
      %p41 = por %p39, %p40
      %p42 = scmp.ne.s32.totalorder %s31, %s34
      %p43 = scmp.eq.s32.totalorder %s26, 1
      %p44 = por %p42, %p43
      %p45 = scmp.ne.s32.totalorder %s34, %s35
      %p46 = scmp.eq.s32.totalorder %s26, 0
      %p47 = por %p45, %p46
      %p48 = scmp.ne.s32.totalorder %s34, %s35
      %p49 = scmp.eq.s32.totalorder %s27, 1
      %p50 = por %p48, %p49
      %p52 = scmp.ne.s32.totalorder %s35, %s51
      %p53 = scmp.eq.s32.totalorder %s27, 0
      %p54 = por %p52, %p53
      %s55 = ssub.s32 %s21, %s28
      %p56 = scmp.eq.s32.totalorder %s55, 0
      %s58 = sadd.s32 %s57, 1
      %s59 = scalar_select %p56, %s57, %s58
      %p62 = pneg %p56
      %p63 = scmp.eq.s32.totalorder %s21, 1
      %p64 = por %p62, %p63
      %p65 = scmp.ne.s32.totalorder %s57, %s60
      %p66 = scmp.eq.s32.totalorder %s21, 0
      %p67 = por %p65, %p66
      %p68 = scmp.ne.s32.totalorder %s57, %s60
      %p69 = scmp.eq.s32.totalorder %s26, 1
      %p70 = por %p68, %p69
      %p71 = scmp.ne.s32.totalorder %s60, %s61
      %p72 = scmp.eq.s32.totalorder %s26, 0
      %p73 = por %p71, %p72
      %p74 = scmp.ne.s32.totalorder %s60, %s61
      %p75 = scmp.eq.s32.totalorder %s27, 1
      %p76 = por %p74, %p75
      %p78 = scmp.ne.s32.totalorder %s61, %s77
      %p79 = scmp.eq.s32.totalorder %s27, 0
      %p80 = por %p78, %p79
      %s82 = sadd.s32 %s81, 1
      %p85 = scmp.eq.s32.totalorder %s21, 1
      %p86 = scmp.ne.s32.totalorder %s81, %s83
      %p87 = scmp.eq.s32.totalorder %s21, 0
      %p88 = por %p86, %p87
      %p89 = scmp.ne.s32.totalorder %s81, %s83
      %p90 = scmp.eq.s32.totalorder %s26, 1
      %p91 = por %p89, %p90
      %p92 = scmp.ne.s32.totalorder %s83, %s84
      %p93 = scmp.eq.s32.totalorder %s26, 0
      %p94 = por %p92, %p93
      %p95 = scmp.ne.s32.totalorder %s83, %s84
      %p96 = scmp.eq.s32.totalorder %s27, 1
      %p97 = por %p95, %p96
      %p99 = scmp.ne.s32.totalorder %s84, %s98
      %p100 = scmp.eq.s32.totalorder %s27, 0
      %p101 = por %p99, %p100
      %s103 = sadd.s32 %s102, 1
      %p106 = scmp.eq.s32.totalorder %s21, 1
      %p107 = scmp.ne.s32.totalorder %s102, %s104
      %p108 = scmp.eq.s32.totalorder %s21, 0
      %p109 = por %p107, %p108
      %p110 = scmp.ne.s32.totalorder %s102, %s104
      %p111 = scmp.eq.s32.totalorder %s26, 1
      %p112 = por %p110, %p111
      %p113 = scmp.ne.s32.totalorder %s104, %s105
      %p114 = scmp.eq.s32.totalorder %s26, 0
      %p115 = por %p113, %p114
      %p116 = scmp.ne.s32.totalorder %s104, %s105
      %p117 = scmp.eq.s32.totalorder %s27, 1
      %p118 = por %p116, %p117
      %p120 = scmp.ne.s32.totalorder %s105, %s119
      %p121 = scmp.eq.s32.totalorder %s27, 0
      %p122 = por %p120, %p121
      %s124 = sadd.s32 %s123, 1
      %p127 = scmp.eq.s32.totalorder %s21, 1
      %p128 = scmp.ne.s32.totalorder %s123, %s125
      %p129 = scmp.eq.s32.totalorder %s21, 0
      %p130 = por %p128, %p129
      %p131 = scmp.ne.s32.totalorder %s123, %s125
      %p132 = scmp.eq.s32.totalorder %s26, 1
      %p133 = por %p131, %p132
      %p134 = scmp.ne.s32.totalorder %s125, %s126
      %p135 = scmp.eq.s32.totalorder %s26, 0
      %p136 = por %p134, %p135
      %p137 = scmp.ne.s32.totalorder %s125, %s126
      %p138 = scmp.eq.s32.totalorder %s27, 1
      %p139 = por %p137, %p138
      %p141 = scmp.ne.s32.totalorder %s126, %s140
      %p142 = scmp.eq.s32.totalorder %s27, 0
      %p143 = por %p141, %p142
      %s145 = sadd.s32 %s144, 1
      %p148 = scmp.eq.s32.totalorder %s21, 1
      %p149 = scmp.ne.s32.totalorder %s144, %s146
      %p150 = scmp.eq.s32.totalorder %s21, 0
      %p151 = por %p149, %p150
      %p152 = scmp.ne.s32.totalorder %s144, %s146
      %p153 = scmp.eq.s32.totalorder %s26, 1
      %p154 = por %p152, %p153
      %p155 = scmp.ne.s32.totalorder %s146, %s147
      %p156 = scmp.eq.s32.totalorder %s26, 0
      %p157 = por %p155, %p156
      %p158 = scmp.ne.s32.totalorder %s146, %s147
      %p159 = scmp.eq.s32.totalorder %s27, 1
      %p160 = por %p158, %p159
      %p162 = scmp.ne.s32.totalorder %s147, %s161
      %p163 = scmp.eq.s32.totalorder %s27, 0
      %p164 = por %p162, %p163
      %s166 = sadd.s32 %s165, 1
      %p169 = scmp.eq.s32.totalorder %s21, 1
      %p170 = scmp.ne.s32.totalorder %s165, %s167
      %p171 = scmp.eq.s32.totalorder %s21, 0
      %p172 = por %p170, %p171
      %p173 = scmp.ne.s32.totalorder %s165, %s167
      %p174 = scmp.eq.s32.totalorder %s26, 1
      %p175 = por %p173, %p174
      %p176 = scmp.ne.s32.totalorder %s167, %s168
      %p177 = scmp.eq.s32.totalorder %s26, 0
      %p178 = por %p176, %p177
      %p179 = scmp.ne.s32.totalorder %s167, %s168
      %p180 = scmp.eq.s32.totalorder %s27, 1
      %p181 = por %p179, %p180
      %p183 = scmp.ne.s32.totalorder %s168, %s182
      %p184 = scmp.eq.s32.totalorder %s27, 0
      %p185 = por %p183, %p184
      %s187 = sadd.s32 %s186, 1
      %p190 = scmp.eq.s32.totalorder %s21, 1
      %p191 = scmp.ne.s32.totalorder %s186, %s188
      %p192 = scmp.eq.s32.totalorder %s21, 0
      %p193 = por %p191, %p192
      %p194 = scmp.ne.s32.totalorder %s186, %s188
      %p195 = scmp.eq.s32.totalorder %s26, 1
      %p196 = por %p194, %p195
      %p197 = scmp.ne.s32.totalorder %s188, %s189
      %p198 = scmp.eq.s32.totalorder %s26, 0
      %p199 = por %p197, %p198
      %p200 = scmp.ne.s32.totalorder %s188, %s189
      %p201 = scmp.eq.s32.totalorder %s27, 1
      %p202 = por %p200, %p201
      %p204 = scmp.ne.s32.totalorder %s189, %s203
      %p205 = scmp.eq.s32.totalorder %s27, 0
      %p206 = por %p204, %p205
      %s208 = sadd.s32 %s207, 1
      %p211 = scmp.eq.s32.totalorder %s21, 1
      %p212 = scmp.ne.s32.totalorder %s207, %s209
      %p213 = scmp.eq.s32.totalorder %s21, 0
      %p214 = por %p212, %p213
      %p215 = scmp.ne.s32.totalorder %s207, %s209
      %p216 = scmp.eq.s32.totalorder %s26, 1
      %p217 = por %p215, %p216
      %p218 = scmp.ne.s32.totalorder %s209, %s210
      %p219 = scmp.eq.s32.totalorder %s26, 0
      %p220 = por %p218, %p219
      %p221 = scmp.ne.s32.totalorder %s209, %s210
      %p222 = scmp.eq.s32.totalorder %s27, 1
      %p223 = por %p221, %p222
      %p225 = scmp.ne.s32.totalorder %s210, %s224
      %p226 = scmp.eq.s32.totalorder %s27, 0
      %p227 = por %p225, %p226
      %s229 = sadd.s32 %s228, 1
      %p232 = scmp.eq.s32.totalorder %s21, 1
      %p233 = scmp.ne.s32.totalorder %s228, %s230
      %p234 = scmp.eq.s32.totalorder %s21, 0
      %p235 = por %p233, %p234
      %p236 = scmp.ne.s32.totalorder %s228, %s230
      %p237 = scmp.eq.s32.totalorder %s26, 1
      %p238 = por %p236, %p237
      %p239 = scmp.ne.s32.totalorder %s230, %s231
      %p240 = scmp.eq.s32.totalorder %s26, 0
      %p241 = por %p239, %p240
      %p242 = scmp.ne.s32.totalorder %s230, %s231
      %p243 = scmp.eq.s32.totalorder %s27, 1
      %p244 = por %p242, %p243
      %p246 = scmp.ne.s32.totalorder %s231, %s245
      %p247 = scmp.eq.s32.totalorder %s27, 0
      %p248 = por %p246, %p247
      %s250 = sadd.s32 %s249, 1
      %p253 = scmp.eq.s32.totalorder %s21, 1
      %p254 = scmp.ne.s32.totalorder %s249, %s251
      %p255 = scmp.eq.s32.totalorder %s21, 0
      %p256 = por %p254, %p255
      %p257 = scmp.ne.s32.totalorder %s249, %s251
      %p258 = scmp.eq.s32.totalorder %s26, 1
      %p259 = por %p257, %p258
      %p260 = scmp.ne.s32.totalorder %s251, %s252
      %p261 = scmp.eq.s32.totalorder %s26, 0
      %p262 = por %p260, %p261
      %p263 = scmp.ne.s32.totalorder %s251, %s252
      %p264 = scmp.eq.s32.totalorder %s27, 1
      %p265 = por %p263, %p264
      %p267 = scmp.ne.s32.totalorder %s252, %s266
      %p268 = scmp.eq.s32.totalorder %s27, 0
      %p269 = por %p267, %p268
      %s271 = sadd.s32 %s270, 1
      %p274 = scmp.eq.s32.totalorder %s21, 1
      %p275 = scmp.ne.s32.totalorder %s270, %s272
      %p276 = scmp.eq.s32.totalorder %s21, 0
      %p277 = por %p275, %p276
      %p278 = scmp.ne.s32.totalorder %s270, %s272
      %p279 = scmp.eq.s32.totalorder %s26, 1
      %p280 = por %p278, %p279
      %p281 = scmp.ne.s32.totalorder %s272, %s273
      %p282 = scmp.eq.s32.totalorder %s26, 0
      %p283 = por %p281, %p282
      %p284 = scmp.ne.s32.totalorder %s272, %s273
      %p285 = scmp.eq.s32.totalorder %s27, 1
      %p286 = por %p284, %p285
      %p288 = scmp.ne.s32.totalorder %s273, %s287
      %p289 = scmp.eq.s32.totalorder %s27, 0
      %p290 = por %p288, %p289
      %s291 = ssub.s32 %s21, %s28
      %p292 = scmp.eq.s32.totalorder %s291, 0
      %s294 = sadd.s32 %s293, 1
      %s295 = scalar_select %p292, %s293, %s294
      %p298 = pneg %p292
      %p299 = scmp.eq.s32.totalorder %s21, 1
      %p300 = por %p298, %p299
      %p301 = scmp.ne.s32.totalorder %s293, %s296
      %p302 = scmp.eq.s32.totalorder %s21, 0
      %p303 = por %p301, %p302
      %p304 = scmp.ne.s32.totalorder %s293, %s296
      %p305 = scmp.eq.s32.totalorder %s26, 1
      %p306 = por %p304, %p305
      %p307 = scmp.ne.s32.totalorder %s296, %s297
      %p308 = scmp.eq.s32.totalorder %s26, 0
      %p309 = por %p307, %p308
      %p310 = scmp.ne.s32.totalorder %s296, %s297
      %p311 = scmp.eq.s32.totalorder %s27, 1
      %p312 = por %p310, %p311
      %p314 = scmp.ne.s32.totalorder %s297, %s313
      %p315 = scmp.eq.s32.totalorder %s27, 0
      %p316 = por %p314, %p315
      %p317 = scmp.le.s32.totalorder 1, %s21
      %p318 = scmp.lt.s32.totalorder %s21, 3
      %p319 = pnand %p317, %p318
      %p320 = pneg %p319
      // Predicated region
      $region9: #{transformer_encoder_with_pair.13} parent=5 // pred_check
        _
      $region10: #{transformer_encoder_with_pair.13} parent=5 // pred_check_branch
        %322 = sbr.rel (%p319) target = $region12
      $region11: #{transformer_encoder_with_pair.13} parent=5 // pred_region
        %s323 = ssub.s32 %s21, 1
        // Predicated region
        $region13: #{transformer_encoder_with_pair.13} parent=11 // pred_check
          %p324 = pneg %p94
        $region14: #{transformer_encoder_with_pair.13} parent=11 // pred_check_branch
          %326 = sbr.rel (%p324) target = $region16
        $region15: #{transformer_encoder_with_pair.13} parent=11 // pred_region
          _
        $region16: #{transformer_encoder_with_pair.13} parent=11 // pred_fallthru
          _
        // Predicated region
        $region17: #{transformer_encoder_with_pair.13} parent=11 // pred_check
          %p327 = pneg %p115
        $region18: #{transformer_encoder_with_pair.13} parent=11 // pred_check_branch
          %329 = sbr.rel (%p327) target = $region20
        $region19: #{transformer_encoder_with_pair.13} parent=11 // pred_region
          _
        $region20: #{transformer_encoder_with_pair.13} parent=11 // pred_fallthru
          _
        // Predicated region
        $region21: #{transformer_encoder_with_pair.13} parent=11 // pred_check
          %p330 = pneg %p136
        $region22: #{transformer_encoder_with_pair.13} parent=11 // pred_check_branch
          %332 = sbr.rel (%p330) target = $region24
        $region23: #{transformer_encoder_with_pair.13} parent=11 // pred_region
          _
        $region24: #{transformer_encoder_with_pair.13} parent=11 // pred_fallthru
          _
        // Predicated region
        $region25: #{transformer_encoder_with_pair.13} parent=11 // pred_check
          %p333 = pneg %p157
        $region26: #{transformer_encoder_with_pair.13} parent=11 // pred_check_branch
          %335 = sbr.rel (%p333) target = $region28
        $region27: #{transformer_encoder_with_pair.13} parent=11 // pred_region
          _
        $region28: #{transformer_encoder_with_pair.13} parent=11 // pred_fallthru
          _
        // Predicated region
        $region29: #{transformer_encoder_with_pair.13} parent=11 // pred_check
          %p336 = pneg %p178
        $region30: #{transformer_encoder_with_pair.13} parent=11 // pred_check_branch
          %338 = sbr.rel (%p336) target = $region32
        $region31: #{transformer_encoder_with_pair.13} parent=11 // pred_region
          _
        $region32: #{transformer_encoder_with_pair.13} parent=11 // pred_fallthru
          _
        // Predicated region
        $region33: #{transformer_encoder_with_pair.13} parent=11 // pred_check
          %p339 = pneg %p199
        $region34: #{transformer_encoder_with_pair.13} parent=11 // pred_check_branch
          %341 = sbr.rel (%p339) target = $region36
        $region35: #{transformer_encoder_with_pair.13} parent=11 // pred_region
          _
        $region36: #{transformer_encoder_with_pair.13} parent=11 // pred_fallthru
          _
        // Predicated region
        $region37: #{transformer_encoder_with_pair.13} parent=11 // pred_check
          %p342 = pneg %p220
        $region38: #{transformer_encoder_with_pair.13} parent=11 // pred_check_branch
          %344 = sbr.rel (%p342) target = $region40
        $region39: #{transformer_encoder_with_pair.13} parent=11 // pred_region
          _
        $region40: #{transformer_encoder_with_pair.13} parent=11 // pred_fallthru
          _
        // Predicated region
        $region41: #{transformer_encoder_with_pair.13} parent=11 // pred_check
          %p345 = pneg %p241
        $region42: #{transformer_encoder_with_pair.13} parent=11 // pred_check_branch
          %347 = sbr.rel (%p345) target = $region44
        $region43: #{transformer_encoder_with_pair.13} parent=11 // pred_region
          _
        $region44: #{transformer_encoder_with_pair.13} parent=11 // pred_fallthru
          _
        // Predicated region
        $region45: #{transformer_encoder_with_pair.13} parent=11 // pred_check
          %p348 = pneg %p262
        $region46: #{transformer_encoder_with_pair.13} parent=11 // pred_check_branch
          %350 = sbr.rel (%p348) target = $region48
        $region47: #{transformer_encoder_with_pair.13} parent=11 // pred_region
          _
        $region48: #{transformer_encoder_with_pair.13} parent=11 // pred_fallthru
          _
        // Predicated region
        $region49: #{transformer_encoder_with_pair.13} parent=11 // pred_check
          %p351 = pneg %p283
        $region50: #{transformer_encoder_with_pair.13} parent=11 // pred_check_branch
          %353 = sbr.rel (%p351) target = $region52
        $region51: #{transformer_encoder_with_pair.13} parent=11 // pred_region
          _
        $region52: #{transformer_encoder_with_pair.13} parent=11 // pred_fallthru
          _
      $region12: #{transformer_encoder_with_pair.13} parent=5 // pred_fallthru
        _
      %p354 = scmp.lt.s32.totalorder %s21, 2
      // Predicated region
      $region53: #{transformer_encoder_with_pair.13} parent=5 // pred_check
        %p355 = pneg %p354
      $region54: #{transformer_encoder_with_pair.13} parent=5 // pred_check_branch
        %357 = sbr.rel (%p355) target = $region56
      $region55: #{transformer_encoder_with_pair.13} parent=5 // pred_region
        // Predicated region
        $region57: #{transformer_encoder_with_pair.13} parent=55 // pred_check
          %p358 = pneg %p41
        $region58: #{transformer_encoder_with_pair.13} parent=55 // pred_check_branch
          %360 = sbr.rel (%p358) target = $region60
        $region59: #{transformer_encoder_with_pair.13} parent=55 // pred_region
          %p361 = scmp.lt.s32.totalorder %s21, 1
          %s362 = scalar_select %p361, %s21, 1
          %s363 = smul.addr %s362, 4
          %s364 = scalar_lea.vmem %s0, %s363
        $region60: #{transformer_encoder_with_pair.13} parent=55 // pred_fallthru
          _
        // Predicated region
        $region61: #{transformer_encoder_with_pair.13} parent=55 // pred_check
          %p365 = pneg %p67
        $region62: #{transformer_encoder_with_pair.13} parent=55 // pred_check_branch
          %367 = sbr.rel (%p365) target = $region64
        $region63: #{transformer_encoder_with_pair.13} parent=55 // pred_region
          %p368 = scmp.lt.s32.totalorder %s21, 1
          %s369 = scalar_select %p368, %s21, 1
          %s370 = smul.addr %s369, 8
          %s371 = scalar_lea.vmem %s1, %s370
        $region64: #{transformer_encoder_with_pair.13} parent=55 // pred_fallthru
          _
      $region56: #{transformer_encoder_with_pair.13} parent=5 // pred_fallthru
        _
      %p372 = scmp.le.s32.totalorder 1, %s21
      %p373 = scmp.lt.s32.totalorder %s21, 3
      %p374 = pnand %p372, %p373
      %p375 = pneg %p374
      // Predicated region
      $region65: #{transformer_encoder_with_pair.13} parent=5 // pred_check
        _
      $region66: #{transformer_encoder_with_pair.13} parent=5 // pred_check_branch
        %377 = sbr.rel (%p374) target = $region68
      $region67: #{transformer_encoder_with_pair.13} parent=5 // pred_region
        %s378 = ssub.s32 %s21, 1
        %p379 = scmp.lt.s32.totalorder %s26, 1
        %s380 = scalar_select %p379, %s26, 1
        %s381 = smul.addr %s380, 4
        %s382 = scalar_lea.vmem %s0, %s381
        %p383 = pneg %p47
        %p384 = pneg %p44
        %p385 = scmp.lt.s32.totalorder %s26, 1
        %s386 = scalar_select %p385, %s26, 1
        %s387 = smul.addr %s386, 8
        %s388 = scalar_lea.vmem %s1, %s387
        %p389 = pneg %p73
        %p390 = pneg %p70
        %p391 = pneg %p94
        %p392 = pneg %p91
        %p393 = pneg %p115
        %p394 = pneg %p112
        %p395 = pneg %p136
        %p396 = pneg %p133
        %p397 = pneg %p157
        %p398 = pneg %p154
        %p399 = pneg %p178
        %p400 = pneg %p175
        %p401 = pneg %p199
        %p402 = pneg %p196
        %p403 = pneg %p220
        %p404 = pneg %p217
        %p405 = pneg %p241
        %p406 = pneg %p238
        %p407 = pneg %p262
        %p408 = pneg %p259
        %p409 = pneg %p283
        %p410 = pneg %p280
        %p411 = pneg %p309
        %p412 = pneg %p306
        %s413 = sand.u32 %s296, 1
        %s414 = scalar_lea.sflag [#allocation3], %s413
        %s415 = sand.u32 %s296, 1
        %s416 = smul.addr %s415, 8
        %s417 = scalar_lea.vmem [#allocation2], %s416
        %p418 = scmp.lt.s32.totalorder %s26, 1
        %s419 = scalar_select %p418, %s26, 1
        %s420 = smul.addr %s419, 4
        %s421 = scalar_lea.vmem %s0, %s420
        %p422 = scmp.lt.s32.totalorder %s26, 1
        %s423 = scalar_select %p422, %s26, 1
        %s424 = smul.addr %s423, 8
        %s425 = scalar_lea.vmem %s1, %s424
        %v427 = vld [vmem:[%s421] sm:$0xf]
        %v428 = vld [vmem:[%s2] sm:$0xf]
        %v429 = vld [vmem:[%s2 + $0x4] sm:$0xf]
        %v430 = vld [vmem:[%s2 + $0x8] sm:$0xf]
        %v431 = vld [vmem:[%s2 + $0xc] sm:$0xf]
        %v432 = vld [vmem:[%s3] sm:$0x1]
        %v434 = vlaneseq
        %v435 = vshrl.u32 %v434, 7
        %v436 = vsub.s32 0, %v435
        %v437 = vrot.slane %v432, %v436
        %v443 = vunpack.c.l.b16 %v428
        %v444 = vunpack.c.l.b16 %v429
        %v445 = vunpack.c.l.b16 %v430
        %v446 = vunpack.c.l.b16 %v431
        %v447 = vpack.c.b16 %v444, %v443
        %v448 = vpack.c.b16 %v446, %v445
        %vm451 = vcmask 261120
        %v453 = vsel %vm451, %v427, 0
        %455 = vmatprep.subr.bf16.mxu0 0
        %456 = vmatpush1.bf16.msra.mxu0 %v447
        %457 = vmatprep.subr.bf16.mxu0 0
        %458 = vmatpush1.bf16.msra.mxu0 %v448
        %459 = vmatprep.subr.bf16.mxu0 0
        %460 = vmatpush1.bf16.msra.mxu0 0
        %461 = vmatprep.subr.bf16.mxu0 0
        %462 = vmatpush1.bf16.msra.mxu0 0
        %463 = vmatprep.subr.bf16.mxu0 0
        %464 = vmatpush1.bf16.msra.mxu0 0
        %465 = vmatprep.subr.bf16.mxu0 0
        %466 = vmatpush1.bf16.msra.mxu0 0
        %467 = vmatprep.subr.bf16.mxu0 0
        %468 = vmatpush1.bf16.msra.mxu0 0
        %469 = vmatprep.subr.bf16.mxu0 0
        %470 = vmatpush1.bf16.msra.mxu0 0
        %471 = vmatprep.subr.bf16.mxu0 0
        %472 = vmatpush1.bf16.msra.mxu0 0
        %473 = vmatprep.subr.bf16.mxu0 0
        %474 = vmatpush1.bf16.msra.mxu0 0
        %475 = vmatprep.subr.bf16.mxu0 0
        %476 = vmatpush1.bf16.msra.mxu0 0
        %477 = vmatprep.subr.bf16.mxu0 0
        %478 = vmatpush1.bf16.msra.mxu0 0
        %479 = vmatprep.subr.bf16.mxu0 0
        %480 = vmatpush1.bf16.msra.mxu0 0
        %481 = vmatprep.subr.bf16.mxu0 0
        %482 = vmatpush1.bf16.msra.mxu0 0
        %483 = vmatprep.subr.bf16.mxu0 0
        %484 = vmatpush1.bf16.msra.mxu0 0
        %485 = vmatprep.subr.bf16.mxu0 0
        %486 = vmatpush1.bf16.msra.mxu0 0
        %487 = vmatprep.mubr.bf16.mxu0 0
        %488 = vmatmul.mubr.bf16.gmra.mrb[0].mxu0 %v453
        %v489 = vpop.f32.mrb[0].mxu0
        %v490 = vadd.f32 %v437, %v489
        %v491 = vpop.f32.mrb[0].mxu0
        %v492 = vpop.f32.mrb[0].mxu0
        %v493 = vpop.f32.mrb[0].mxu0
        %494 = vdwg.mxu0
        %v495 = vld [vmem:[%s425] sm:$0xff]
        %v496 = vadd.f32 %v495, %v490
        %v497 = vld [vmem:[%s4] sm:$0x1]
        %v498 = vld [vmem:[%s5] sm:$0x1]
        %v499 = vsel %vm451, %v496, 0.0
        %500 = vadd.xlane.f32.xlu0 %v499
        %v501 = vpop.xlane.xlu0 %500
        %v502 = vrcp.pop 32.0
        %v503 = vmul.f32 %v501, %v502
        %v504 = vsub.f32 %v496, %v503
        %v505 = vmul.f32 %v504, %v504
        %v506 = vsel %vm451, %v505, 0.0
        %507 = vadd.xlane.f32.xlu0 %v506
        %v508 = vpop.xlane.xlu0 %507
        %v509 = vmul.f32 %v508, %v502
        %v510 = vadd.f32 %v509, 1e-05
        %v511 = vrsqrt.pop %v510
        %v512 = vmul.f32 %v504, %v511
        %v514 = vlaneseq
        %v515 = vshrl.u32 %v514, 7
        %v516 = vsub.s32 0, %v515
        %v517 = vrot.slane %v497, %v516
        %v519 = vmul.f32 %v512, %v517
        %v521 = vlaneseq
        %v522 = vshrl.u32 %v521, 7
        %v523 = vsub.s32 0, %v522
        %v524 = vrot.slane %v498, %v523
        %v526 = vadd.f32 %v519, %v524
        %v527 = vpack.c.bf16 %v526, %v526
        %v528 = vld [vmem:[%s6] sm:$0xf]
        %v529 = vld [vmem:[%s6 + $0x4] sm:$0xf]
        %v530 = vld [vmem:[%s6 + $0x8] sm:$0xf]
        %v531 = vld [vmem:[%s6 + $0xc] sm:$0xf]
        %v532 = vld [vmem:[%s7] sm:$0x1]
        %v534 = vlaneseq
        %v535 = vshrl.u32 %v534, 7
        %v536 = vsub.s32 0, %v535
        %v537 = vrot.slane %v532, %v536
        %v543 = vunpack.c.l.b16 %v528
        %v544 = vunpack.c.l.b16 %v529
        %v545 = vunpack.c.l.b16 %v530
        %v546 = vunpack.c.l.b16 %v531
        %v547 = vpack.c.b16 %v544, %v543
        %v548 = vpack.c.b16 %v546, %v545
        %v552 = vsel %vm451, %v527, 0
        %554 = vmatprep.subr.bf16.mxu0 0
        %555 = vmatpush1.bf16.msra.mxu0 %v547
        %556 = vmatprep.subr.bf16.mxu0 0
        %557 = vmatpush1.bf16.msra.mxu0 %v548
        %558 = vmatprep.subr.bf16.mxu0 0
        %559 = vmatpush1.bf16.msra.mxu0 0
        %560 = vmatprep.subr.bf16.mxu0 0
        %561 = vmatpush1.bf16.msra.mxu0 0
        %562 = vmatprep.subr.bf16.mxu0 0
        %563 = vmatpush1.bf16.msra.mxu0 0
        %564 = vmatprep.subr.bf16.mxu0 0
        %565 = vmatpush1.bf16.msra.mxu0 0
        %566 = vmatprep.subr.bf16.mxu0 0
        %567 = vmatpush1.bf16.msra.mxu0 0
        %568 = vmatprep.subr.bf16.mxu0 0
        %569 = vmatpush1.bf16.msra.mxu0 0
        %570 = vmatprep.subr.bf16.mxu0 0
        %571 = vmatpush1.bf16.msra.mxu0 0
        %572 = vmatprep.subr.bf16.mxu0 0
        %573 = vmatpush1.bf16.msra.mxu0 0
        %574 = vmatprep.subr.bf16.mxu0 0
        %575 = vmatpush1.bf16.msra.mxu0 0
        %576 = vmatprep.subr.bf16.mxu0 0
        %577 = vmatpush1.bf16.msra.mxu0 0
        %578 = vmatprep.subr.bf16.mxu0 0
        %579 = vmatpush1.bf16.msra.mxu0 0
        %580 = vmatprep.subr.bf16.mxu0 0
        %581 = vmatpush1.bf16.msra.mxu0 0
        %582 = vmatprep.subr.bf16.mxu0 0
        %583 = vmatpush1.bf16.msra.mxu0 0
        %584 = vmatprep.subr.bf16.mxu0 0
        %585 = vmatpush1.bf16.msra.mxu0 0
        %586 = vmatprep.mubr.bf16.mxu0 0
        %587 = vmatmul.mubr.bf16.gmra.mrb[0].mxu0 %v552
        %v588 = vpop.f32.mrb[0].mxu0
        %v589 = vadd.f32 %v537, %v588
        %v590 = vpop.f32.mrb[0].mxu0
        %v591 = vpop.f32.mrb[0].mxu0
        %v592 = vpop.f32.mrb[0].mxu0
        %593 = vdwg.mxu0
        %v594 = vmul.f32 %v589, 0.5
        %v595 = vmul.f32 %v589, 0.70710677
        %v596 = vand.u32 2147483647, %v595
        %v597 = vmul.f32 %v596, 0.3275911
        %v598 = vadd.f32 %v597, 1.0
        %v599 = vrcp.pop %v598
        %v600 = vmul.f32 1.0, %v599
        %v601 = vmul.f32 %v600, 1.0614054
        %v602 = vadd.f32 %v601, -1.4531521
        %v603 = vmul.f32 %v602, %v600
        %v604 = vadd.f32 %v603, 1.4214138
        %v605 = vmul.f32 %v604, %v600
        %v606 = vadd.f32 %v605, -0.28449672
        %v607 = vmul.f32 %v606, %v600
        %v608 = vadd.f32 %v607, 0.2548296
        %v609 = vmul.f32 %v608, %v600
        %v610 = vsub.f32 0.0, %v596
        %v611 = vmul.f32 %v610, %v596
        %v612 = vmul.f32 %v611, 1.442695
        %v613 = vpow.pop %v612
        %v614 = vmul.f32 %v609, %v613
        %v615 = vsub.f32 1.0, %v614
        %vm616 = vcmp.ge.f32.partialorder %v595, 0.0
        %v617 = vsub.f32 0.0, %v615
        %v618 = vsel %vm616, %v615, %v617
        %v619 = vadd.f32 %v618, 1.0
        %v620 = vmul.f32 %v594, %v619
        %v621 = vpack.c.bf16 %v620, %v620
        %v622 = vld [vmem:[%s8] sm:$0xf]
        %v623 = vld [vmem:[%s8 + $0x4] sm:$0xf]
        %v624 = vld [vmem:[%s8 + $0x8] sm:$0xf]
        %v625 = vld [vmem:[%s8 + $0xc] sm:$0xf]
        %v626 = vld [vmem:[%s8 + $0x10] sm:$0xf]
        %v627 = vld [vmem:[%s8 + $0x14] sm:$0xf]
        %v628 = vld [vmem:[%s8 + $0x18] sm:$0xf]
        %v629 = vld [vmem:[%s8 + $0x1c] sm:$0xf]
        %v630 = vld [vmem:[%s9] sm:$0x1]
        %v632 = vlaneseq
        %v633 = vshrl.u32 %v632, 7
        %v634 = vsub.s32 0, %v633
        %v635 = vrot.slane %v630, %v634
        %v645 = vunpack.c.l.b16 %v622
        %v646 = vunpack.c.l.b16 %v623
        %v647 = vunpack.c.l.b16 %v624
        %v648 = vunpack.c.l.b16 %v625
        %v649 = vunpack.c.l.b16 %v626
        %v650 = vunpack.c.l.b16 %v627
        %v651 = vunpack.c.l.b16 %v628
        %v652 = vunpack.c.l.b16 %v629
        %v653 = vpack.c.b16 %v646, %v645
        %v654 = vpack.c.b16 %v648, %v647
        %v655 = vpack.c.b16 %v650, %v649
        %v656 = vpack.c.b16 %v652, %v651
        %vm661 = vcmask 523264
        %v663 = vsel %vm661, %v621, 0
        %665 = vmatprep.subr.bf16.mxu0 0
        %666 = vmatpush1.bf16.msra.mxu0 %v653
        %667 = vmatprep.subr.bf16.mxu0 0
        %668 = vmatpush1.bf16.msra.mxu0 %v654
        %669 = vmatprep.subr.bf16.mxu0 0
        %670 = vmatpush1.bf16.msra.mxu0 %v655
        %671 = vmatprep.subr.bf16.mxu0 0
        %672 = vmatpush1.bf16.msra.mxu0 %v656
        %673 = vmatprep.subr.bf16.mxu0 0
        %674 = vmatpush1.bf16.msra.mxu0 0
        %675 = vmatprep.subr.bf16.mxu0 0
        %676 = vmatpush1.bf16.msra.mxu0 0
        %677 = vmatprep.subr.bf16.mxu0 0
        %678 = vmatpush1.bf16.msra.mxu0 0
        %679 = vmatprep.subr.bf16.mxu0 0
        %680 = vmatpush1.bf16.msra.mxu0 0
        %681 = vmatprep.subr.bf16.mxu0 0
        %682 = vmatpush1.bf16.msra.mxu0 0
        %683 = vmatprep.subr.bf16.mxu0 0
        %684 = vmatpush1.bf16.msra.mxu0 0
        %685 = vmatprep.subr.bf16.mxu0 0
        %686 = vmatpush1.bf16.msra.mxu0 0
        %687 = vmatprep.subr.bf16.mxu0 0
        %688 = vmatpush1.bf16.msra.mxu0 0
        %689 = vmatprep.subr.bf16.mxu0 0
        %690 = vmatpush1.bf16.msra.mxu0 0
        %691 = vmatprep.subr.bf16.mxu0 0
        %692 = vmatpush1.bf16.msra.mxu0 0
        %693 = vmatprep.subr.bf16.mxu0 0
        %694 = vmatpush1.bf16.msra.mxu0 0
        %695 = vmatprep.subr.bf16.mxu0 0
        %696 = vmatpush1.bf16.msra.mxu0 0
        %697 = vmatprep.mubr.bf16.mxu0 0
        %698 = vmatmul.mubr.bf16.gmra.mrb[0].mxu0 %v663
        %v699 = vpop.f32.mrb[0].mxu0
        %v700 = vadd.f32 %v635, %v699
        %v701 = vpop.f32.mrb[0].mxu0
        %v702 = vpop.f32.mrb[0].mxu0
        %v703 = vpop.f32.mrb[0].mxu0
        %704 = vdwg.mxu0
        %v705 = vadd.f32 %v496, %v700
        %v706 = vld [vmem:[%s10] sm:$0x1]
        %v707 = vld [vmem:[%s11] sm:$0x1]
        %v708 = vsel %vm451, %v705, 0.0
        %709 = vadd.xlane.f32.xlu0 %v708
        %v710 = vpop.xlane.xlu0 %709
        %v711 = vmul.f32 %v710, %v502
        %v712 = vsub.f32 %v705, %v711
        %v713 = vmul.f32 %v712, %v712
        %v714 = vsel %vm451, %v713, 0.0
        %715 = vadd.xlane.f32.xlu0 %v714
        %v716 = vpop.xlane.xlu0 %715
        %v717 = vmul.f32 %v716, %v502
        %v718 = vadd.f32 %v717, 1e-05
        %v719 = vrsqrt.pop %v718
        %v720 = vmul.f32 %v712, %v719
        %v722 = vlaneseq
        %v723 = vshrl.u32 %v722, 7
        %v724 = vsub.s32 0, %v723
        %v725 = vrot.slane %v706, %v724
        %v727 = vmul.f32 %v720, %v725
        %v729 = vlaneseq
        %v730 = vshrl.u32 %v729, 7
        %v731 = vsub.s32 0, %v730
        %v732 = vrot.slane %v707, %v731
        %v734 = vadd.f32 %v727, %v732
        %735 = vst.msk [vmem:[%s417] sm:$0xff] %vm451, %v734
        %s736 = sand.u32 %s296, 1
        %s737 = scalar_lea.sflag [#allocation3], %s736
        %s738 = sand.u32 %s296, 1
        %s739 = smul.addr %s738, 8
        %s740 = scalar_lea.vmem [#allocation2], %s739
        // Predicated region
        $region69: #{transformer_encoder_with_pair.13} parent=67 // pred_check
          %p741 = pneg %p306
        $region70: #{transformer_encoder_with_pair.13} parent=67 // pred_check_branch
          %743 = sbr.rel (%p741) target = $region72
        $region71: #{transformer_encoder_with_pair.13} parent=67 // pred_region
          %s745 = ssub.s32 128, 128
          %746 = vsyncadd %s737, %s745
          %s747 = smul.addr %s26, 128
          %s748 = scalar_lea.hbm %s12, %s747
          %s750 = sshll.u32 %s740, 4
          %s751 = int_to_ptr.vmem [resolvable:$true] %s750
          %753 = dma.vmem_to_hbm [thread:$0]  %s751, 128, %s748, %s737
        $region72: #{transformer_encoder_with_pair.13} parent=67 // pred_fallthru
          _
      $region68: #{transformer_encoder_with_pair.13} parent=5 // pred_fallthru
        _
      %p754 = scmp.le.s32.totalorder 2, %s21
      // Predicated region
      $region73: #{transformer_encoder_with_pair.13} parent=5 // pred_check
        %p755 = pneg %p754
      $region74: #{transformer_encoder_with_pair.13} parent=5 // pred_check_branch
        %757 = sbr.rel (%p755) target = $region76
      $region75: #{transformer_encoder_with_pair.13} parent=5 // pred_region
        %s758 = ssub.s32 %s21, 2
        // Predicated region
        $region77: #{transformer_encoder_with_pair.13} parent=75 // pred_check
          %p759 = pneg %p312
        $region78: #{transformer_encoder_with_pair.13} parent=75 // pred_check_branch
          %761 = sbr.rel (%p759) target = $region80
        $region79: #{transformer_encoder_with_pair.13} parent=75 // pred_region
          %s762 = sand.u32 %s297, 1
          %s763 = scalar_lea.sflag [#allocation3], %s762
          %s764 = sand.u32 %s297, 1
          %s765 = smul.addr %s764, 8
          %s766 = scalar_lea.vmem [#allocation2], %s765
          %767 = dma.done %s763, 128
        $region80: #{transformer_encoder_with_pair.13} parent=75 // pred_fallthru
          _
      $region76: #{transformer_encoder_with_pair.13} parent=5 // pred_fallthru
        _
    $region6: #{transformer_encoder_with_pair.13} parent=1 // loop_footer
      %s25 = sadd.s32 1, %s21
    $region7: #{transformer_encoder_with_pair.13} parent=1 // loop_footer_branch
      %20 = sbr.rel target = $region3
    $region8: #{transformer_encoder_with_pair.13} parent=1 // loop_exit
      _
    %768 = vsyncpa [#allocation3], 1
    %s769 = scalar_lea.sflag [#allocation3], 1
    %770 = vsyncpa %s769, 1

</llo_original>
